<compile_context>
chip_gen: v7x
topology: tpu7x:2x2x1
jax: 0.10.0
libtpu: 0.0.40
codegen_flags: <defaults>
</compile_context>

<pallas_src>
import jax
import jax.numpy as jnp
from jax.experimental import pallas as pl
from jax.experimental.pallas import tpu as pltpu


# ---------------------------------------------------------------------------
# Parameter helpers
# ---------------------------------------------------------------------------
def _fold_bn(gamma, beta, mean, var, eps=1e-5):
    """Fold eval-mode BatchNorm1d into per-channel scale/shift, shaped (1, C)."""
    scale = gamma / jnp.sqrt(var + eps)
    shift = beta - mean * scale
    return scale.reshape(1, -1), shift.reshape(1, -1)


def init_params(key, input_feature_dim=3, mid_feat_dim=64, out_dim=128, n_rec=4000):
    ks = jax.random.split(key, 12)

    def w(k, fan_in, fan_out):
        return jax.random.normal(k, (fan_in, fan_out), jnp.float32) / jnp.sqrt(fan_in)

    def bn(k, c):
        k1, k2, k3, k4 = jax.random.split(k, 4)
        gamma = 1.0 + 0.1 * jax.random.normal(k1, (c,), jnp.float32)
        beta = 0.1 * jax.random.normal(k2, (c,), jnp.float32)
        mean = 0.1 * jax.random.normal(k3, (c,), jnp.float32)
        var = 1.0 + 0.1 * jax.random.uniform(k4, (c,), jnp.float32)
        return _fold_bn(gamma, beta, mean, var)

    p = {}
    # PointNet backbone (1x1 convs, bias folded into BN)
    p["w1"] = w(ks[0], input_feature_dim, mid_feat_dim)
    p["s1"], p["t1"] = bn(ks[1], mid_feat_dim)
    p["w2"] = w(ks[2], mid_feat_dim, mid_feat_dim)
    p["s2"], p["t2"] = bn(ks[3], mid_feat_dim)
    p["w3"] = w(ks[4], mid_feat_dim, out_dim)
    p["s3"], p["t3"] = bn(ks[5], out_dim)
    # Decoder: Conv1d(out_dim,256,bias=False)+BN+ReLU, Conv1d(256,256,bias=False)+BN+ReLU,
    #          Conv1d(256,4000,bias=True)
    p["wd1"] = w(ks[6], out_dim, 256)
    p["sd1"], p["td1"] = bn(ks[7], 256)
    p["wd2"] = w(ks[8], 256, 256)
    p["sd2"], p["td2"] = bn(ks[9], 256)
    p["wd3"] = w(ks[10], 256, n_rec)
    p["bd3"] = (0.1 * jax.random.normal(ks[11], (n_rec,), jnp.float32)).reshape(1, -1)
    return p


PARAM_ORDER = [
    "w1", "s1", "t1", "w2", "s2", "t2", "w3", "s3", "t3",
    "wd1", "sd1", "td1", "wd2", "sd2", "td2", "wd3", "bd3",
]


def _pick_block_b(b, max_block=8):
    """Largest divisor of b that is <= max_block and still leaves >= 2 grid steps."""
    best = 1
    for cand in range(1, min(b, max_block) + 1):
        if b % cand == 0 and (b // cand >= 2 or b == 1):
            best = cand
    return best


# ---------------------------------------------------------------------------
# Pallas kernel: one grid step == block_b batch elements, encoder + row-0 decoder.
# ---------------------------------------------------------------------------
def autoencoder_kernel(
    x_ref,
    w1_ref, s1_ref, t1_ref,
    w2_ref, s2_ref, t2_ref,
    w3_ref, s3_ref, t3_ref,
    wd1_ref, sd1_ref, td1_ref,
    wd2_ref, sd2_ref, td2_ref,
    wd3_ref, bd3_ref,
    enc_ref, row0_ref,
):
    block_b, n, feat_pad = x_ref.shape
    x = x_ref[...].reshape(block_b * n, feat_pad)            # bf16, M = Bb*n

    # ---- PointNet backbone: shared per-point MLP (bf16 matmuls, f32 accumulate) ----
    h = jnp.dot(x, w1_ref[...], preferred_element_type=jnp.float32)
    h = jnp.maximum(h * s1_ref[...] + t1_ref[...], 0.0)
    h = jnp.dot(h.astype(jnp.bfloat16), w2_ref[...],
                preferred_element_type=jnp.float32)
    h = jnp.maximum(h * s2_ref[...] + t2_ref[...], 0.0)
    h = jnp.dot(h.astype(jnp.bfloat16), w3_ref[...],
                preferred_element_type=jnp.float32)
    h = h * s3_ref[...] + t3_ref[...]                        # (Bb*n, out_dim) f32

    # ---- max-pool over the points of each batch element (static per-element slices) ----
    enc_rows = [
        jnp.max(h[i * n:(i + 1) * n, :], axis=0, keepdims=True)
        for i in range(block_b)
    ]
    enc = enc_rows[0] if block_b == 1 else jnp.concatenate(enc_rows, axis=0)
    enc_ref[...] = enc[:, None, :]                           # (Bb, 1, out_dim)

    # ---- decoder, encoding row only (all-ones rows hoisted to the wrapper) ----
    d = jnp.dot(enc.astype(jnp.bfloat16), wd1_ref[...],
                preferred_element_type=jnp.float32)
    d = jnp.maximum(d * sd1_ref[...] + td1_ref[...], 0.0)
    d = jnp.dot(d.astype(jnp.bfloat16), wd2_ref[...],
                preferred_element_type=jnp.float32)
    d = jnp.maximum(d * sd2_ref[...] + td2_ref[...], 0.0)
    d = jnp.dot(d.astype(jnp.bfloat16), wd3_ref[...],
                preferred_element_type=jnp.float32)
    d = d + bd3_ref[...]                                     # (Bb, n_rec_pad) f32
    row0_ref[...] = d[:, None, :]                            # (Bb, 1, n_rec_pad)


# ---------------------------------------------------------------------------
# Wrapper: param padding / bf16 cast, pallas_call, constant-row assembly.
# ---------------------------------------------------------------------------
def autoencoder_pn_forward(x, params):
    b, n, f_in = x.shape
    out_dim = params["w3"].shape[1]
    n_rec = params["wd3"].shape[1]

    feat_pad = max(8, ((f_in + 7) // 8) * 8)                 # 3 -> 8
    n_rec_pad = ((n_rec + 127) // 128) * 128                 # 4000 -> 4096
    block_b = _pick_block_b(b)
    grid = (b // block_b,)

    # ---- pad / cast params for the kernel (weights bf16, BN scale/shift + bias f32) ----
    w1p = jnp.zeros((feat_pad, params["w1"].shape[1]), jnp.float32)
    w1p = w1p.at[:f_in].set(params["w1"])
    wd3p = jnp.zeros((params["wd3"].shape[0], n_rec_pad), jnp.float32)
    wd3p = wd3p.at[:, :n_rec].set(params["wd3"])
    bd3p = jnp.zeros((1, n_rec_pad), jnp.float32).at[:, :n_rec].set(params["bd3"])

    kp = dict(params)
    kp["w1"] = w1p.astype(jnp.bfloat16)
    kp["w2"] = params["w2"].astype(jnp.bfloat16)
    kp["w3"] = params["w3"].astype(jnp.bfloat16)
    kp["wd1"] = params["wd1"].astype(jnp.bfloat16)
    kp["wd2"] = params["wd2"].astype(jnp.bfloat16)
    kp["wd3"] = wd3p.astype(jnp.bfloat16)
    kp["bd3"] = bd3p

    # zero-pad the input features to feat_pad and cast to bf16 (halves the x DMA).
    xp = jnp.zeros((b, n, feat_pad), jnp.float32).at[:, :, :f_in].set(x)
    xp = xp.astype(jnp.bfloat16)

    inputs = [xp]
    in_specs = [pl.BlockSpec((block_b, n, feat_pad), lambda i: (i, 0, 0))]
    for name in PARAM_ORDER:
        p = kp[name]
        inputs.append(p)
        # constant index map -> each weight is DMA'd once and stays VMEM-resident.
        in_specs.append(pl.BlockSpec(p.shape, lambda i, nd=p.ndim: (0,) * nd))

    out_shape = (
        jax.ShapeDtypeStruct((b, 1, out_dim), jnp.float32),
        jax.ShapeDtypeStruct((b, 1, n_rec_pad), jnp.float32),
    )
    out_specs = [
        pl.BlockSpec((block_b, 1, out_dim), lambda i: (i, 0, 0)),
        pl.BlockSpec((block_b, 1, n_rec_pad), lambda i: (i, 0, 0)),
    ]

    enc, row0 = pl.pallas_call(
        autoencoder_kernel,
        out_shape=out_shape,
        grid=grid,
        in_specs=in_specs,
        out_specs=out_specs,
        compiler_params=pltpu.CompilerParams(
            dimension_semantics=("parallel",),
            vmem_limit_bytes=16 << 20,
        ),
    )(*inputs)

    encoding = enc.reshape(b, out_dim)                       # [b, out_dim]
    row0 = row0.reshape(b, n_rec_pad)[:, :n_rec]             # [b, 4000]

    # Decoder output for the all-ones "length" positions 1 and 2: batch-invariant,
    # depends only on params -> computed once here in f32 and broadcast.
    ones = jnp.ones((1, out_dim), jnp.float32)
    c = jnp.maximum(ones @ params["wd1"] * params["sd1"] + params["td1"], 0.0)
    c = jnp.maximum(c @ params["wd2"] * params["sd2"] + params["td2"], 0.0)
    const_row = (c @ params["wd3"] + params["bd3"])[0]       # (4000,)
    const_rows = jnp.broadcast_to(const_row, (b, n_rec))

    restoration = jnp.stack([row0, const_rows, const_rows], axis=2)  # [b, 4000, 3]
    return encoding, restoration


# ---------------------------------------------------------------------------
# Pure-JAX f32 reference (same folded params) for a correctness check.
# ---------------------------------------------------------------------------
def reference_forward(x, params):
    h = jnp.maximum(x @ params["w1"] * params["s1"] + params["t1"], 0.0)
    h = jnp.maximum(h @ params["w2"] * params["s2"] + params["t2"], 0.0)
    h = h @ params["w3"] * params["s3"] + params["t3"]
    enc = jnp.max(h, axis=1)                                 # [b, out_dim]

    b, out_dim = enc.shape
    data = jnp.concatenate(
        [enc[:, :, None], jnp.ones((b, out_dim, 2), jnp.float32)], axis=2
    )                                                        # [b, out_dim, 3] (NCW)
    data_t = jnp.transpose(data, (0, 2, 1))                  # [b, 3, out_dim]
    d = jnp.maximum(data_t @ params["wd1"] * params["sd1"] + params["td1"], 0.0)
    d = jnp.maximum(d @ params["wd2"] * params["sd2"] + params["td2"], 0.0)
    d = d @ params["wd3"] + params["bd3"]
    return enc, jnp.transpose(d, (0, 2, 1))                  # [b, 4000, 3]


if __name__ == "__main__":
    key = jax.random.PRNGKey(0)
    kx, kp = jax.random.split(key)

    b, n = 2, 128                 # small: batch=2, num_points=128
    input_feature_dim, mid_feat_dim, out_dim = 3, 64, 128

    x = jax.random.normal(kx, (b, n, input_feature_dim), jnp.float32)
    params = init_params(kp, input_feature_dim, mid_feat_dim, out_dim)

    encoding, restoration = jax.block_until_ready(autoencoder_pn_forward(x, params))

    assert encoding.shape == (b, out_dim)
    assert restoration.shape == (b, 4000, 3)

    enc_ref, rest_ref = reference_forward(x, params)
    # Tolerance accommodates bf16 weights (f32 accumulation) vs. the f32 reference.
    assert jnp.allclose(encoding, enc_ref, rtol=2e-2, atol=2e-2)
    assert jnp.allclose(restoration, rest_ref, rtol=2e-2, atol=2e-2)

    print("KERNEL_OK")
</pallas_src>

<mosaic_0001>
module attributes {stable_mosaic.version = 11 : i64} {
  func.func @autoencoder_kernel(%arg0: i32, %arg1: memref<1x128x8xbf16, #tpu.memory_space<vmem>>, %arg2: memref<8x64xbf16, #tpu.memory_space<vmem>>, %arg3: memref<1x64xf32, #tpu.memory_space<vmem>>, %arg4: memref<1x64xf32, #tpu.memory_space<vmem>>, %arg5: memref<64x64xbf16, #tpu.memory_space<vmem>>, %arg6: memref<1x64xf32, #tpu.memory_space<vmem>>, %arg7: memref<1x64xf32, #tpu.memory_space<vmem>>, %arg8: memref<64x128xbf16, #tpu.memory_space<vmem>>, %arg9: memref<1x128xf32, #tpu.memory_space<vmem>>, %arg10: memref<1x128xf32, #tpu.memory_space<vmem>>, %arg11: memref<128x256xbf16, #tpu.memory_space<vmem>>, %arg12: memref<1x256xf32, #tpu.memory_space<vmem>>, %arg13: memref<1x256xf32, #tpu.memory_space<vmem>>, %arg14: memref<256x256xbf16, #tpu.memory_space<vmem>>, %arg15: memref<1x256xf32, #tpu.memory_space<vmem>>, %arg16: memref<1x256xf32, #tpu.memory_space<vmem>>, %arg17: memref<256x4096xbf16, #tpu.memory_space<vmem>>, %arg18: memref<1x4096xf32, #tpu.memory_space<vmem>>, %arg19: memref<1x1x128xf32, #tpu.memory_space<vmem>>, %arg20: memref<1x1x4096xf32, #tpu.memory_space<vmem>>) attributes {dimension_semantics = [#tpu.dimension_semantics<parallel>], iteration_bounds = array<i64: 2>, scalar_prefetch = 0 : i64, scratch_operands = 0 : i64, tpu.core_type = #tpu.core_type<tc>, window_params = [{transform_indices = @transform_0, window_bounds = array<i64: 1, 128, 8>}, {pipeline_mode = #tpu.pipeline_mode<synchronous>, transform_indices = @transform_1, window_bounds = array<i64: 8, 64>}, {pipeline_mode = #tpu.pipeline_mode<synchronous>, transform_indices = @transform_2, window_bounds = array<i64: 1, 64>}, {pipeline_mode = #tpu.pipeline_mode<synchronous>, transform_indices = @transform_3, window_bounds = array<i64: 1, 64>}, {pipeline_mode = #tpu.pipeline_mode<synchronous>, transform_indices = @transform_4, window_bounds = array<i64: 64, 64>}, {pipeline_mode = #tpu.pipeline_mode<synchronous>, transform_indices = @transform_5, window_bounds = array<i64: 1, 64>}, {pipeline_mode = #tpu.pipeline_mode<synchronous>, transform_indices = @transform_6, window_bounds = array<i64: 1, 64>}, {pipeline_mode = #tpu.pipeline_mode<synchronous>, transform_indices = @transform_7, window_bounds = array<i64: 64, 128>}, {pipeline_mode = #tpu.pipeline_mode<synchronous>, transform_indices = @transform_8, window_bounds = array<i64: 1, 128>}, {pipeline_mode = #tpu.pipeline_mode<synchronous>, transform_indices = @transform_9, window_bounds = array<i64: 1, 128>}, {pipeline_mode = #tpu.pipeline_mode<synchronous>, transform_indices = @transform_10, window_bounds = array<i64: 128, 256>}, {pipeline_mode = #tpu.pipeline_mode<synchronous>, transform_indices = @transform_11, window_bounds = array<i64: 1, 256>}, {pipeline_mode = #tpu.pipeline_mode<synchronous>, transform_indices = @transform_12, window_bounds = array<i64: 1, 256>}, {pipeline_mode = #tpu.pipeline_mode<synchronous>, transform_indices = @transform_13, window_bounds = array<i64: 256, 256>}, {pipeline_mode = #tpu.pipeline_mode<synchronous>, transform_indices = @transform_14, window_bounds = array<i64: 1, 256>}, {pipeline_mode = #tpu.pipeline_mode<synchronous>, transform_indices = @transform_15, window_bounds = array<i64: 1, 256>}, {pipeline_mode = #tpu.pipeline_mode<synchronous>, transform_indices = @transform_16, window_bounds = array<i64: 256, 4096>}, {pipeline_mode = #tpu.pipeline_mode<synchronous>, transform_indices = @transform_17, window_bounds = array<i64: 1, 4096>}, {transform_indices = @transform_18, window_bounds = array<i64: 1, 1, 128>}, {transform_indices = @transform_19, window_bounds = array<i64: 1, 1, 4096>}]} {
    %c0 = arith.constant 0 : index
    %c0_0 = arith.constant 0 : index
    %c0_1 = arith.constant 0 : index
    %0 = vector.load %arg1[%c0, %c0_0, %c0_1] : memref<1x128x8xbf16, #tpu.memory_space<vmem>>, vector<1x128x8xbf16>
    %1 = vector.shape_cast %0 : vector<1x128x8xbf16> to vector<128x8xbf16>
    %c0_2 = arith.constant 0 : index
    %c0_3 = arith.constant 0 : index
    %2 = vector.load %arg2[%c0_2, %c0_3] : memref<8x64xbf16, #tpu.memory_space<vmem>>, vector<8x64xbf16>
    %cst = arith.constant dense<0.000000e+00> : vector<128x64xf32>
    %3 = tpu.matmul %1, %2, %cst {dimension_numbers = #tpu.dot_dimension_numbers<[1], [0], [0], [1], [0, 0, 1, 1], [], []>} : vector<128x8xbf16>, vector<8x64xbf16>, vector<128x64xf32> -> vector<128x64xf32>
    %c0_4 = arith.constant 0 : index
    %c0_5 = arith.constant 0 : index
    %4 = vector.load %arg3[%c0_4, %c0_5] : memref<1x64xf32, #tpu.memory_space<vmem>>, vector<1x64xf32>
    %5 = vector.broadcast %4 : vector<1x64xf32> to vector<128x64xf32>
    %6 = arith.mulf %3, %5 : vector<128x64xf32>
    %c0_6 = arith.constant 0 : index
    %c0_7 = arith.constant 0 : index
    %7 = vector.load %arg4[%c0_6, %c0_7] : memref<1x64xf32, #tpu.memory_space<vmem>>, vector<1x64xf32>
    %8 = vector.broadcast %7 : vector<1x64xf32> to vector<128x64xf32>
    %9 = arith.addf %6, %8 : vector<128x64xf32>
    %cst_8 = arith.constant 0.000000e+00 : f32
    %10 = vector.broadcast %cst_8 : f32 to vector<128x64xf32>
    %11 = arith.maximumf %9, %10 : vector<128x64xf32>
    %12 = arith.truncf %11 : vector<128x64xf32> to vector<128x64xbf16>
    %c0_9 = arith.constant 0 : index
    %c0_10 = arith.constant 0 : index
    %13 = vector.load %arg5[%c0_9, %c0_10] : memref<64x64xbf16, #tpu.memory_space<vmem>>, vector<64x64xbf16>
    %cst_11 = arith.constant dense<0.000000e+00> : vector<128x64xf32>
    %14 = tpu.matmul %12, %13, %cst_11 {dimension_numbers = #tpu.dot_dimension_numbers<[1], [0], [0], [1], [0, 0, 1, 1], [], []>} : vector<128x64xbf16>, vector<64x64xbf16>, vector<128x64xf32> -> vector<128x64xf32>
    %c0_12 = arith.constant 0 : index
    %c0_13 = arith.constant 0 : index
    %15 = vector.load %arg6[%c0_12, %c0_13] : memref<1x64xf32, #tpu.memory_space<vmem>>, vector<1x64xf32>
    %16 = vector.broadcast %15 : vector<1x64xf32> to vector<128x64xf32>
    %17 = arith.mulf %14, %16 : vector<128x64xf32>
    %c0_14 = arith.constant 0 : index
    %c0_15 = arith.constant 0 : index
    %18 = vector.load %arg7[%c0_14, %c0_15] : memref<1x64xf32, #tpu.memory_space<vmem>>, vector<1x64xf32>
    %19 = vector.broadcast %18 : vector<1x64xf32> to vector<128x64xf32>
    %20 = arith.addf %17, %19 : vector<128x64xf32>
    %cst_16 = arith.constant 0.000000e+00 : f32
    %21 = vector.broadcast %cst_16 : f32 to vector<128x64xf32>
    %22 = arith.maximumf %20, %21 : vector<128x64xf32>
    %23 = arith.truncf %22 : vector<128x64xf32> to vector<128x64xbf16>
    %c0_17 = arith.constant 0 : index
    %c0_18 = arith.constant 0 : index
    %24 = vector.load %arg8[%c0_17, %c0_18] : memref<64x128xbf16, #tpu.memory_space<vmem>>, vector<64x128xbf16>
    %cst_19 = arith.constant dense<0.000000e+00> : vector<128x128xf32>
    %25 = tpu.matmul %23, %24, %cst_19 {dimension_numbers = #tpu.dot_dimension_numbers<[1], [0], [0], [1], [0, 0, 1, 1], [], []>} : vector<128x64xbf16>, vector<64x128xbf16>, vector<128x128xf32> -> vector<128x128xf32>
    %c0_20 = arith.constant 0 : index
    %c0_21 = arith.constant 0 : index
    %26 = vector.load %arg9[%c0_20, %c0_21] : memref<1x128xf32, #tpu.memory_space<vmem>>, vector<1x128xf32>
    %27 = vector.broadcast %26 : vector<1x128xf32> to vector<128x128xf32>
    %28 = arith.mulf %25, %27 : vector<128x128xf32>
    %c0_22 = arith.constant 0 : index
    %c0_23 = arith.constant 0 : index
    %29 = vector.load %arg10[%c0_22, %c0_23] : memref<1x128xf32, #tpu.memory_space<vmem>>, vector<1x128xf32>
    %30 = vector.broadcast %29 : vector<1x128xf32> to vector<128x128xf32>
    %31 = arith.addf %28, %30 : vector<128x128xf32>
    %cst_24 = arith.constant dense<0xFF800000> : vector<128xf32>
    %32 = vector.multi_reduction <maximumf>, %31, %cst_24 [0] : vector<128x128xf32> to vector<128xf32>
    %33 = vector.shape_cast %32 : vector<128xf32> to vector<1x128xf32>
    %34 = vector.shape_cast %33 : vector<1x128xf32> to vector<1x1x128xf32>
    %c0_25 = arith.constant 0 : index
    %c0_26 = arith.constant 0 : index
    %c0_27 = arith.constant 0 : index
    %35 = vector.load %arg19[%c0_25, %c0_26, %c0_27] : memref<1x1x128xf32, #tpu.memory_space<vmem>>, vector<1x1x128xf32>
    tpu.vector_store %arg19[%c0_25, %c0_26, %c0_27], %34 {strides = array<i32>} : memref<1x1x128xf32, #tpu.memory_space<vmem>>, vector<1x1x128xf32>,
    %36 = arith.truncf %33 : vector<1x128xf32> to vector<1x128xbf16>
    %c0_28 = arith.constant 0 : index
    %c0_29 = arith.constant 0 : index
    %37 = vector.load %arg11[%c0_28, %c0_29] : memref<128x256xbf16, #tpu.memory_space<vmem>>, vector<128x256xbf16>
    %cst_30 = arith.constant dense<0.000000e+00> : vector<1x256xf32>
    %38 = tpu.matmul %36, %37, %cst_30 {dimension_numbers = #tpu.dot_dimension_numbers<[1], [0], [0], [1], [0, 0, 1, 1], [], []>} : vector<1x128xbf16>, vector<128x256xbf16>, vector<1x256xf32> -> vector<1x256xf32>
    %c0_31 = arith.constant 0 : index
    %c0_32 = arith.constant 0 : index
    %39 = vector.load %arg12[%c0_31, %c0_32] : memref<1x256xf32, #tpu.memory_space<vmem>>, vector<1x256xf32>
    %40 = arith.mulf %38, %39 : vector<1x256xf32>
    %c0_33 = arith.constant 0 : index
    %c0_34 = arith.constant 0 : index
    %41 = vector.load %arg13[%c0_33, %c0_34] : memref<1x256xf32, #tpu.memory_space<vmem>>, vector<1x256xf32>
    %42 = arith.addf %40, %41 : vector<1x256xf32>
    %cst_35 = arith.constant 0.000000e+00 : f32
    %43 = vector.broadcast %cst_35 : f32 to vector<1x256xf32>
    %44 = arith.maximumf %42, %43 : vector<1x256xf32>
    %45 = arith.truncf %44 : vector<1x256xf32> to vector<1x256xbf16>
    %c0_36 = arith.constant 0 : index
    %c0_37 = arith.constant 0 : index
    %46 = vector.load %arg14[%c0_36, %c0_37] : memref<256x256xbf16, #tpu.memory_space<vmem>>, vector<256x256xbf16>
    %cst_38 = arith.constant dense<0.000000e+00> : vector<1x256xf32>
    %47 = tpu.matmul %45, %46, %cst_38 {dimension_numbers = #tpu.dot_dimension_numbers<[1], [0], [0], [1], [0, 0, 1, 1], [], []>} : vector<1x256xbf16>, vector<256x256xbf16>, vector<1x256xf32> -> vector<1x256xf32>
    %c0_39 = arith.constant 0 : index
    %c0_40 = arith.constant 0 : index
    %48 = vector.load %arg15[%c0_39, %c0_40] : memref<1x256xf32, #tpu.memory_space<vmem>>, vector<1x256xf32>
    %49 = arith.mulf %47, %48 : vector<1x256xf32>
    %c0_41 = arith.constant 0 : index
    %c0_42 = arith.constant 0 : index
    %50 = vector.load %arg16[%c0_41, %c0_42] : memref<1x256xf32, #tpu.memory_space<vmem>>, vector<1x256xf32>
    %51 = arith.addf %49, %50 : vector<1x256xf32>
    %cst_43 = arith.constant 0.000000e+00 : f32
    %52 = vector.broadcast %cst_43 : f32 to vector<1x256xf32>
    %53 = arith.maximumf %51, %52 : vector<1x256xf32>
    %54 = arith.truncf %53 : vector<1x256xf32> to vector<1x256xbf16>
    %c0_44 = arith.constant 0 : index
    %c0_45 = arith.constant 0 : index
    %55 = vector.load %arg17[%c0_44, %c0_45] : memref<256x4096xbf16, #tpu.memory_space<vmem>>, vector<256x4096xbf16>
    %cst_46 = arith.constant dense<0.000000e+00> : vector<1x4096xf32>
    %56 = tpu.matmul %54, %55, %cst_46 {dimension_numbers = #tpu.dot_dimension_numbers<[1], [0], [0], [1], [0, 0, 1, 1], [], []>} : vector<1x256xbf16>, vector<256x4096xbf16>, vector<1x4096xf32> -> vector<1x4096xf32>
    %c0_47 = arith.constant 0 : index
    %c0_48 = arith.constant 0 : index
    %57 = vector.load %arg18[%c0_47, %c0_48] : memref<1x4096xf32, #tpu.memory_space<vmem>>, vector<1x4096xf32>
    %58 = arith.addf %56, %57 : vector<1x4096xf32>
    %59 = vector.shape_cast %58 : vector<1x4096xf32> to vector<1x1x4096xf32>
    %c0_49 = arith.constant 0 : index
    %c0_50 = arith.constant 0 : index
    %c0_51 = arith.constant 0 : index
    %60 = vector.load %arg20[%c0_49, %c0_50, %c0_51] : memref<1x1x4096xf32, #tpu.memory_space<vmem>>, vector<1x1x4096xf32>
    tpu.vector_store %arg20[%c0_49, %c0_50, %c0_51], %59 {strides = array<i32>} : memref<1x1x4096xf32, #tpu.memory_space<vmem>>, vector<1x1x4096xf32>,
    return
  }
  func.func @transform_0(%arg0: i32) -> (i32, i32, i32) {
    %c0_i32 = arith.constant 0 : i32
    %c0_i32_0 = arith.constant 0 : i32
    %c0_i32_1 = arith.constant 0 : i32
    return %arg0, %c0_i32, %c0_i32_0 : i32, i32, i32
  }
  func.func @transform_1(%arg0: i32) -> (i32, i32) {
    %c0_i32 = arith.constant 0 : i32
    %c0_i32_0 = arith.constant 0 : i32
    %c0_i32_1 = arith.constant 0 : i32
    return %c0_i32, %c0_i32_0 : i32, i32
  }
  func.func @transform_2(%arg0: i32) -> (i32, i32) {
    %c0_i32 = arith.constant 0 : i32
    %c0_i32_0 = arith.constant 0 : i32
    %c0_i32_1 = arith.constant 0 : i32
    return %c0_i32, %c0_i32_0 : i32, i32
  }
  func.func @transform_3(%arg0: i32) -> (i32, i32) {
    %c0_i32 = arith.constant 0 : i32
    %c0_i32_0 = arith.constant 0 : i32
    %c0_i32_1 = arith.constant 0 : i32
    return %c0_i32, %c0_i32_0 : i32, i32
  }
  func.func @transform_4(%arg0: i32) -> (i32, i32) {
    %c0_i32 = arith.constant 0 : i32
    %c0_i32_0 = arith.constant 0 : i32
    %c0_i32_1 = arith.constant 0 : i32
    return %c0_i32, %c0_i32_0 : i32, i32
  }
  func.func @transform_5(%arg0: i32) -> (i32, i32) {
    %c0_i32 = arith.constant 0 : i32
    %c0_i32_0 = arith.constant 0 : i32
    %c0_i32_1 = arith.constant 0 : i32
    return %c0_i32, %c0_i32_0 : i32, i32
  }
  func.func @transform_6(%arg0: i32) -> (i32, i32) {
    %c0_i32 = arith.constant 0 : i32
    %c0_i32_0 = arith.constant 0 : i32
    %c0_i32_1 = arith.constant 0 : i32
    return %c0_i32, %c0_i32_0 : i32, i32
  }
  func.func @transform_7(%arg0: i32) -> (i32, i32) {
    %c0_i32 = arith.constant 0 : i32
    %c0_i32_0 = arith.constant 0 : i32
    %c0_i32_1 = arith.constant 0 : i32
    return %c0_i32, %c0_i32_0 : i32, i32
  }
  func.func @transform_8(%arg0: i32) -> (i32, i32) {
    %c0_i32 = arith.constant 0 : i32
    %c0_i32_0 = arith.constant 0 : i32
    %c0_i32_1 = arith.constant 0 : i32
    return %c0_i32, %c0_i32_0 : i32, i32
  }
  func.func @transform_9(%arg0: i32) -> (i32, i32) {
    %c0_i32 = arith.constant 0 : i32
    %c0_i32_0 = arith.constant 0 : i32
    %c0_i32_1 = arith.constant 0 : i32
    return %c0_i32, %c0_i32_0 : i32, i32
  }
  func.func @transform_10(%arg0: i32) -> (i32, i32) {
    %c0_i32 = arith.constant 0 : i32
    %c0_i32_0 = arith.constant 0 : i32
    %c0_i32_1 = arith.constant 0 : i32
    return %c0_i32, %c0_i32_0 : i32, i32
  }
  func.func @transform_11(%arg0: i32) -> (i32, i32) {
    %c0_i32 = arith.constant 0 : i32
    %c0_i32_0 = arith.constant 0 : i32
    %c0_i32_1 = arith.constant 0 : i32
    return %c0_i32, %c0_i32_0 : i32, i32
  }
  func.func @transform_12(%arg0: i32) -> (i32, i32) {
    %c0_i32 = arith.constant 0 : i32
    %c0_i32_0 = arith.constant 0 : i32
    %c0_i32_1 = arith.constant 0 : i32
    return %c0_i32, %c0_i32_0 : i32, i32
  }
  func.func @transform_13(%arg0: i32) -> (i32, i32) {
    %c0_i32 = arith.constant 0 : i32
    %c0_i32_0 = arith.constant 0 : i32
    %c0_i32_1 = arith.constant 0 : i32
    return %c0_i32, %c0_i32_0 : i32, i32
  }
  func.func @transform_14(%arg0: i32) -> (i32, i32) {
    %c0_i32 = arith.constant 0 : i32
    %c0_i32_0 = arith.constant 0 : i32
    %c0_i32_1 = arith.constant 0 : i32
    return %c0_i32, %c0_i32_0 : i32, i32
  }
  func.func @transform_15(%arg0: i32) -> (i32, i32) {
    %c0_i32 = arith.constant 0 : i32
    %c0_i32_0 = arith.constant 0 : i32
    %c0_i32_1 = arith.constant 0 : i32
    return %c0_i32, %c0_i32_0 : i32, i32
  }
  func.func @transform_16(%arg0: i32) -> (i32, i32) {
    %c0_i32 = arith.constant 0 : i32
    %c0_i32_0 = arith.constant 0 : i32
    %c0_i32_1 = arith.constant 0 : i32
    return %c0_i32, %c0_i32_0 : i32, i32
  }
  func.func @transform_17(%arg0: i32) -> (i32, i32) {
    %c0_i32 = arith.constant 0 : i32
    %c0_i32_0 = arith.constant 0 : i32
    %c0_i32_1 = arith.constant 0 : i32
    return %c0_i32, %c0_i32_0 : i32, i32
  }
  func.func @transform_18(%arg0: i32) -> (i32, i32, i32) {
    %c0_i32 = arith.constant 0 : i32
    %c0_i32_0 = arith.constant 0 : i32
    %c0_i32_1 = arith.constant 0 : i32
    return %arg0, %c0_i32, %c0_i32_0 : i32, i32, i32
  }
  func.func @transform_19(%arg0: i32) -> (i32, i32, i32) {
    %c0_i32 = arith.constant 0 : i32
    %c0_i32_0 = arith.constant 0 : i32
    %c0_i32_1 = arith.constant 0 : i32
    return %arg0, %c0_i32, %c0_i32_0 : i32, i32, i32
  }
}

</mosaic_0001>

<llo_original>
// kernel: tpu_custom_call.1
$region0: #{tpu_custom_call.1}
  #allocation0 [shape = 'u32[]', space=smem, size = 0x4, offset = 0x4, fixed_abs, tag = 'smem constant byte address 0x4 - core index']
  #allocation1 [shape = 'u32[144,128]{1,0:T(1,128)}', space=vmem, size = 0x12000, scoped, tag = 'internal scratch']
  %s0 = inlined_call_operand.vmem [shape: bf16[2,128,8], index: 0, kind: input, shape index: {}]
  %s1 = inlined_call_operand.hbm [shape: bf16[8,64], index: 1, kind: input, shape index: {}]
  %s2 = inlined_call_operand.hbm [shape: f32[1,64], index: 2, kind: input, shape index: {}]
  %s3 = inlined_call_operand.hbm [shape: f32[1,64], index: 3, kind: input, shape index: {}]
  %s4 = inlined_call_operand.hbm [shape: bf16[64,64], index: 4, kind: input, shape index: {}]
  %s5 = inlined_call_operand.hbm [shape: f32[1,64], index: 5, kind: input, shape index: {}]
  %s6 = inlined_call_operand.hbm [shape: f32[1,64], index: 6, kind: input, shape index: {}]
  %s7 = inlined_call_operand.hbm [shape: bf16[64,128], index: 7, kind: input, shape index: {}]
  %s8 = inlined_call_operand.hbm [shape: f32[1,128], index: 8, kind: input, shape index: {}]
  %s9 = inlined_call_operand.hbm [shape: f32[1,128], index: 9, kind: input, shape index: {}]
  %s10 = inlined_call_operand.hbm [shape: bf16[128,256], index: 10, kind: input, shape index: {}]
  %s11 = inlined_call_operand.hbm [shape: f32[1,256], index: 11, kind: input, shape index: {}]
  %s12 = inlined_call_operand.hbm [shape: f32[1,256], index: 12, kind: input, shape index: {}]
  %s13 = inlined_call_operand.hbm [shape: bf16[256,256], index: 13, kind: input, shape index: {}]
  %s14 = inlined_call_operand.hbm [shape: f32[1,256], index: 14, kind: input, shape index: {}]
  %s15 = inlined_call_operand.hbm [shape: f32[1,256], index: 15, kind: input, shape index: {}]
  %s16 = inlined_call_operand.hbm [shape: bf16[256,4096], index: 16, kind: input, shape index: {}]
  %s17 = inlined_call_operand.hbm [shape: f32[1,4096], index: 17, kind: input, shape index: {}]
  %s18 = inlined_call_operand.hbm [shape: f32[2,1,128], index: 18, kind: output, shape index: {0}]
  %s19 = inlined_call_operand.hbm [shape: f32[2,1,4096], index: 19, kind: output, shape index: {1}]
  %20 = xla_tuple %s18, %s19
  %s21 = sld [smem:[#allocation0]]
  $region181: #{tpu_custom_call.1} parent=0
    _
  %s23 = ssub.s32 1, %s21
  %s24 = scalar_select 0, %s23, %s21
  $region1: #{tpu_custom_call.1} parent=0
    #allocation2 [shape = 'u8[2048]{0}', space=vmem, size = 0x800, scoped, tag = 'input window, operand 1, single buffered']
    #allocation3 [shape = 's32[2]{0}', space=sflag, size = 0x8, scoped, tag = 'scoped memory for tpu_custom_call.1']
    #allocation4 [shape = 's32[2]{0}', space=sflag, size = 0x8, scoped, tag = 'scoped memory for tpu_custom_call.1']
    #allocation5 [shape = 'u8[512]{0}', space=vmem, size = 0x400, scoped, tag = 'input window, operand 2, single buffered']
    #allocation6 [shape = 's32[1]{0}', space=sflag, size = 0x4, scoped, tag = 'scoped memory for tpu_custom_call.1']
    #allocation7 [shape = 'u8[512]{0}', space=vmem, size = 0x400, scoped, tag = 'input window, operand 3, single buffered']
    #allocation8 [shape = 'u8[16384]{0}', space=vmem, size = 0x4000, scoped, tag = 'input window, operand 4, single buffered']
    #allocation9 [shape = 's32[1]{0}', space=sflag, size = 0x4, scoped, tag = 'scoped memory for tpu_custom_call.1']
    #allocation10 [shape = 'u8[512]{0}', space=vmem, size = 0x400, scoped, tag = 'input window, operand 5, single buffered']
    #allocation11 [shape = 'u8[512]{0}', space=vmem, size = 0x400, scoped, tag = 'input window, operand 6, single buffered']
    #allocation12 [shape = 's32[1]{0}', space=sflag, size = 0x4, scoped, tag = 'scoped memory for tpu_custom_call.1']
    #allocation13 [shape = 'u8[16384]{0}', space=vmem, size = 0x4000, scoped, tag = 'input window, operand 7, single buffered']
    #allocation14 [shape = 'u8[512]{0}', space=vmem, size = 0x400, scoped, tag = 'input window, operand 8, single buffered']
    #allocation15 [shape = 's32[1]{0}', space=sflag, size = 0x4, scoped, tag = 'scoped memory for tpu_custom_call.1']
    #allocation16 [shape = 'u8[512]{0}', space=vmem, size = 0x400, scoped, tag = 'input window, operand 9, single buffered']
    #allocation17 [shape = 'u8[65536]{0}', space=vmem, size = 0x10000, scoped, tag = 'input window, operand 10, single buffered']
    #allocation18 [shape = 's32[1]{0}', space=sflag, size = 0x4, scoped, tag = 'scoped memory for tpu_custom_call.1']
    #allocation19 [shape = 'u8[1024]{0}', space=vmem, size = 0x400, scoped, tag = 'input window, operand 11, single buffered']
    #allocation20 [shape = 'u8[1024]{0}', space=vmem, size = 0x400, scoped, tag = 'input window, operand 12, single buffered']
    #allocation21 [shape = 's32[1]{0}', space=sflag, size = 0x4, scoped, tag = 'scoped memory for tpu_custom_call.1']
    #allocation22 [shape = 'u8[131072]{0}', space=vmem, size = 0x20000, scoped, tag = 'input window, operand 13, single buffered']
    #allocation23 [shape = 'u8[1024]{0}', space=vmem, size = 0x400, scoped, tag = 'input window, operand 14, single buffered']
    #allocation24 [shape = 's32[1]{0}', space=sflag, size = 0x4, scoped, tag = 'scoped memory for tpu_custom_call.1']
    #allocation25 [shape = 'u8[1024]{0}', space=vmem, size = 0x400, scoped, tag = 'input window, operand 15, single buffered']
    #allocation26 [shape = 'u8[2097152]{0}', space=vmem, size = 0x200000, scoped, tag = 'input window, operand 16, single buffered']
    #allocation27 [shape = 's32[1]{0}', space=sflag, size = 0x4, scoped, tag = 'scoped memory for tpu_custom_call.1']
    #allocation28 [shape = 'u8[16384]{0}', space=vmem, size = 0x4000, scoped, tag = 'input window, operand 17, single buffered']
    #allocation29 [shape = 'u8[1024]{0}', space=vmem, size = 0x400, scoped, tag = 'output window, operand 0']
    #allocation30 [shape = 'u8[32768]{0}', space=vmem, size = 0x8000, scoped, tag = 'output window, operand 1']
    #allocation31 [shape = 's32[2]{0}', space=sflag, size = 0x8, scoped, tag = 'scoped memory for tpu_custom_call.1']
    %25 = vsyncpa [#allocation3], 0
    %26 = vsyncpa [#allocation6], 0
    %27 = vsyncpa [#allocation9], 0
    %28 = vsyncpa [#allocation12], 0
    %29 = vsyncpa [#allocation15], 0
    %30 = vsyncpa [#allocation18], 0
    %31 = vsyncpa [#allocation21], 0
    %32 = vsyncpa [#allocation24], 0
    %33 = vsyncpa [#allocation27], 0
    %34 = vsyncpa [#allocation4], 0
    %s35 = scalar_lea.sflag [#allocation4], 1
    %36 = vsyncpa %s35, 0
    %37 = vsyncpa [#allocation31], 0
    %s38 = scalar_lea.sflag [#allocation31], 1
    %39 = vsyncpa %s38, 0
    loop: start=0, step=1, limit=4
    $region2: #{tpu_custom_call.1} parent=1 // loop_pre_header
      _
    $region3: #{tpu_custom_call.1} parent=1 // loop_header
      %s41 = sphi 0, %s45
      %p42 = scmp.ge.s32.totalorder %s41, 4
      %s51 = sphi 0, %s53
      %s54 = sphi 0, %s51
      %s55 = sphi 0, %s54
      %s71 = sphi 0, %s55
      %s75 = sphi 0, %s75
      %s77 = sphi 0, %s75
      %s78 = sphi 0, %s77
      %s92 = sphi 0, %s78
      %s96 = sphi 0, %s96
      %s98 = sphi 0, %s96
      %s99 = sphi 0, %s98
      %s113 = sphi 0, %s99
      %s117 = sphi 0, %s117
      %s119 = sphi 0, %s117
      %s120 = sphi 0, %s119
      %s134 = sphi 0, %s120
      %s138 = sphi 0, %s138
      %s140 = sphi 0, %s138
      %s141 = sphi 0, %s140
      %s155 = sphi 0, %s141
      %s159 = sphi 0, %s159
      %s161 = sphi 0, %s159
      %s162 = sphi 0, %s161
      %s176 = sphi 0, %s162
      %s180 = sphi 0, %s180
      %s182 = sphi 0, %s180
      %s183 = sphi 0, %s182
      %s197 = sphi 0, %s183
      %s201 = sphi 0, %s201
      %s203 = sphi 0, %s201
      %s204 = sphi 0, %s203
      %s218 = sphi 0, %s204
      %s222 = sphi 0, %s222
      %s224 = sphi 0, %s222
      %s225 = sphi 0, %s224
      %s239 = sphi 0, %s225
      %s243 = sphi 0, %s243
      %s245 = sphi 0, %s243
      %s246 = sphi 0, %s245
      %s260 = sphi 0, %s246
      %s264 = sphi 0, %s264
      %s266 = sphi 0, %s264
      %s267 = sphi 0, %s266
      %s281 = sphi 0, %s267
      %s285 = sphi 0, %s285
      %s287 = sphi 0, %s285
      %s288 = sphi 0, %s287
      %s302 = sphi 0, %s288
      %s306 = sphi 0, %s306
      %s308 = sphi 0, %s306
      %s309 = sphi 0, %s308
      %s323 = sphi 0, %s309
      %s327 = sphi 0, %s327
      %s329 = sphi 0, %s327
      %s330 = sphi 0, %s329
      %s344 = sphi 0, %s330
      %s348 = sphi 0, %s348
      %s350 = sphi 0, %s348
      %s351 = sphi 0, %s350
      %s365 = sphi 0, %s351
      %s369 = sphi 0, %s369
      %s371 = sphi 0, %s369
      %s372 = sphi 0, %s371
      %s386 = sphi 0, %s372
      %s390 = sphi 0, %s390
      %s392 = sphi 0, %s390
      %s393 = sphi 0, %s392
      %s407 = sphi 0, %s393
      %s411 = sphi 0, %s411
      %s413 = sphi 0, %s411
      %s414 = sphi 0, %s413
      %s428 = sphi 0, %s414
      %s434 = sphi 0, %s436
      %s437 = sphi 0, %s434
      %s438 = sphi 0, %s437
      %s454 = sphi 0, %s438
      %s460 = sphi 0, %s462
      %s463 = sphi 0, %s460
      %s464 = sphi 0, %s463
      %s480 = sphi 0, %s464
    $region4: #{tpu_custom_call.1} parent=1 // loop_header_branch
      %44 = sbr.rel (%p42) target = $region8
    $region5: #{tpu_custom_call.1} parent=1 // loop_body
      %s46 = ssub.s32 %s41, 1
      %s47 = ssub.s32 %s41, 2
      %s48 = sadd.s32 %s41, 1
      %s49 = ssub.s32 %s41, %s48
      %p50 = scmp.eq.s32.totalorder %s49, 0
      %s52 = sadd.s32 %s51, 1
      %s53 = scalar_select %p50, %s51, %s52
      %p56 = pneg %p50
      %p57 = scmp.eq.s32.totalorder %s41, 1
      %p58 = por %p56, %p57
      %p59 = scmp.ne.s32.totalorder %s51, %s54
      %p60 = scmp.eq.s32.totalorder %s41, 0
      %p61 = por %p59, %p60
      %p62 = scmp.ne.s32.totalorder %s51, %s54
      %p63 = scmp.eq.s32.totalorder %s46, 1
      %p64 = por %p62, %p63
      %p65 = scmp.ne.s32.totalorder %s54, %s55
      %p66 = scmp.eq.s32.totalorder %s46, 0
      %p67 = por %p65, %p66
      %p68 = scmp.ne.s32.totalorder %s54, %s55
      %p69 = scmp.eq.s32.totalorder %s47, 1
      %p70 = por %p68, %p69
      %p72 = scmp.ne.s32.totalorder %s55, %s71
      %p73 = scmp.eq.s32.totalorder %s47, 0
      %p74 = por %p72, %p73
      %s76 = sadd.s32 %s75, 1
      %p79 = scmp.eq.s32.totalorder %s41, 1
      %p80 = scmp.ne.s32.totalorder %s75, %s77
      %p81 = scmp.eq.s32.totalorder %s41, 0
      %p82 = por %p80, %p81
      %p83 = scmp.ne.s32.totalorder %s75, %s77
      %p84 = scmp.eq.s32.totalorder %s46, 1
      %p85 = por %p83, %p84
      %p86 = scmp.ne.s32.totalorder %s77, %s78
      %p87 = scmp.eq.s32.totalorder %s46, 0
      %p88 = por %p86, %p87
      %p89 = scmp.ne.s32.totalorder %s77, %s78
      %p90 = scmp.eq.s32.totalorder %s47, 1
      %p91 = por %p89, %p90
      %p93 = scmp.ne.s32.totalorder %s78, %s92
      %p94 = scmp.eq.s32.totalorder %s47, 0
      %p95 = por %p93, %p94
      %s97 = sadd.s32 %s96, 1
      %p100 = scmp.eq.s32.totalorder %s41, 1
      %p101 = scmp.ne.s32.totalorder %s96, %s98
      %p102 = scmp.eq.s32.totalorder %s41, 0
      %p103 = por %p101, %p102
      %p104 = scmp.ne.s32.totalorder %s96, %s98
      %p105 = scmp.eq.s32.totalorder %s46, 1
      %p106 = por %p104, %p105
      %p107 = scmp.ne.s32.totalorder %s98, %s99
      %p108 = scmp.eq.s32.totalorder %s46, 0
      %p109 = por %p107, %p108
      %p110 = scmp.ne.s32.totalorder %s98, %s99
      %p111 = scmp.eq.s32.totalorder %s47, 1
      %p112 = por %p110, %p111
      %p114 = scmp.ne.s32.totalorder %s99, %s113
      %p115 = scmp.eq.s32.totalorder %s47, 0
      %p116 = por %p114, %p115
      %s118 = sadd.s32 %s117, 1
      %p121 = scmp.eq.s32.totalorder %s41, 1
      %p122 = scmp.ne.s32.totalorder %s117, %s119
      %p123 = scmp.eq.s32.totalorder %s41, 0
      %p124 = por %p122, %p123
      %p125 = scmp.ne.s32.totalorder %s117, %s119
      %p126 = scmp.eq.s32.totalorder %s46, 1
      %p127 = por %p125, %p126
      %p128 = scmp.ne.s32.totalorder %s119, %s120
      %p129 = scmp.eq.s32.totalorder %s46, 0
      %p130 = por %p128, %p129
      %p131 = scmp.ne.s32.totalorder %s119, %s120
      %p132 = scmp.eq.s32.totalorder %s47, 1
      %p133 = por %p131, %p132
      %p135 = scmp.ne.s32.totalorder %s120, %s134
      %p136 = scmp.eq.s32.totalorder %s47, 0
      %p137 = por %p135, %p136
      %s139 = sadd.s32 %s138, 1
      %p142 = scmp.eq.s32.totalorder %s41, 1
      %p143 = scmp.ne.s32.totalorder %s138, %s140
      %p144 = scmp.eq.s32.totalorder %s41, 0
      %p145 = por %p143, %p144
      %p146 = scmp.ne.s32.totalorder %s138, %s140
      %p147 = scmp.eq.s32.totalorder %s46, 1
      %p148 = por %p146, %p147
      %p149 = scmp.ne.s32.totalorder %s140, %s141
      %p150 = scmp.eq.s32.totalorder %s46, 0
      %p151 = por %p149, %p150
      %p152 = scmp.ne.s32.totalorder %s140, %s141
      %p153 = scmp.eq.s32.totalorder %s47, 1
      %p154 = por %p152, %p153
      %p156 = scmp.ne.s32.totalorder %s141, %s155
      %p157 = scmp.eq.s32.totalorder %s47, 0
      %p158 = por %p156, %p157
      %s160 = sadd.s32 %s159, 1
      %p163 = scmp.eq.s32.totalorder %s41, 1
      %p164 = scmp.ne.s32.totalorder %s159, %s161
      %p165 = scmp.eq.s32.totalorder %s41, 0
      %p166 = por %p164, %p165
      %p167 = scmp.ne.s32.totalorder %s159, %s161
      %p168 = scmp.eq.s32.totalorder %s46, 1
      %p169 = por %p167, %p168
      %p170 = scmp.ne.s32.totalorder %s161, %s162
      %p171 = scmp.eq.s32.totalorder %s46, 0
      %p172 = por %p170, %p171
      %p173 = scmp.ne.s32.totalorder %s161, %s162
      %p174 = scmp.eq.s32.totalorder %s47, 1
      %p175 = por %p173, %p174
      %p177 = scmp.ne.s32.totalorder %s162, %s176
      %p178 = scmp.eq.s32.totalorder %s47, 0
      %p179 = por %p177, %p178
      %s181 = sadd.s32 %s180, 1
      %p184 = scmp.eq.s32.totalorder %s41, 1
      %p185 = scmp.ne.s32.totalorder %s180, %s182
      %p186 = scmp.eq.s32.totalorder %s41, 0
      %p187 = por %p185, %p186
      %p188 = scmp.ne.s32.totalorder %s180, %s182
      %p189 = scmp.eq.s32.totalorder %s46, 1
      %p190 = por %p188, %p189
      %p191 = scmp.ne.s32.totalorder %s182, %s183
      %p192 = scmp.eq.s32.totalorder %s46, 0
      %p193 = por %p191, %p192
      %p194 = scmp.ne.s32.totalorder %s182, %s183
      %p195 = scmp.eq.s32.totalorder %s47, 1
      %p196 = por %p194, %p195
      %p198 = scmp.ne.s32.totalorder %s183, %s197
      %p199 = scmp.eq.s32.totalorder %s47, 0
      %p200 = por %p198, %p199
      %s202 = sadd.s32 %s201, 1
      %p205 = scmp.eq.s32.totalorder %s41, 1
      %p206 = scmp.ne.s32.totalorder %s201, %s203
      %p207 = scmp.eq.s32.totalorder %s41, 0
      %p208 = por %p206, %p207
      %p209 = scmp.ne.s32.totalorder %s201, %s203
      %p210 = scmp.eq.s32.totalorder %s46, 1
      %p211 = por %p209, %p210
      %p212 = scmp.ne.s32.totalorder %s203, %s204
      %p213 = scmp.eq.s32.totalorder %s46, 0
      %p214 = por %p212, %p213
      %p215 = scmp.ne.s32.totalorder %s203, %s204
      %p216 = scmp.eq.s32.totalorder %s47, 1
      %p217 = por %p215, %p216
      %p219 = scmp.ne.s32.totalorder %s204, %s218
      %p220 = scmp.eq.s32.totalorder %s47, 0
      %p221 = por %p219, %p220
      %s223 = sadd.s32 %s222, 1
      %p226 = scmp.eq.s32.totalorder %s41, 1
      %p227 = scmp.ne.s32.totalorder %s222, %s224
      %p228 = scmp.eq.s32.totalorder %s41, 0
      %p229 = por %p227, %p228
      %p230 = scmp.ne.s32.totalorder %s222, %s224
      %p231 = scmp.eq.s32.totalorder %s46, 1
      %p232 = por %p230, %p231
      %p233 = scmp.ne.s32.totalorder %s224, %s225
      %p234 = scmp.eq.s32.totalorder %s46, 0
      %p235 = por %p233, %p234
      %p236 = scmp.ne.s32.totalorder %s224, %s225
      %p237 = scmp.eq.s32.totalorder %s47, 1
      %p238 = por %p236, %p237
      %p240 = scmp.ne.s32.totalorder %s225, %s239
      %p241 = scmp.eq.s32.totalorder %s47, 0
      %p242 = por %p240, %p241
      %s244 = sadd.s32 %s243, 1
      %p247 = scmp.eq.s32.totalorder %s41, 1
      %p248 = scmp.ne.s32.totalorder %s243, %s245
      %p249 = scmp.eq.s32.totalorder %s41, 0
      %p250 = por %p248, %p249
      %p251 = scmp.ne.s32.totalorder %s243, %s245
      %p252 = scmp.eq.s32.totalorder %s46, 1
      %p253 = por %p251, %p252
      %p254 = scmp.ne.s32.totalorder %s245, %s246
      %p255 = scmp.eq.s32.totalorder %s46, 0
      %p256 = por %p254, %p255
      %p257 = scmp.ne.s32.totalorder %s245, %s246
      %p258 = scmp.eq.s32.totalorder %s47, 1
      %p259 = por %p257, %p258
      %p261 = scmp.ne.s32.totalorder %s246, %s260
      %p262 = scmp.eq.s32.totalorder %s47, 0
      %p263 = por %p261, %p262
      %s265 = sadd.s32 %s264, 1
      %p268 = scmp.eq.s32.totalorder %s41, 1
      %p269 = scmp.ne.s32.totalorder %s264, %s266
      %p270 = scmp.eq.s32.totalorder %s41, 0
      %p271 = por %p269, %p270
      %p272 = scmp.ne.s32.totalorder %s264, %s266
      %p273 = scmp.eq.s32.totalorder %s46, 1
      %p274 = por %p272, %p273
      %p275 = scmp.ne.s32.totalorder %s266, %s267
      %p276 = scmp.eq.s32.totalorder %s46, 0
      %p277 = por %p275, %p276
      %p278 = scmp.ne.s32.totalorder %s266, %s267
      %p279 = scmp.eq.s32.totalorder %s47, 1
      %p280 = por %p278, %p279
      %p282 = scmp.ne.s32.totalorder %s267, %s281
      %p283 = scmp.eq.s32.totalorder %s47, 0
      %p284 = por %p282, %p283
      %s286 = sadd.s32 %s285, 1
      %p289 = scmp.eq.s32.totalorder %s41, 1
      %p290 = scmp.ne.s32.totalorder %s285, %s287
      %p291 = scmp.eq.s32.totalorder %s41, 0
      %p292 = por %p290, %p291
      %p293 = scmp.ne.s32.totalorder %s285, %s287
      %p294 = scmp.eq.s32.totalorder %s46, 1
      %p295 = por %p293, %p294
      %p296 = scmp.ne.s32.totalorder %s287, %s288
      %p297 = scmp.eq.s32.totalorder %s46, 0
      %p298 = por %p296, %p297
      %p299 = scmp.ne.s32.totalorder %s287, %s288
      %p300 = scmp.eq.s32.totalorder %s47, 1
      %p301 = por %p299, %p300
      %p303 = scmp.ne.s32.totalorder %s288, %s302
      %p304 = scmp.eq.s32.totalorder %s47, 0
      %p305 = por %p303, %p304
      %s307 = sadd.s32 %s306, 1
      %p310 = scmp.eq.s32.totalorder %s41, 1
      %p311 = scmp.ne.s32.totalorder %s306, %s308
      %p312 = scmp.eq.s32.totalorder %s41, 0
      %p313 = por %p311, %p312
      %p314 = scmp.ne.s32.totalorder %s306, %s308
      %p315 = scmp.eq.s32.totalorder %s46, 1
      %p316 = por %p314, %p315
      %p317 = scmp.ne.s32.totalorder %s308, %s309
      %p318 = scmp.eq.s32.totalorder %s46, 0
      %p319 = por %p317, %p318
      %p320 = scmp.ne.s32.totalorder %s308, %s309
      %p321 = scmp.eq.s32.totalorder %s47, 1
      %p322 = por %p320, %p321
      %p324 = scmp.ne.s32.totalorder %s309, %s323
      %p325 = scmp.eq.s32.totalorder %s47, 0
      %p326 = por %p324, %p325
      %s328 = sadd.s32 %s327, 1
      %p331 = scmp.eq.s32.totalorder %s41, 1
      %p332 = scmp.ne.s32.totalorder %s327, %s329
      %p333 = scmp.eq.s32.totalorder %s41, 0
      %p334 = por %p332, %p333
      %p335 = scmp.ne.s32.totalorder %s327, %s329
      %p336 = scmp.eq.s32.totalorder %s46, 1
      %p337 = por %p335, %p336
      %p338 = scmp.ne.s32.totalorder %s329, %s330
      %p339 = scmp.eq.s32.totalorder %s46, 0
      %p340 = por %p338, %p339
      %p341 = scmp.ne.s32.totalorder %s329, %s330
      %p342 = scmp.eq.s32.totalorder %s47, 1
      %p343 = por %p341, %p342
      %p345 = scmp.ne.s32.totalorder %s330, %s344
      %p346 = scmp.eq.s32.totalorder %s47, 0
      %p347 = por %p345, %p346
      %s349 = sadd.s32 %s348, 1
      %p352 = scmp.eq.s32.totalorder %s41, 1
      %p353 = scmp.ne.s32.totalorder %s348, %s350
      %p354 = scmp.eq.s32.totalorder %s41, 0
      %p355 = por %p353, %p354
      %p356 = scmp.ne.s32.totalorder %s348, %s350
      %p357 = scmp.eq.s32.totalorder %s46, 1
      %p358 = por %p356, %p357
      %p359 = scmp.ne.s32.totalorder %s350, %s351
      %p360 = scmp.eq.s32.totalorder %s46, 0
      %p361 = por %p359, %p360
      %p362 = scmp.ne.s32.totalorder %s350, %s351
      %p363 = scmp.eq.s32.totalorder %s47, 1
      %p364 = por %p362, %p363
      %p366 = scmp.ne.s32.totalorder %s351, %s365
      %p367 = scmp.eq.s32.totalorder %s47, 0
      %p368 = por %p366, %p367
      %s370 = sadd.s32 %s369, 1
      %p373 = scmp.eq.s32.totalorder %s41, 1
      %p374 = scmp.ne.s32.totalorder %s369, %s371
      %p375 = scmp.eq.s32.totalorder %s41, 0
      %p376 = por %p374, %p375
      %p377 = scmp.ne.s32.totalorder %s369, %s371
      %p378 = scmp.eq.s32.totalorder %s46, 1
      %p379 = por %p377, %p378
      %p380 = scmp.ne.s32.totalorder %s371, %s372
      %p381 = scmp.eq.s32.totalorder %s46, 0
      %p382 = por %p380, %p381
      %p383 = scmp.ne.s32.totalorder %s371, %s372
      %p384 = scmp.eq.s32.totalorder %s47, 1
      %p385 = por %p383, %p384
      %p387 = scmp.ne.s32.totalorder %s372, %s386
      %p388 = scmp.eq.s32.totalorder %s47, 0
      %p389 = por %p387, %p388
      %s391 = sadd.s32 %s390, 1
      %p394 = scmp.eq.s32.totalorder %s41, 1
      %p395 = scmp.ne.s32.totalorder %s390, %s392
      %p396 = scmp.eq.s32.totalorder %s41, 0
      %p397 = por %p395, %p396
      %p398 = scmp.ne.s32.totalorder %s390, %s392
      %p399 = scmp.eq.s32.totalorder %s46, 1
      %p400 = por %p398, %p399
      %p401 = scmp.ne.s32.totalorder %s392, %s393
      %p402 = scmp.eq.s32.totalorder %s46, 0
      %p403 = por %p401, %p402
      %p404 = scmp.ne.s32.totalorder %s392, %s393
      %p405 = scmp.eq.s32.totalorder %s47, 1
      %p406 = por %p404, %p405
      %p408 = scmp.ne.s32.totalorder %s393, %s407
      %p409 = scmp.eq.s32.totalorder %s47, 0
      %p410 = por %p408, %p409
      %s412 = sadd.s32 %s411, 1
      %p415 = scmp.eq.s32.totalorder %s41, 1
      %p416 = scmp.ne.s32.totalorder %s411, %s413
      %p417 = scmp.eq.s32.totalorder %s41, 0
      %p418 = por %p416, %p417
      %p419 = scmp.ne.s32.totalorder %s411, %s413
      %p420 = scmp.eq.s32.totalorder %s46, 1
      %p421 = por %p419, %p420
      %p422 = scmp.ne.s32.totalorder %s413, %s414
      %p423 = scmp.eq.s32.totalorder %s46, 0
      %p424 = por %p422, %p423
      %p425 = scmp.ne.s32.totalorder %s413, %s414
      %p426 = scmp.eq.s32.totalorder %s47, 1
      %p427 = por %p425, %p426
      %p429 = scmp.ne.s32.totalorder %s414, %s428
      %p430 = scmp.eq.s32.totalorder %s47, 0
      %p431 = por %p429, %p430
      %s432 = ssub.s32 %s41, %s48
      %p433 = scmp.eq.s32.totalorder %s432, 0
      %s435 = sadd.s32 %s434, 1
      %s436 = scalar_select %p433, %s434, %s435
      %p439 = pneg %p433
      %p440 = scmp.eq.s32.totalorder %s41, 1
      %p441 = por %p439, %p440
      %p442 = scmp.ne.s32.totalorder %s434, %s437
      %p443 = scmp.eq.s32.totalorder %s41, 0
      %p444 = por %p442, %p443
      %p445 = scmp.ne.s32.totalorder %s434, %s437
      %p446 = scmp.eq.s32.totalorder %s46, 1
      %p447 = por %p445, %p446
      %p448 = scmp.ne.s32.totalorder %s437, %s438
      %p449 = scmp.eq.s32.totalorder %s46, 0
      %p450 = por %p448, %p449
      %p451 = scmp.ne.s32.totalorder %s437, %s438
      %p452 = scmp.eq.s32.totalorder %s47, 1
      %p453 = por %p451, %p452
      %p455 = scmp.ne.s32.totalorder %s438, %s454
      %p456 = scmp.eq.s32.totalorder %s47, 0
      %p457 = por %p455, %p456
      %s458 = ssub.s32 %s41, %s48
      %p459 = scmp.eq.s32.totalorder %s458, 0
      %s461 = sadd.s32 %s460, 1
      %s462 = scalar_select %p459, %s460, %s461
      %p465 = pneg %p459
      %p466 = scmp.eq.s32.totalorder %s41, 1
      %p467 = por %p465, %p466
      %p468 = scmp.ne.s32.totalorder %s460, %s463
      %p469 = scmp.eq.s32.totalorder %s41, 0
      %p470 = por %p468, %p469
      %p471 = scmp.ne.s32.totalorder %s460, %s463
      %p472 = scmp.eq.s32.totalorder %s46, 1
      %p473 = por %p471, %p472
      %p474 = scmp.ne.s32.totalorder %s463, %s464
      %p475 = scmp.eq.s32.totalorder %s46, 0
      %p476 = por %p474, %p475
      %p477 = scmp.ne.s32.totalorder %s463, %s464
      %p478 = scmp.eq.s32.totalorder %s47, 1
      %p479 = por %p477, %p478
      %p481 = scmp.ne.s32.totalorder %s464, %s480
      %p482 = scmp.eq.s32.totalorder %s47, 0
      %p483 = por %p481, %p482
      %p484 = scmp.le.s32.totalorder 1, %s41
      %p485 = scmp.lt.s32.totalorder %s41, 3
      %p486 = pnand %p484, %p485
      %p487 = pneg %p486
      // Predicated region
      $region9: #{tpu_custom_call.1} parent=5 // pred_check
        _
      $region10: #{tpu_custom_call.1} parent=5 // pred_check_branch
        %489 = sbr.rel (%p486) target = $region12
      $region11: #{tpu_custom_call.1} parent=5 // pred_region
        %s490 = ssub.s32 %s41, 1
        // Predicated region
        $region13: #{tpu_custom_call.1} parent=11 // pred_check
          %p491 = pneg %p88
        $region14: #{tpu_custom_call.1} parent=11 // pred_check_branch
          %493 = sbr.rel (%p491) target = $region16
        $region15: #{tpu_custom_call.1} parent=11 // pred_region
          %s495 = ssub.s32 64, 64
          %496 = vsyncadd [#allocation3], %s495
          %s498 = sshll.u32 [#allocation2], 4
          %s499 = int_to_ptr.vmem [resolvable:$true] %s498
          %501 = dma.hbm_to_vmem [thread:$0]  %s1, 64, %s499, [#allocation3]
        $region16: #{tpu_custom_call.1} parent=11 // pred_fallthru
          _
        // Predicated region
        $region17: #{tpu_custom_call.1} parent=11 // pred_check
          %p502 = pneg %p109
        $region18: #{tpu_custom_call.1} parent=11 // pred_check_branch
          %504 = sbr.rel (%p502) target = $region20
        $region19: #{tpu_custom_call.1} parent=11 // pred_region
          %s506 = ssub.s32 16, 16
          %507 = vsyncadd [#allocation6], %s506
          %s509 = sshll.u32 [#allocation5], 4
          %s510 = int_to_ptr.vmem [resolvable:$true] %s509
          %512 = dma.hbm_to_vmem [thread:$0]  %s2, 16, %s510, [#allocation6]
        $region20: #{tpu_custom_call.1} parent=11 // pred_fallthru
          _
        // Predicated region
        $region21: #{tpu_custom_call.1} parent=11 // pred_check
          %p513 = pneg %p130
        $region22: #{tpu_custom_call.1} parent=11 // pred_check_branch
          %515 = sbr.rel (%p513) target = $region24
        $region23: #{tpu_custom_call.1} parent=11 // pred_region
          %s517 = ssub.s32 16, 16
          %518 = vsyncadd [#allocation6], %s517
          %s520 = sshll.u32 [#allocation7], 4
          %s521 = int_to_ptr.vmem [resolvable:$true] %s520
          %523 = dma.hbm_to_vmem [thread:$0]  %s3, 16, %s521, [#allocation6]
        $region24: #{tpu_custom_call.1} parent=11 // pred_fallthru
          _
        // Predicated region
        $region25: #{tpu_custom_call.1} parent=11 // pred_check
          %p524 = pneg %p151
        $region26: #{tpu_custom_call.1} parent=11 // pred_check_branch
          %526 = sbr.rel (%p524) target = $region28
        $region27: #{tpu_custom_call.1} parent=11 // pred_region
          %s528 = ssub.s32 512, 512
          %529 = vsyncadd [#allocation9], %s528
          %s530 = sshll.u32 [#allocation8], 4
          %s531 = int_to_ptr.vmem [resolvable:$true] %s530
          %536 = dma.hbm_to_vmem [thread:$0]  %s4, 512, %s531, [#allocation9], 64, 64, 4
        $region28: #{tpu_custom_call.1} parent=11 // pred_fallthru
          _
        // Predicated region
        $region29: #{tpu_custom_call.1} parent=11 // pred_check
          %p537 = pneg %p172
        $region30: #{tpu_custom_call.1} parent=11 // pred_check_branch
          %539 = sbr.rel (%p537) target = $region32
        $region31: #{tpu_custom_call.1} parent=11 // pred_region
          %s541 = ssub.s32 16, 16
          %542 = vsyncadd [#allocation9], %s541
          %s544 = sshll.u32 [#allocation10], 4
          %s545 = int_to_ptr.vmem [resolvable:$true] %s544
          %547 = dma.hbm_to_vmem [thread:$0]  %s5, 16, %s545, [#allocation9]
        $region32: #{tpu_custom_call.1} parent=11 // pred_fallthru
          _
        // Predicated region
        $region33: #{tpu_custom_call.1} parent=11 // pred_check
          %p548 = pneg %p193
        $region34: #{tpu_custom_call.1} parent=11 // pred_check_branch
          %550 = sbr.rel (%p548) target = $region36
        $region35: #{tpu_custom_call.1} parent=11 // pred_region
          %s552 = ssub.s32 16, 16
          %553 = vsyncadd [#allocation12], %s552
          %s555 = sshll.u32 [#allocation11], 4
          %s556 = int_to_ptr.vmem [resolvable:$true] %s555
          %558 = dma.hbm_to_vmem [thread:$0]  %s6, 16, %s556, [#allocation12]
        $region36: #{tpu_custom_call.1} parent=11 // pred_fallthru
          _
        // Predicated region
        $region37: #{tpu_custom_call.1} parent=11 // pred_check
          %p559 = pneg %p214
        $region38: #{tpu_custom_call.1} parent=11 // pred_check_branch
          %561 = sbr.rel (%p559) target = $region40
        $region39: #{tpu_custom_call.1} parent=11 // pred_region
          %s563 = ssub.s32 512, 512
          %564 = vsyncadd [#allocation12], %s563
          %s565 = sshll.u32 [#allocation13], 4
          %s566 = int_to_ptr.vmem [resolvable:$true] %s565
          %571 = dma.hbm_to_vmem [thread:$0]  %s7, 512, %s566, [#allocation12], 64, 64, 4
        $region40: #{tpu_custom_call.1} parent=11 // pred_fallthru
          _
        // Predicated region
        $region41: #{tpu_custom_call.1} parent=11 // pred_check
          %p572 = pneg %p235
        $region42: #{tpu_custom_call.1} parent=11 // pred_check_branch
          %574 = sbr.rel (%p572) target = $region44
        $region43: #{tpu_custom_call.1} parent=11 // pred_region
          %s576 = ssub.s32 16, 16
          %577 = vsyncadd [#allocation15], %s576
          %s579 = sshll.u32 [#allocation14], 4
          %s580 = int_to_ptr.vmem [resolvable:$true] %s579
          %582 = dma.hbm_to_vmem [thread:$0]  %s8, 16, %s580, [#allocation15]
        $region44: #{tpu_custom_call.1} parent=11 // pred_fallthru
          _
        // Predicated region
        $region45: #{tpu_custom_call.1} parent=11 // pred_check
          %p583 = pneg %p256
        $region46: #{tpu_custom_call.1} parent=11 // pred_check_branch
          %585 = sbr.rel (%p583) target = $region48
        $region47: #{tpu_custom_call.1} parent=11 // pred_region
          %s587 = ssub.s32 16, 16
          %588 = vsyncadd [#allocation15], %s587
          %s590 = sshll.u32 [#allocation16], 4
          %s591 = int_to_ptr.vmem [resolvable:$true] %s590
          %593 = dma.hbm_to_vmem [thread:$0]  %s9, 16, %s591, [#allocation15]
        $region48: #{tpu_custom_call.1} parent=11 // pred_fallthru
          _
        // Predicated region
        $region49: #{tpu_custom_call.1} parent=11 // pred_check
          %p594 = pneg %p277
        $region50: #{tpu_custom_call.1} parent=11 // pred_check_branch
          %596 = sbr.rel (%p594) target = $region52
        $region51: #{tpu_custom_call.1} parent=11 // pred_region
          %s598 = ssub.s32 2048, 2048
          %599 = vsyncadd [#allocation18], %s598
          %s600 = sshll.u32 [#allocation17], 4
          %s601 = int_to_ptr.vmem [resolvable:$true] %s600
          %606 = dma.hbm_to_vmem [thread:$0]  %s10, 2048, %s601, [#allocation18], 128, 128, 8
        $region52: #{tpu_custom_call.1} parent=11 // pred_fallthru
          _
        // Predicated region
        $region53: #{tpu_custom_call.1} parent=11 // pred_check
          %p607 = pneg %p298
        $region54: #{tpu_custom_call.1} parent=11 // pred_check_branch
          %609 = sbr.rel (%p607) target = $region56
        $region55: #{tpu_custom_call.1} parent=11 // pred_region
          %s611 = ssub.s32 32, 32
          %612 = vsyncadd [#allocation18], %s611
          %s614 = sshll.u32 [#allocation19], 4
          %s615 = int_to_ptr.vmem [resolvable:$true] %s614
          %617 = dma.hbm_to_vmem [thread:$0]  %s11, 32, %s615, [#allocation18]
        $region56: #{tpu_custom_call.1} parent=11 // pred_fallthru
          _
        // Predicated region
        $region57: #{tpu_custom_call.1} parent=11 // pred_check
          %p618 = pneg %p319
        $region58: #{tpu_custom_call.1} parent=11 // pred_check_branch
          %620 = sbr.rel (%p618) target = $region60
        $region59: #{tpu_custom_call.1} parent=11 // pred_region
          %s622 = ssub.s32 32, 32
          %623 = vsyncadd [#allocation21], %s622
          %s625 = sshll.u32 [#allocation20], 4
          %s626 = int_to_ptr.vmem [resolvable:$true] %s625
          %628 = dma.hbm_to_vmem [thread:$0]  %s12, 32, %s626, [#allocation21]
        $region60: #{tpu_custom_call.1} parent=11 // pred_fallthru
          _
        // Predicated region
        $region61: #{tpu_custom_call.1} parent=11 // pred_check
          %p629 = pneg %p340
        $region62: #{tpu_custom_call.1} parent=11 // pred_check_branch
          %631 = sbr.rel (%p629) target = $region64
        $region63: #{tpu_custom_call.1} parent=11 // pred_region
          %s633 = ssub.s32 4096, 4096
          %634 = vsyncadd [#allocation21], %s633
          %s635 = sshll.u32 [#allocation22], 4
          %s636 = int_to_ptr.vmem [resolvable:$true] %s635
          %641 = dma.hbm_to_vmem [thread:$0]  %s13, 4096, %s636, [#allocation21], 128, 128, 8
        $region64: #{tpu_custom_call.1} parent=11 // pred_fallthru
          _
        // Predicated region
        $region65: #{tpu_custom_call.1} parent=11 // pred_check
          %p642 = pneg %p361
        $region66: #{tpu_custom_call.1} parent=11 // pred_check_branch
          %644 = sbr.rel (%p642) target = $region68
        $region67: #{tpu_custom_call.1} parent=11 // pred_region
          %s646 = ssub.s32 32, 32
          %647 = vsyncadd [#allocation24], %s646
          %s649 = sshll.u32 [#allocation23], 4
          %s650 = int_to_ptr.vmem [resolvable:$true] %s649
          %652 = dma.hbm_to_vmem [thread:$0]  %s14, 32, %s650, [#allocation24]
        $region68: #{tpu_custom_call.1} parent=11 // pred_fallthru
          _
        // Predicated region
        $region69: #{tpu_custom_call.1} parent=11 // pred_check
          %p653 = pneg %p382
        $region70: #{tpu_custom_call.1} parent=11 // pred_check_branch
          %655 = sbr.rel (%p653) target = $region72
        $region71: #{tpu_custom_call.1} parent=11 // pred_region
          %s657 = ssub.s32 32, 32
          %658 = vsyncadd [#allocation24], %s657
          %s660 = sshll.u32 [#allocation25], 4
          %s661 = int_to_ptr.vmem [resolvable:$true] %s660
          %663 = dma.hbm_to_vmem [thread:$0]  %s15, 32, %s661, [#allocation24]
        $region72: #{tpu_custom_call.1} parent=11 // pred_fallthru
          _
        // Predicated region
        $region73: #{tpu_custom_call.1} parent=11 // pred_check
          %p664 = pneg %p403
        $region74: #{tpu_custom_call.1} parent=11 // pred_check_branch
          %666 = sbr.rel (%p664) target = $region76
        $region75: #{tpu_custom_call.1} parent=11 // pred_region
          %s668 = ssub.s32 65536, 65536
          %669 = vsyncadd [#allocation27], %s668
          %s670 = sshll.u32 [#allocation26], 4
          %s671 = int_to_ptr.vmem [resolvable:$true] %s670
          %676 = dma.hbm_to_vmem [thread:$0]  %s16, 65536, %s671, [#allocation27], 2048, 2048, 128
        $region76: #{tpu_custom_call.1} parent=11 // pred_fallthru
          _
        // Predicated region
        $region77: #{tpu_custom_call.1} parent=11 // pred_check
          %p677 = pneg %p424
        $region78: #{tpu_custom_call.1} parent=11 // pred_check_branch
          %679 = sbr.rel (%p677) target = $region80
        $region79: #{tpu_custom_call.1} parent=11 // pred_region
          %s681 = ssub.s32 512, 512
          %682 = vsyncadd [#allocation27], %s681
          %s684 = sshll.u32 [#allocation28], 4
          %s685 = int_to_ptr.vmem [resolvable:$true] %s684
          %687 = dma.hbm_to_vmem [thread:$0]  %s17, 512, %s685, [#allocation27]
        $region80: #{tpu_custom_call.1} parent=11 // pred_fallthru
          _
      $region12: #{tpu_custom_call.1} parent=5 // pred_fallthru
        _
      %p688 = scmp.lt.s32.totalorder %s41, 2
      // Predicated region
      $region81: #{tpu_custom_call.1} parent=5 // pred_check
        %p689 = pneg %p688
      $region82: #{tpu_custom_call.1} parent=5 // pred_check_branch
        %691 = sbr.rel (%p689) target = $region84
      $region83: #{tpu_custom_call.1} parent=5 // pred_region
        // Predicated region
        $region85: #{tpu_custom_call.1} parent=83 // pred_check
          %p692 = pneg %p61
        $region86: #{tpu_custom_call.1} parent=83 // pred_check_branch
          %694 = sbr.rel (%p692) target = $region88
        $region87: #{tpu_custom_call.1} parent=83 // pred_region
          %p695 = scmp.lt.s32.totalorder %s41, 1
          %s696 = scalar_select %p695, %s41, 1
          %s697 = smul.addr %s696, 16
          %s698 = smul.addr %s697, 4
          %s699 = scalar_lea.vmem %s0, %s698
        $region88: #{tpu_custom_call.1} parent=83 // pred_fallthru
          _
      $region84: #{tpu_custom_call.1} parent=5 // pred_fallthru
        _
      %p700 = scmp.le.s32.totalorder 1, %s41
      %p701 = scmp.lt.s32.totalorder %s41, 3
      %p702 = pnand %p700, %p701
      %p703 = pneg %p702
      // Predicated region
      $region89: #{tpu_custom_call.1} parent=5 // pred_check
        _
      $region90: #{tpu_custom_call.1} parent=5 // pred_check_branch
        %705 = sbr.rel (%p702) target = $region92
      $region91: #{tpu_custom_call.1} parent=5 // pred_region
        %s706 = ssub.s32 %s41, 1
        // Predicated region
        $region93: #{tpu_custom_call.1} parent=91 // pred_check
          %p707 = pneg %p88
        $region94: #{tpu_custom_call.1} parent=91 // pred_check_branch
          %709 = sbr.rel (%p707) target = $region96
        $region95: #{tpu_custom_call.1} parent=91 // pred_region
          %710 = dma.done [#allocation3], 64
        $region96: #{tpu_custom_call.1} parent=91 // pred_fallthru
          _
        // Predicated region
        $region97: #{tpu_custom_call.1} parent=91 // pred_check
          %p711 = pneg %p109
        $region98: #{tpu_custom_call.1} parent=91 // pred_check_branch
          %713 = sbr.rel (%p711) target = $region100
        $region99: #{tpu_custom_call.1} parent=91 // pred_region
          %714 = dma.done [#allocation6], 16
        $region100: #{tpu_custom_call.1} parent=91 // pred_fallthru
          _
        // Predicated region
        $region101: #{tpu_custom_call.1} parent=91 // pred_check
          %p715 = pneg %p130
        $region102: #{tpu_custom_call.1} parent=91 // pred_check_branch
          %717 = sbr.rel (%p715) target = $region104
        $region103: #{tpu_custom_call.1} parent=91 // pred_region
          %718 = dma.done [#allocation6], 16
        $region104: #{tpu_custom_call.1} parent=91 // pred_fallthru
          _
        // Predicated region
        $region105: #{tpu_custom_call.1} parent=91 // pred_check
          %p719 = pneg %p151
        $region106: #{tpu_custom_call.1} parent=91 // pred_check_branch
          %721 = sbr.rel (%p719) target = $region108
        $region107: #{tpu_custom_call.1} parent=91 // pred_region
          %722 = dma.done [#allocation9], 512
        $region108: #{tpu_custom_call.1} parent=91 // pred_fallthru
          _
        // Predicated region
        $region109: #{tpu_custom_call.1} parent=91 // pred_check
          %p723 = pneg %p172
        $region110: #{tpu_custom_call.1} parent=91 // pred_check_branch
          %725 = sbr.rel (%p723) target = $region112
        $region111: #{tpu_custom_call.1} parent=91 // pred_region
          %726 = dma.done [#allocation9], 16
        $region112: #{tpu_custom_call.1} parent=91 // pred_fallthru
          _
        // Predicated region
        $region113: #{tpu_custom_call.1} parent=91 // pred_check
          %p727 = pneg %p193
        $region114: #{tpu_custom_call.1} parent=91 // pred_check_branch
          %729 = sbr.rel (%p727) target = $region116
        $region115: #{tpu_custom_call.1} parent=91 // pred_region
          %730 = dma.done [#allocation12], 16
        $region116: #{tpu_custom_call.1} parent=91 // pred_fallthru
          _
        // Predicated region
        $region117: #{tpu_custom_call.1} parent=91 // pred_check
          %p731 = pneg %p214
        $region118: #{tpu_custom_call.1} parent=91 // pred_check_branch
          %733 = sbr.rel (%p731) target = $region120
        $region119: #{tpu_custom_call.1} parent=91 // pred_region
          %734 = dma.done [#allocation12], 512
        $region120: #{tpu_custom_call.1} parent=91 // pred_fallthru
          _
        // Predicated region
        $region121: #{tpu_custom_call.1} parent=91 // pred_check
          %p735 = pneg %p235
        $region122: #{tpu_custom_call.1} parent=91 // pred_check_branch
          %737 = sbr.rel (%p735) target = $region124
        $region123: #{tpu_custom_call.1} parent=91 // pred_region
          %738 = dma.done [#allocation15], 16
        $region124: #{tpu_custom_call.1} parent=91 // pred_fallthru
          _
        // Predicated region
        $region125: #{tpu_custom_call.1} parent=91 // pred_check
          %p739 = pneg %p256
        $region126: #{tpu_custom_call.1} parent=91 // pred_check_branch
          %741 = sbr.rel (%p739) target = $region128
        $region127: #{tpu_custom_call.1} parent=91 // pred_region
          %742 = dma.done [#allocation15], 16
        $region128: #{tpu_custom_call.1} parent=91 // pred_fallthru
          _
        // Predicated region
        $region129: #{tpu_custom_call.1} parent=91 // pred_check
          %p743 = pneg %p277
        $region130: #{tpu_custom_call.1} parent=91 // pred_check_branch
          %745 = sbr.rel (%p743) target = $region132
        $region131: #{tpu_custom_call.1} parent=91 // pred_region
          %746 = dma.done [#allocation18], 2048
        $region132: #{tpu_custom_call.1} parent=91 // pred_fallthru
          _
        // Predicated region
        $region133: #{tpu_custom_call.1} parent=91 // pred_check
          %p747 = pneg %p298
        $region134: #{tpu_custom_call.1} parent=91 // pred_check_branch
          %749 = sbr.rel (%p747) target = $region136
        $region135: #{tpu_custom_call.1} parent=91 // pred_region
          %750 = dma.done [#allocation18], 32
        $region136: #{tpu_custom_call.1} parent=91 // pred_fallthru
          _
        // Predicated region
        $region137: #{tpu_custom_call.1} parent=91 // pred_check
          %p751 = pneg %p319
        $region138: #{tpu_custom_call.1} parent=91 // pred_check_branch
          %753 = sbr.rel (%p751) target = $region140
        $region139: #{tpu_custom_call.1} parent=91 // pred_region
          %754 = dma.done [#allocation21], 32
        $region140: #{tpu_custom_call.1} parent=91 // pred_fallthru
          _
        // Predicated region
        $region141: #{tpu_custom_call.1} parent=91 // pred_check
          %p755 = pneg %p340
        $region142: #{tpu_custom_call.1} parent=91 // pred_check_branch
          %757 = sbr.rel (%p755) target = $region144
        $region143: #{tpu_custom_call.1} parent=91 // pred_region
          %758 = dma.done [#allocation21], 4096
        $region144: #{tpu_custom_call.1} parent=91 // pred_fallthru
          _
        // Predicated region
        $region145: #{tpu_custom_call.1} parent=91 // pred_check
          %p759 = pneg %p361
        $region146: #{tpu_custom_call.1} parent=91 // pred_check_branch
          %761 = sbr.rel (%p759) target = $region148
        $region147: #{tpu_custom_call.1} parent=91 // pred_region
          %762 = dma.done [#allocation24], 32
        $region148: #{tpu_custom_call.1} parent=91 // pred_fallthru
          _
        // Predicated region
        $region149: #{tpu_custom_call.1} parent=91 // pred_check
          %p763 = pneg %p382
        $region150: #{tpu_custom_call.1} parent=91 // pred_check_branch
          %765 = sbr.rel (%p763) target = $region152
        $region151: #{tpu_custom_call.1} parent=91 // pred_region
          %766 = dma.done [#allocation24], 32
        $region152: #{tpu_custom_call.1} parent=91 // pred_fallthru
          _
        // Predicated region
        $region153: #{tpu_custom_call.1} parent=91 // pred_check
          %p767 = pneg %p403
        $region154: #{tpu_custom_call.1} parent=91 // pred_check_branch
          %769 = sbr.rel (%p767) target = $region156
        $region155: #{tpu_custom_call.1} parent=91 // pred_region
          %770 = dma.done [#allocation27], 65536
        $region156: #{tpu_custom_call.1} parent=91 // pred_fallthru
          _
        // Predicated region
        $region157: #{tpu_custom_call.1} parent=91 // pred_check
          %p771 = pneg %p424
        $region158: #{tpu_custom_call.1} parent=91 // pred_check_branch
          %773 = sbr.rel (%p771) target = $region160
        $region159: #{tpu_custom_call.1} parent=91 // pred_region
          %774 = dma.done [#allocation27], 512
        $region160: #{tpu_custom_call.1} parent=91 // pred_fallthru
          _
        %p775 = scmp.lt.s32.totalorder %s46, 1
        %s776 = scalar_select %p775, %s46, 1
        %s777 = smul.addr %s776, 16
        %s778 = smul.addr %s777, 4
        %s779 = scalar_lea.vmem %s0, %s778
        %p780 = pneg %p67
        %p781 = pneg %p64
        %p782 = pneg %p88
        %p783 = pneg %p85
        %p784 = pneg %p109
        %p785 = pneg %p106
        %p786 = pneg %p130
        %p787 = pneg %p127
        %p788 = pneg %p151
        %p789 = pneg %p148
        %p790 = pneg %p172
        %p791 = pneg %p169
        %p792 = pneg %p193
        %p793 = pneg %p190
        %p794 = pneg %p214
        %p795 = pneg %p211
        %p796 = pneg %p235
        %p797 = pneg %p232
        %p798 = pneg %p256
        %p799 = pneg %p253
        %p800 = pneg %p277
        %p801 = pneg %p274
        %p802 = pneg %p298
        %p803 = pneg %p295
        %p804 = pneg %p319
        %p805 = pneg %p316
        %p806 = pneg %p340
        %p807 = pneg %p337
        %p808 = pneg %p361
        %p809 = pneg %p358
        %p810 = pneg %p382
        %p811 = pneg %p379
        %p812 = pneg %p403
        %p813 = pneg %p400
        %p814 = pneg %p424
        %p815 = pneg %p421
        %p816 = pneg %p450
        %p817 = pneg %p447
        %s818 = sand.u32 %s437, 1
        %s819 = scalar_lea.sflag [#allocation4], %s818
        %s820 = sand.u32 %s437, 1
        %s821 = scalar_lea.vmem [#allocation29], %s820
        %p822 = pneg %p476
        %p823 = pneg %p473
        %s824 = sand.u32 %s463, 1
        %s825 = scalar_lea.sflag [#allocation31], %s824
        %s826 = sand.u32 %s463, 1
        %s827 = smul.addr %s826, 32
        %s828 = scalar_lea.vmem [#allocation30], %s827
        %p829 = scmp.lt.s32.totalorder %s46, 1
        %s830 = scalar_select %p829, %s46, 1
        %s831 = smul.addr %s830, 16
        %s832 = smul.addr %s831, 4
        %s833 = scalar_lea.vmem %s0, %s832
        %v835 = vld [vmem:[%s833] sm:$0xf]
        %v836 = vld [vmem:[%s833 + $0x4] sm:$0xf]
        %v837 = vld [vmem:[%s833 + $0x8] sm:$0xf]
        %v838 = vld [vmem:[%s833 + $0xc] sm:$0xf]
        %v839 = vld [vmem:[%s833 + $0x10] sm:$0xf]
        %v840 = vld [vmem:[%s833 + $0x14] sm:$0xf]
        %v841 = vld [vmem:[%s833 + $0x18] sm:$0xf]
        %v842 = vld [vmem:[%s833 + $0x1c] sm:$0xf]
        %v843 = vld [vmem:[%s833 + $0x20] sm:$0xf]
        %v844 = vld [vmem:[%s833 + $0x24] sm:$0xf]
        %v845 = vld [vmem:[%s833 + $0x28] sm:$0xf]
        %v846 = vld [vmem:[%s833 + $0x2c] sm:$0xf]
        %v847 = vld [vmem:[%s833 + $0x30] sm:$0xf]
        %v848 = vld [vmem:[%s833 + $0x34] sm:$0xf]
        %v849 = vld [vmem:[%s833 + $0x38] sm:$0xf]
        %v850 = vld [vmem:[%s833 + $0x3c] sm:$0xf]
        %v851 = vld [vmem:[#allocation2] sm:$0xf]
        %v868 = vunpack.c.l.b16 %v835
        %v869 = vunpack.c.l.b16 %v836
        %v870 = vunpack.c.l.b16 %v837
        %v871 = vunpack.c.l.b16 %v838
        %v872 = vunpack.c.l.b16 %v839
        %v873 = vunpack.c.l.b16 %v840
        %v874 = vunpack.c.l.b16 %v841
        %v875 = vunpack.c.l.b16 %v842
        %v876 = vunpack.c.l.b16 %v843
        %v877 = vunpack.c.l.b16 %v844
        %v878 = vunpack.c.l.b16 %v845
        %v879 = vunpack.c.l.b16 %v846
        %v880 = vunpack.c.l.b16 %v847
        %v881 = vunpack.c.l.b16 %v848
        %v882 = vunpack.c.l.b16 %v849
        %v883 = vunpack.c.l.b16 %v850
        %v884 = vpack.c.b16 %v869, %v868
        %v885 = vpack.c.b16 %v871, %v870
        %v886 = vpack.c.b16 %v873, %v872
        %v887 = vpack.c.b16 %v875, %v874
        %v888 = vpack.c.b16 %v877, %v876
        %v889 = vpack.c.b16 %v879, %v878
        %v890 = vpack.c.b16 %v881, %v880
        %v891 = vpack.c.b16 %v883, %v882
        %vm892 = vcmask 64512
        %v894 = vsel %vm892, %v884, 0
        %v897 = vsel %vm892, %v885, 0
        %v900 = vsel %vm892, %v886, 0
        %v903 = vsel %vm892, %v887, 0
        %v906 = vsel %vm892, %v888, 0
        %v909 = vsel %vm892, %v889, 0
        %v912 = vsel %vm892, %v890, 0
        %v915 = vsel %vm892, %v891, 0
        %vm917 = vcmask 1043456
        %v919 = vsel %vm917, %v851, 0
        %921 = vmatprep.subr.bf16.mxu0 0
        %922 = vmatpush1.bf16.msra.mxu0 %v919
        %923 = vmatprep.subr.bf16.mxu0 0
        %924 = vmatpush1.bf16.msra.mxu0 0
        %925 = vmatprep.subr.bf16.mxu0 0
        %926 = vmatpush1.bf16.msra.mxu0 0
        %927 = vmatprep.subr.bf16.mxu0 0
        %928 = vmatpush1.bf16.msra.mxu0 0
        %929 = vmatprep.subr.bf16.mxu0 0
        %930 = vmatpush1.bf16.msra.mxu0 0
        %931 = vmatprep.subr.bf16.mxu0 0
        %932 = vmatpush1.bf16.msra.mxu0 0
        %933 = vmatprep.subr.bf16.mxu0 0
        %934 = vmatpush1.bf16.msra.mxu0 0
        %935 = vmatprep.subr.bf16.mxu0 0
        %936 = vmatpush1.bf16.msra.mxu0 0
        %937 = vmatprep.subr.bf16.mxu0 0
        %938 = vmatpush1.bf16.msra.mxu0 0
        %939 = vmatprep.subr.bf16.mxu0 0
        %940 = vmatpush1.bf16.msra.mxu0 0
        %941 = vmatprep.subr.bf16.mxu0 0
        %942 = vmatpush1.bf16.msra.mxu0 0
        %943 = vmatprep.subr.bf16.mxu0 0
        %944 = vmatpush1.bf16.msra.mxu0 0
        %945 = vmatprep.subr.bf16.mxu0 0
        %946 = vmatpush1.bf16.msra.mxu0 0
        %947 = vmatprep.subr.bf16.mxu0 0
        %948 = vmatpush1.bf16.msra.mxu0 0
        %949 = vmatprep.subr.bf16.mxu0 0
        %950 = vmatpush1.bf16.msra.mxu0 0
        %951 = vmatprep.subr.bf16.mxu0 0
        %952 = vmatpush1.bf16.msra.mxu0 0
        %953 = vmatprep.mubr.bf16.mxu0 0
        %954 = vmatmul.mubr.bf16.gmra.mrb[0].mxu0 %v894
        %v955 = vpop.f32.mrb[0].mxu0
        %v956 = vadd.f32 0.0, %v955
        %v957 = vpop.f32.mrb[0].mxu0
        %v958 = vpop.f32.mrb[0].mxu0
        %v959 = vadd.f32 0.0, %v958
        %v960 = vpop.f32.mrb[0].mxu0
        %961 = vmatprep.mubr.bf16.mxu0 0
        %962 = vmatmul.mubr.bf16.gmra.mrb[0].mxu0 %v897
        %v963 = vpop.f32.mrb[0].mxu0
        %v964 = vadd.f32 0.0, %v963
        %v965 = vpop.f32.mrb[0].mxu0
        %v966 = vpop.f32.mrb[0].mxu0
        %v967 = vadd.f32 0.0, %v966
        %v968 = vpop.f32.mrb[0].mxu0
        %969 = vmatprep.mubr.bf16.mxu0 0
        %970 = vmatmul.mubr.bf16.gmra.mrb[0].mxu0 %v900
        %v971 = vpop.f32.mrb[0].mxu0
        %v972 = vadd.f32 0.0, %v971
        %v973 = vpop.f32.mrb[0].mxu0
        %v974 = vpop.f32.mrb[0].mxu0
        %v975 = vadd.f32 0.0, %v974
        %v976 = vpop.f32.mrb[0].mxu0
        %977 = vmatprep.mubr.bf16.mxu0 0
        %978 = vmatmul.mubr.bf16.gmra.mrb[0].mxu0 %v903
        %v979 = vpop.f32.mrb[0].mxu0
        %v980 = vadd.f32 0.0, %v979
        %v981 = vpop.f32.mrb[0].mxu0
        %v982 = vpop.f32.mrb[0].mxu0
        %v983 = vadd.f32 0.0, %v982
        %v984 = vpop.f32.mrb[0].mxu0
        %985 = vmatprep.mubr.bf16.mxu0 0
        %986 = vmatmul.mubr.bf16.gmra.mrb[0].mxu0 %v906
        %v987 = vpop.f32.mrb[0].mxu0
        %v988 = vadd.f32 0.0, %v987
        %v989 = vpop.f32.mrb[0].mxu0
        %v990 = vpop.f32.mrb[0].mxu0
        %v991 = vadd.f32 0.0, %v990
        %v992 = vpop.f32.mrb[0].mxu0
        %993 = vmatprep.mubr.bf16.mxu0 0
        %994 = vmatmul.mubr.bf16.gmra.mrb[0].mxu0 %v909
        %v995 = vpop.f32.mrb[0].mxu0
        %v996 = vadd.f32 0.0, %v995
        %v997 = vpop.f32.mrb[0].mxu0
        %v998 = vpop.f32.mrb[0].mxu0
        %v999 = vadd.f32 0.0, %v998
        %v1000 = vpop.f32.mrb[0].mxu0
        %1001 = vmatprep.mubr.bf16.mxu0 0
        %1002 = vmatmul.mubr.bf16.gmra.mrb[0].mxu0 %v912
        %v1003 = vpop.f32.mrb[0].mxu0
        %v1004 = vadd.f32 0.0, %v1003
        %v1005 = vpop.f32.mrb[0].mxu0
        %v1006 = vpop.f32.mrb[0].mxu0
        %v1007 = vadd.f32 0.0, %v1006
        %v1008 = vpop.f32.mrb[0].mxu0
        %1009 = vmatprep.mubr.bf16.mxu0 0
        %1010 = vmatmul.mubr.bf16.gmra.mrb[0].mxu0 %v915
        %v1011 = vpop.f32.mrb[0].mxu0
        %v1012 = vadd.f32 0.0, %v1011
        %v1013 = vpop.f32.mrb[0].mxu0
        %v1014 = vpop.f32.mrb[0].mxu0
        %v1015 = vadd.f32 0.0, %v1014
        %v1016 = vpop.f32.mrb[0].mxu0
        %1017 = vdwg.mxu0
        %v1018 = vld [vmem:[#allocation5] sm:$0x1]
        %v1020 = vlaneseq
        %v1021 = vshrl.u32 %v1020, 7
        %v1022 = vsub.s32 0, %v1021
        %v1023 = vrot.slane %v1018, %v1022
        %v1025 = vmul.f32 %v956, %v1023
        %v1026 = vmul.f32 %v959, %v1023
        %v1027 = vmul.f32 %v964, %v1023
        %v1028 = vmul.f32 %v967, %v1023
        %v1029 = vmul.f32 %v972, %v1023
        %v1030 = vmul.f32 %v975, %v1023
        %v1031 = vmul.f32 %v980, %v1023
        %v1032 = vmul.f32 %v983, %v1023
        %v1033 = vmul.f32 %v988, %v1023
        %v1034 = vmul.f32 %v991, %v1023
        %v1035 = vmul.f32 %v996, %v1023
        %v1036 = vmul.f32 %v999, %v1023
        %v1037 = vmul.f32 %v1004, %v1023
        %v1038 = vmul.f32 %v1007, %v1023
        %v1039 = vmul.f32 %v1012, %v1023
        %v1040 = vmul.f32 %v1015, %v1023
        %v1041 = vld [vmem:[#allocation7] sm:$0x1]
        %v1043 = vlaneseq
        %v1044 = vshrl.u32 %v1043, 7
        %v1045 = vsub.s32 0, %v1044
        %v1046 = vrot.slane %v1041, %v1045
        %v1048 = vadd.f32 %v1025, %v1046
        %v1049 = vadd.f32 %v1026, %v1046
        %v1050 = vadd.f32 %v1027, %v1046
        %v1051 = vadd.f32 %v1028, %v1046
        %v1052 = vadd.f32 %v1029, %v1046
        %v1053 = vadd.f32 %v1030, %v1046
        %v1054 = vadd.f32 %v1031, %v1046
        %v1055 = vadd.f32 %v1032, %v1046
        %v1056 = vadd.f32 %v1033, %v1046
        %v1057 = vadd.f32 %v1034, %v1046
        %v1058 = vadd.f32 %v1035, %v1046
        %v1059 = vadd.f32 %v1036, %v1046
        %v1060 = vadd.f32 %v1037, %v1046
        %v1061 = vadd.f32 %v1038, %v1046
        %v1062 = vadd.f32 %v1039, %v1046
        %v1063 = vadd.f32 %v1040, %v1046
        %v1064 = vmax.f32 %v1048, 0.0
        %v1065 = vmax.f32 %v1049, 0.0
        %v1066 = vmax.f32 %v1050, 0.0
        %v1067 = vmax.f32 %v1051, 0.0
        %v1068 = vmax.f32 %v1052, 0.0
        %v1069 = vmax.f32 %v1053, 0.0
        %v1070 = vmax.f32 %v1054, 0.0
        %v1071 = vmax.f32 %v1055, 0.0
        %v1072 = vmax.f32 %v1056, 0.0
        %v1073 = vmax.f32 %v1057, 0.0
        %v1074 = vmax.f32 %v1058, 0.0
        %v1075 = vmax.f32 %v1059, 0.0
        %v1076 = vmax.f32 %v1060, 0.0
        %v1077 = vmax.f32 %v1061, 0.0
        %v1078 = vmax.f32 %v1062, 0.0
        %v1079 = vmax.f32 %v1063, 0.0
        %v1080 = vpack.c.bf16 %v1065, %v1064
        %v1081 = vpack.c.bf16 %v1067, %v1066
        %v1082 = vpack.c.bf16 %v1069, %v1068
        %v1083 = vpack.c.bf16 %v1071, %v1070
        %v1084 = vpack.c.bf16 %v1073, %v1072
        %v1085 = vpack.c.bf16 %v1075, %v1074
        %v1086 = vpack.c.bf16 %v1077, %v1076
        %v1087 = vpack.c.bf16 %v1079, %v1078
        %v1088 = vld [vmem:[#allocation8] sm:$0xf]
        %v1089 = vld [vmem:[#allocation8 + $0x4] sm:$0xf]
        %v1090 = vld [vmem:[#allocation8 + $0x8] sm:$0xf]
        %v1091 = vld [vmem:[#allocation8 + $0xc] sm:$0xf]
        %v1092 = vld [vmem:[#allocation8 + $0x10] sm:$0xf]
        %v1093 = vld [vmem:[#allocation8 + $0x14] sm:$0xf]
        %v1094 = vld [vmem:[#allocation8 + $0x18] sm:$0xf]
        %v1095 = vld [vmem:[#allocation8 + $0x1c] sm:$0xf]
        %v1104 = vunpack.c.l.b16 %v1088
        %v1105 = vunpack.c.l.b16 %v1089
        %v1106 = vunpack.c.l.b16 %v1090
        %v1107 = vunpack.c.l.b16 %v1091
        %v1108 = vunpack.c.l.b16 %v1092
        %v1109 = vunpack.c.l.b16 %v1093
        %v1110 = vunpack.c.l.b16 %v1094
        %v1111 = vunpack.c.l.b16 %v1095
        %v1112 = vpack.c.b16 %v1105, %v1104
        %v1113 = vpack.c.b16 %v1107, %v1106
        %v1114 = vpack.c.b16 %v1109, %v1108
        %v1115 = vpack.c.b16 %v1111, %v1110
        %vm1120 = vcmask 523264
        %v1122 = vsel %vm1120, %v1080, 0
        %v1125 = vsel %vm1120, %v1081, 0
        %v1128 = vsel %vm1120, %v1082, 0
        %v1131 = vsel %vm1120, %v1083, 0
        %v1134 = vsel %vm1120, %v1084, 0
        %v1137 = vsel %vm1120, %v1085, 0
        %v1140 = vsel %vm1120, %v1086, 0
        %v1143 = vsel %vm1120, %v1087, 0
        %1145 = vmatprep.subr.bf16.mxu0 0
        %1146 = vmatpush1.bf16.msra.mxu0 %v1112
        %1147 = vmatprep.subr.bf16.mxu0 0
        %1148 = vmatpush1.bf16.msra.mxu0 %v1113
        %1149 = vmatprep.subr.bf16.mxu0 0
        %1150 = vmatpush1.bf16.msra.mxu0 %v1114
        %1151 = vmatprep.subr.bf16.mxu0 0
        %1152 = vmatpush1.bf16.msra.mxu0 %v1115
        %1153 = vmatprep.subr.bf16.mxu0 0
        %1154 = vmatpush1.bf16.msra.mxu0 0
        %1155 = vmatprep.subr.bf16.mxu0 0
        %1156 = vmatpush1.bf16.msra.mxu0 0
        %1157 = vmatprep.subr.bf16.mxu0 0
        %1158 = vmatpush1.bf16.msra.mxu0 0
        %1159 = vmatprep.subr.bf16.mxu0 0
        %1160 = vmatpush1.bf16.msra.mxu0 0
        %1161 = vmatprep.subr.bf16.mxu0 0
        %1162 = vmatpush1.bf16.msra.mxu0 0
        %1163 = vmatprep.subr.bf16.mxu0 0
        %1164 = vmatpush1.bf16.msra.mxu0 0
        %1165 = vmatprep.subr.bf16.mxu0 0
        %1166 = vmatpush1.bf16.msra.mxu0 0
        %1167 = vmatprep.subr.bf16.mxu0 0
        %1168 = vmatpush1.bf16.msra.mxu0 0
        %1169 = vmatprep.subr.bf16.mxu0 0
        %1170 = vmatpush1.bf16.msra.mxu0 0
        %1171 = vmatprep.subr.bf16.mxu0 0
        %1172 = vmatpush1.bf16.msra.mxu0 0
        %1173 = vmatprep.subr.bf16.mxu0 0
        %1174 = vmatpush1.bf16.msra.mxu0 0
        %1175 = vmatprep.subr.bf16.mxu0 0
        %1176 = vmatpush1.bf16.msra.mxu0 0
        %1177 = vmatprep.mubr.bf16.mxu0 0
        %1178 = vmatmul.mubr.bf16.gmra.mrb[0].mxu0 %v1122
        %v1179 = vpop.f32.mrb[0].mxu0
        %v1180 = vadd.f32 0.0, %v1179
        %v1181 = vpop.f32.mrb[0].mxu0
        %v1182 = vpop.f32.mrb[0].mxu0
        %v1183 = vadd.f32 0.0, %v1182
        %v1184 = vpop.f32.mrb[0].mxu0
        %1185 = vmatprep.mubr.bf16.mxu0 0
        %1186 = vmatmul.mubr.bf16.gmra.mrb[0].mxu0 %v1125
        %v1187 = vpop.f32.mrb[0].mxu0
        %v1188 = vadd.f32 0.0, %v1187
        %v1189 = vpop.f32.mrb[0].mxu0
        %v1190 = vpop.f32.mrb[0].mxu0
        %v1191 = vadd.f32 0.0, %v1190
        %v1192 = vpop.f32.mrb[0].mxu0
        %1193 = vmatprep.mubr.bf16.mxu0 0
        %1194 = vmatmul.mubr.bf16.gmra.mrb[0].mxu0 %v1128
        %v1195 = vpop.f32.mrb[0].mxu0
        %v1196 = vadd.f32 0.0, %v1195
        %v1197 = vpop.f32.mrb[0].mxu0
        %v1198 = vpop.f32.mrb[0].mxu0
        %v1199 = vadd.f32 0.0, %v1198
        %v1200 = vpop.f32.mrb[0].mxu0
        %1201 = vmatprep.mubr.bf16.mxu0 0
        %1202 = vmatmul.mubr.bf16.gmra.mrb[0].mxu0 %v1131
        %v1203 = vpop.f32.mrb[0].mxu0
        %v1204 = vadd.f32 0.0, %v1203
        %v1205 = vpop.f32.mrb[0].mxu0
        %v1206 = vpop.f32.mrb[0].mxu0
        %v1207 = vadd.f32 0.0, %v1206
        %v1208 = vpop.f32.mrb[0].mxu0
        %1209 = vmatprep.mubr.bf16.mxu0 0
        %1210 = vmatmul.mubr.bf16.gmra.mrb[0].mxu0 %v1134
        %v1211 = vpop.f32.mrb[0].mxu0
        %v1212 = vadd.f32 0.0, %v1211
        %v1213 = vpop.f32.mrb[0].mxu0
        %v1214 = vpop.f32.mrb[0].mxu0
        %v1215 = vadd.f32 0.0, %v1214
        %v1216 = vpop.f32.mrb[0].mxu0
        %1217 = vmatprep.mubr.bf16.mxu0 0
        %1218 = vmatmul.mubr.bf16.gmra.mrb[0].mxu0 %v1137
        %v1219 = vpop.f32.mrb[0].mxu0
        %v1220 = vadd.f32 0.0, %v1219
        %v1221 = vpop.f32.mrb[0].mxu0
        %v1222 = vpop.f32.mrb[0].mxu0
        %v1223 = vadd.f32 0.0, %v1222
        %v1224 = vpop.f32.mrb[0].mxu0
        %1225 = vmatprep.mubr.bf16.mxu0 0
        %1226 = vmatmul.mubr.bf16.gmra.mrb[0].mxu0 %v1140
        %v1227 = vpop.f32.mrb[0].mxu0
        %v1228 = vadd.f32 0.0, %v1227
        %v1229 = vpop.f32.mrb[0].mxu0
        %v1230 = vpop.f32.mrb[0].mxu0
        %v1231 = vadd.f32 0.0, %v1230
        %v1232 = vpop.f32.mrb[0].mxu0
        %1233 = vmatprep.mubr.bf16.mxu0 0
        %1234 = vmatmul.mubr.bf16.gmra.mrb[0].mxu0 %v1143
        %v1235 = vpop.f32.mrb[0].mxu0
        %v1236 = vadd.f32 0.0, %v1235
        %v1237 = vpop.f32.mrb[0].mxu0
        %v1238 = vpop.f32.mrb[0].mxu0
        %v1239 = vadd.f32 0.0, %v1238
        %v1240 = vpop.f32.mrb[0].mxu0
        %1241 = vdwg.mxu0
        %v1242 = vld [vmem:[#allocation10] sm:$0x1]
        %v1244 = vlaneseq
        %v1245 = vshrl.u32 %v1244, 7
        %v1246 = vsub.s32 0, %v1245
        %v1247 = vrot.slane %v1242, %v1246
        %v1249 = vmul.f32 %v1180, %v1247
        %v1250 = vmul.f32 %v1183, %v1247
        %v1251 = vmul.f32 %v1188, %v1247
        %v1252 = vmul.f32 %v1191, %v1247
        %v1253 = vmul.f32 %v1196, %v1247
        %v1254 = vmul.f32 %v1199, %v1247
        %v1255 = vmul.f32 %v1204, %v1247
        %v1256 = vmul.f32 %v1207, %v1247
        %v1257 = vmul.f32 %v1212, %v1247
        %v1258 = vmul.f32 %v1215, %v1247
        %v1259 = vmul.f32 %v1220, %v1247
        %v1260 = vmul.f32 %v1223, %v1247
        %v1261 = vmul.f32 %v1228, %v1247
        %v1262 = vmul.f32 %v1231, %v1247
        %v1263 = vmul.f32 %v1236, %v1247
        %v1264 = vmul.f32 %v1239, %v1247
        %v1265 = vld [vmem:[#allocation11] sm:$0x1]
        %v1267 = vlaneseq
        %v1268 = vshrl.u32 %v1267, 7
        %v1269 = vsub.s32 0, %v1268
        %v1270 = vrot.slane %v1265, %v1269
        %v1272 = vadd.f32 %v1249, %v1270
        %v1273 = vadd.f32 %v1250, %v1270
        %v1274 = vadd.f32 %v1251, %v1270
        %v1275 = vadd.f32 %v1252, %v1270
        %v1276 = vadd.f32 %v1253, %v1270
        %v1277 = vadd.f32 %v1254, %v1270
        %v1278 = vadd.f32 %v1255, %v1270
        %v1279 = vadd.f32 %v1256, %v1270
        %v1280 = vadd.f32 %v1257, %v1270
        %v1281 = vadd.f32 %v1258, %v1270
        %v1282 = vadd.f32 %v1259, %v1270
        %v1283 = vadd.f32 %v1260, %v1270
        %v1284 = vadd.f32 %v1261, %v1270
        %v1285 = vadd.f32 %v1262, %v1270
        %v1286 = vadd.f32 %v1263, %v1270
        %v1287 = vadd.f32 %v1264, %v1270
        %v1288 = vmax.f32 %v1272, 0.0
        %v1289 = vmax.f32 %v1273, 0.0
        %v1290 = vmax.f32 %v1274, 0.0
        %v1291 = vmax.f32 %v1275, 0.0
        %v1292 = vmax.f32 %v1276, 0.0
        %v1293 = vmax.f32 %v1277, 0.0
        %v1294 = vmax.f32 %v1278, 0.0
        %v1295 = vmax.f32 %v1279, 0.0
        %v1296 = vmax.f32 %v1280, 0.0
        %v1297 = vmax.f32 %v1281, 0.0
        %v1298 = vmax.f32 %v1282, 0.0
        %v1299 = vmax.f32 %v1283, 0.0
        %v1300 = vmax.f32 %v1284, 0.0
        %v1301 = vmax.f32 %v1285, 0.0
        %v1302 = vmax.f32 %v1286, 0.0
        %v1303 = vmax.f32 %v1287, 0.0
        %v1304 = vpack.c.bf16 %v1289, %v1288
        %v1305 = vpack.c.bf16 %v1291, %v1290
        %v1306 = vpack.c.bf16 %v1293, %v1292
        %v1307 = vpack.c.bf16 %v1295, %v1294
        %v1308 = vpack.c.bf16 %v1297, %v1296
        %v1309 = vpack.c.bf16 %v1299, %v1298
        %v1310 = vpack.c.bf16 %v1301, %v1300
        %v1311 = vpack.c.bf16 %v1303, %v1302
        %v1312 = vld [vmem:[#allocation13] sm:$0xf]
        %v1313 = vld [vmem:[#allocation13 + $0x4] sm:$0xf]
        %v1314 = vld [vmem:[#allocation13 + $0x8] sm:$0xf]
        %v1315 = vld [vmem:[#allocation13 + $0xc] sm:$0xf]
        %v1316 = vld [vmem:[#allocation13 + $0x10] sm:$0xf]
        %v1317 = vld [vmem:[#allocation13 + $0x14] sm:$0xf]
        %v1318 = vld [vmem:[#allocation13 + $0x18] sm:$0xf]
        %v1319 = vld [vmem:[#allocation13 + $0x1c] sm:$0xf]
        %v1328 = vunpack.c.l.b16 %v1312
        %v1329 = vunpack.c.l.b16 %v1313
        %v1330 = vunpack.c.l.b16 %v1314
        %v1331 = vunpack.c.l.b16 %v1315
        %v1332 = vunpack.c.l.b16 %v1316
        %v1333 = vunpack.c.l.b16 %v1317
        %v1334 = vunpack.c.l.b16 %v1318
        %v1335 = vunpack.c.l.b16 %v1319
        %v1336 = vpack.c.b16 %v1329, %v1328
        %v1337 = vpack.c.b16 %v1331, %v1330
        %v1338 = vpack.c.b16 %v1333, %v1332
        %v1339 = vpack.c.b16 %v1335, %v1334
        %v1345 = vsel %vm1120, %v1304, 0
        %v1348 = vsel %vm1120, %v1305, 0
        %v1351 = vsel %vm1120, %v1306, 0
        %v1354 = vsel %vm1120, %v1307, 0
        %v1357 = vsel %vm1120, %v1308, 0
        %v1360 = vsel %vm1120, %v1309, 0
        %v1363 = vsel %vm1120, %v1310, 0
        %v1366 = vsel %vm1120, %v1311, 0
        %1368 = vmatprep.subr.bf16.mxu0 0
        %1369 = vmatpush1.bf16.msra.mxu0 %v1336
        %1370 = vmatprep.subr.bf16.mxu0 0
        %1371 = vmatpush1.bf16.msra.mxu0 %v1337
        %1372 = vmatprep.subr.bf16.mxu0 0
        %1373 = vmatpush1.bf16.msra.mxu0 %v1338
        %1374 = vmatprep.subr.bf16.mxu0 0
        %1375 = vmatpush1.bf16.msra.mxu0 %v1339
        %1376 = vmatprep.subr.bf16.mxu0 0
        %1377 = vmatpush1.bf16.msra.mxu0 0
        %1378 = vmatprep.subr.bf16.mxu0 0
        %1379 = vmatpush1.bf16.msra.mxu0 0
        %1380 = vmatprep.subr.bf16.mxu0 0
        %1381 = vmatpush1.bf16.msra.mxu0 0
        %1382 = vmatprep.subr.bf16.mxu0 0
        %1383 = vmatpush1.bf16.msra.mxu0 0
        %1384 = vmatprep.subr.bf16.mxu0 0
        %1385 = vmatpush1.bf16.msra.mxu0 0
        %1386 = vmatprep.subr.bf16.mxu0 0
        %1387 = vmatpush1.bf16.msra.mxu0 0
        %1388 = vmatprep.subr.bf16.mxu0 0
        %1389 = vmatpush1.bf16.msra.mxu0 0
        %1390 = vmatprep.subr.bf16.mxu0 0
        %1391 = vmatpush1.bf16.msra.mxu0 0
        %1392 = vmatprep.subr.bf16.mxu0 0
        %1393 = vmatpush1.bf16.msra.mxu0 0
        %1394 = vmatprep.subr.bf16.mxu0 0
        %1395 = vmatpush1.bf16.msra.mxu0 0
        %1396 = vmatprep.subr.bf16.mxu0 0
        %1397 = vmatpush1.bf16.msra.mxu0 0
        %1398 = vmatprep.subr.bf16.mxu0 0
        %1399 = vmatpush1.bf16.msra.mxu0 0
        %1400 = vmatprep.mubr.bf16.mxu0 0
        %1401 = vmatmul.mubr.bf16.gmra.mrb[0].mxu0 %v1345
        %v1402 = vpop.f32.mrb[0].mxu0
        %v1403 = vadd.f32 0.0, %v1402
        %v1404 = vpop.f32.mrb[0].mxu0
        %v1405 = vpop.f32.mrb[0].mxu0
        %v1406 = vadd.f32 0.0, %v1405
        %v1407 = vpop.f32.mrb[0].mxu0
        %1408 = vmatprep.mubr.bf16.mxu0 0
        %1409 = vmatmul.mubr.bf16.gmra.mrb[0].mxu0 %v1348
        %v1410 = vpop.f32.mrb[0].mxu0
        %v1411 = vadd.f32 0.0, %v1410
        %v1412 = vpop.f32.mrb[0].mxu0
        %v1413 = vpop.f32.mrb[0].mxu0
        %v1414 = vadd.f32 0.0, %v1413
        %v1415 = vpop.f32.mrb[0].mxu0
        %1416 = vmatprep.mubr.bf16.mxu0 0
        %1417 = vmatmul.mubr.bf16.gmra.mrb[0].mxu0 %v1351
        %v1418 = vpop.f32.mrb[0].mxu0
        %v1419 = vadd.f32 0.0, %v1418
        %v1420 = vpop.f32.mrb[0].mxu0
        %v1421 = vpop.f32.mrb[0].mxu0
        %v1422 = vadd.f32 0.0, %v1421
        %v1423 = vpop.f32.mrb[0].mxu0
        %1424 = vmatprep.mubr.bf16.mxu0 0
        %1425 = vmatmul.mubr.bf16.gmra.mrb[0].mxu0 %v1354
        %v1426 = vpop.f32.mrb[0].mxu0
        %v1427 = vadd.f32 0.0, %v1426
        %v1428 = vpop.f32.mrb[0].mxu0
        %v1429 = vpop.f32.mrb[0].mxu0
        %v1430 = vadd.f32 0.0, %v1429
        %v1431 = vpop.f32.mrb[0].mxu0
        %1432 = vmatprep.mubr.bf16.mxu0 0
        %1433 = vmatmul.mubr.bf16.gmra.mrb[0].mxu0 %v1357
        %v1434 = vpop.f32.mrb[0].mxu0
        %v1435 = vadd.f32 0.0, %v1434
        %v1436 = vpop.f32.mrb[0].mxu0
        %v1437 = vpop.f32.mrb[0].mxu0
        %v1438 = vadd.f32 0.0, %v1437
        %v1439 = vpop.f32.mrb[0].mxu0
        %1440 = vmatprep.mubr.bf16.mxu0 0
        %1441 = vmatmul.mubr.bf16.gmra.mrb[0].mxu0 %v1360
        %v1442 = vpop.f32.mrb[0].mxu0
        %v1443 = vadd.f32 0.0, %v1442
        %v1444 = vpop.f32.mrb[0].mxu0
        %v1445 = vpop.f32.mrb[0].mxu0
        %v1446 = vadd.f32 0.0, %v1445
        %v1447 = vpop.f32.mrb[0].mxu0
        %1448 = vmatprep.mubr.bf16.mxu0 0
        %1449 = vmatmul.mubr.bf16.gmra.mrb[0].mxu0 %v1363
        %v1450 = vpop.f32.mrb[0].mxu0
        %v1451 = vadd.f32 0.0, %v1450
        %v1452 = vpop.f32.mrb[0].mxu0
        %v1453 = vpop.f32.mrb[0].mxu0
        %v1454 = vadd.f32 0.0, %v1453
        %v1455 = vpop.f32.mrb[0].mxu0
        %1456 = vmatprep.mubr.bf16.mxu0 0
        %1457 = vmatmul.mubr.bf16.gmra.mrb[0].mxu0 %v1366
        %v1458 = vpop.f32.mrb[0].mxu0
        %v1459 = vadd.f32 0.0, %v1458
        %v1460 = vpop.f32.mrb[0].mxu0
        %v1461 = vpop.f32.mrb[0].mxu0
        %v1462 = vadd.f32 0.0, %v1461
        %v1463 = vpop.f32.mrb[0].mxu0
        %1464 = vdwg.mxu0
        %v1465 = vld [vmem:[#allocation14] sm:$0x1]
        %v1467 = vlaneseq
        %v1468 = vshrl.u32 %v1467, 7
        %v1469 = vsub.s32 0, %v1468
        %v1470 = vrot.slane %v1465, %v1469
        %v1472 = vmul.f32 %v1403, %v1470
        %v1473 = vmul.f32 %v1406, %v1470
        %v1474 = vmul.f32 %v1411, %v1470
        %v1475 = vmul.f32 %v1414, %v1470
        %v1476 = vmul.f32 %v1419, %v1470
        %v1477 = vmul.f32 %v1422, %v1470
        %v1478 = vmul.f32 %v1427, %v1470
        %v1479 = vmul.f32 %v1430, %v1470
        %v1480 = vmul.f32 %v1435, %v1470
        %v1481 = vmul.f32 %v1438, %v1470
        %v1482 = vmul.f32 %v1443, %v1470
        %v1483 = vmul.f32 %v1446, %v1470
        %v1484 = vmul.f32 %v1451, %v1470
        %v1485 = vmul.f32 %v1454, %v1470
        %v1486 = vmul.f32 %v1459, %v1470
        %v1487 = vmul.f32 %v1462, %v1470
        %v1488 = vld [vmem:[#allocation16] sm:$0x1]
        %v1490 = vlaneseq
        %v1491 = vshrl.u32 %v1490, 7
        %v1492 = vsub.s32 0, %v1491
        %v1493 = vrot.slane %v1488, %v1492
        %v1495 = vadd.f32 %v1472, %v1493
        %v1496 = vadd.f32 %v1473, %v1493
        %v1497 = vadd.f32 %v1474, %v1493
        %v1498 = vadd.f32 %v1475, %v1493
        %v1499 = vadd.f32 %v1476, %v1493
        %v1500 = vadd.f32 %v1477, %v1493
        %v1501 = vadd.f32 %v1478, %v1493
        %v1502 = vadd.f32 %v1479, %v1493
        %v1503 = vadd.f32 %v1480, %v1493
        %v1504 = vadd.f32 %v1481, %v1493
        %v1505 = vadd.f32 %v1482, %v1493
        %v1506 = vadd.f32 %v1483, %v1493
        %v1507 = vadd.f32 %v1484, %v1493
        %v1508 = vadd.f32 %v1485, %v1493
        %v1509 = vadd.f32 %v1486, %v1493
        %v1510 = vadd.f32 %v1487, %v1493
        %v1511 = vmax.f32 %v1495, %v1499
        %v1512 = vmax.f32 %v1496, %v1500
        %v1513 = vmax.f32 %v1497, %v1501
        %v1514 = vmax.f32 %v1498, %v1502
        %v1515 = vmax.f32 %v1511, %v1503
        %v1516 = vmax.f32 %v1512, %v1504
        %v1517 = vmax.f32 %v1513, %v1505
        %v1518 = vmax.f32 %v1514, %v1506
        %v1519 = vmax.f32 %v1515, %v1507
        %v1520 = vmax.f32 %v1516, %v1508
        %v1521 = vmax.f32 %v1517, %v1509
        %v1522 = vmax.f32 %v1518, %v1510
        %v1523 = vmax.f32 %v1519, %v1520
        %v1524 = vmax.f32 %v1521, %v1522
        %v1525 = vmax.f32 %v1523, %v1524
        %v1526 = vrot.slane %v1525, 4
        %v1527 = vmax.f32 %v1525, %v1526
        %v1528 = vrot.slane %v1527, 2
        %v1529 = vmax.f32 %v1527, %v1528
        %v1530 = vrot.slane %v1529, 1
        %v1531 = vmax.f32 %v1529, %v1530
        %1532 = vst [vmem:[%s821] sm:$0x1] %v1531
        %v1533 = vpack.c.bf16 %v1531, %v1531
        %v1534 = vld [vmem:[#allocation17] sm:$0xff]
        %v1535 = vld [vmem:[#allocation17 + $0x8] sm:$0xff]
        %v1536 = vld [vmem:[#allocation17 + $0x10] sm:$0xff]
        %v1537 = vld [vmem:[#allocation17 + $0x18] sm:$0xff]
        %v1538 = vld [vmem:[#allocation17 + $0x20] sm:$0xff]
        %v1539 = vld [vmem:[#allocation17 + $0x28] sm:$0xff]
        %v1540 = vld [vmem:[#allocation17 + $0x30] sm:$0xff]
        %v1541 = vld [vmem:[#allocation17 + $0x38] sm:$0xff]
        %v1542 = vld [vmem:[#allocation17 + $0x40] sm:$0xff]
        %v1543 = vld [vmem:[#allocation17 + $0x48] sm:$0xff]
        %v1544 = vld [vmem:[#allocation17 + $0x50] sm:$0xff]
        %v1545 = vld [vmem:[#allocation17 + $0x58] sm:$0xff]
        %v1546 = vld [vmem:[#allocation17 + $0x60] sm:$0xff]
        %v1547 = vld [vmem:[#allocation17 + $0x68] sm:$0xff]
        %v1548 = vld [vmem:[#allocation17 + $0x70] sm:$0xff]
        %v1549 = vld [vmem:[#allocation17 + $0x78] sm:$0xff]
        %v1566 = vunpack.c.l.b16 %v1534
        %v1567 = vunpack.c.h.b16 %v1534
        %v1568 = vunpack.c.l.b16 %v1535
        %v1569 = vunpack.c.h.b16 %v1535
        %v1570 = vunpack.c.l.b16 %v1536
        %v1571 = vunpack.c.h.b16 %v1536
        %v1572 = vunpack.c.l.b16 %v1537
        %v1573 = vunpack.c.h.b16 %v1537
        %v1574 = vunpack.c.l.b16 %v1538
        %v1575 = vunpack.c.h.b16 %v1538
        %v1576 = vunpack.c.l.b16 %v1539
        %v1577 = vunpack.c.h.b16 %v1539
        %v1578 = vunpack.c.l.b16 %v1540
        %v1579 = vunpack.c.h.b16 %v1540
        %v1580 = vunpack.c.l.b16 %v1541
        %v1581 = vunpack.c.h.b16 %v1541
        %v1582 = vunpack.c.l.b16 %v1542
        %v1583 = vunpack.c.h.b16 %v1542
        %v1584 = vunpack.c.l.b16 %v1543
        %v1585 = vunpack.c.h.b16 %v1543
        %v1586 = vunpack.c.l.b16 %v1544
        %v1587 = vunpack.c.h.b16 %v1544
        %v1588 = vunpack.c.l.b16 %v1545
        %v1589 = vunpack.c.h.b16 %v1545
        %v1590 = vunpack.c.l.b16 %v1546
        %v1591 = vunpack.c.h.b16 %v1546
        %v1592 = vunpack.c.l.b16 %v1547
        %v1593 = vunpack.c.h.b16 %v1547
        %v1594 = vunpack.c.l.b16 %v1548
        %v1595 = vunpack.c.h.b16 %v1548
        %v1596 = vunpack.c.l.b16 %v1549
        %v1597 = vunpack.c.h.b16 %v1549
        %v1598 = vpack.c.b16 %v1568, %v1566
        %v1599 = vpack.c.b16 %v1569, %v1567
        %v1600 = vpack.c.b16 %v1572, %v1570
        %v1601 = vpack.c.b16 %v1573, %v1571
        %v1602 = vpack.c.b16 %v1576, %v1574
        %v1603 = vpack.c.b16 %v1577, %v1575
        %v1604 = vpack.c.b16 %v1580, %v1578
        %v1605 = vpack.c.b16 %v1581, %v1579
        %v1606 = vpack.c.b16 %v1584, %v1582
        %v1607 = vpack.c.b16 %v1585, %v1583
        %v1608 = vpack.c.b16 %v1588, %v1586
        %v1609 = vpack.c.b16 %v1589, %v1587
        %v1610 = vpack.c.b16 %v1592, %v1590
        %v1611 = vpack.c.b16 %v1593, %v1591
        %v1612 = vpack.c.b16 %v1596, %v1594
        %v1613 = vpack.c.b16 %v1597, %v1595
        %1630 = vmatprep.subr.bf16.mxu0 %v1599
        %1631 = vmatpush1.bf16.msra.mxu0 %v1598
        %1632 = vmatprep.subr.bf16.mxu0 %v1601
        %1633 = vmatpush1.bf16.msra.mxu0 %v1600
        %1634 = vmatprep.subr.bf16.mxu0 %v1603
        %1635 = vmatpush1.bf16.msra.mxu0 %v1602
        %1636 = vmatprep.subr.bf16.mxu0 %v1605
        %1637 = vmatpush1.bf16.msra.mxu0 %v1604
        %1638 = vmatprep.subr.bf16.mxu0 %v1607
        %1639 = vmatpush1.bf16.msra.mxu0 %v1606
        %1640 = vmatprep.subr.bf16.mxu0 %v1609
        %1641 = vmatpush1.bf16.msra.mxu0 %v1608
        %1642 = vmatprep.subr.bf16.mxu0 %v1611
        %1643 = vmatpush1.bf16.msra.mxu0 %v1610
        %1644 = vmatprep.subr.bf16.mxu0 %v1613
        %1645 = vmatpush1.bf16.msra.mxu0 %v1612
        %1646 = vmatprep.subr.bf16.mxu0 0
        %1647 = vmatpush1.bf16.msra.mxu0 0
        %1648 = vmatprep.subr.bf16.mxu0 0
        %1649 = vmatpush1.bf16.msra.mxu0 0
        %1650 = vmatprep.subr.bf16.mxu0 0
        %1651 = vmatpush1.bf16.msra.mxu0 0
        %1652 = vmatprep.subr.bf16.mxu0 0
        %1653 = vmatpush1.bf16.msra.mxu0 0
        %1654 = vmatprep.subr.bf16.mxu0 0
        %1655 = vmatpush1.bf16.msra.mxu0 0
        %1656 = vmatprep.subr.bf16.mxu0 0
        %1657 = vmatpush1.bf16.msra.mxu0 0
        %1658 = vmatprep.subr.bf16.mxu0 0
        %1659 = vmatpush1.bf16.msra.mxu0 0
        %1660 = vmatprep.subr.bf16.mxu0 0
        %1661 = vmatpush1.bf16.msra.mxu0 0
        %1662 = vmatprep.mubr.bf16.mxu0 0
        %1663 = vmatmul.mubr.bf16.gmra.mrb[0].mxu0 %v1533
        %v1664 = vpop.f32.mrb[0].mxu0
        %v1665 = vadd.f32 0.0, %v1664
        %v1666 = vpop.f32.mrb[0].mxu0
        %v1667 = vadd.f32 0.0, %v1666
        %v1668 = vpop.f32.mrb[0].mxu0
        %v1669 = vpop.f32.mrb[0].mxu0
        %1670 = vdwg.mxu0
        %v1671 = vld [vmem:[#allocation19] sm:$0x3]
        %v1673 = vlaneseq
        %v1674 = vshrl.u32 %v1673, 7
        %v1675 = vsub.s32 0, %v1674
        %v1676 = vrot.slane %v1671, %v1675
        %v1677 = vlaneseq
        %v1678 = vshrl.u32 %v1677, 7
        %v1679 = vsub.s32 1, %v1678
        %v1680 = vrot.slane %v1671, %v1679
        %v1683 = vmul.f32 %v1665, %v1676
        %v1684 = vmul.f32 %v1667, %v1680
        %v1685 = vld [vmem:[#allocation20] sm:$0x3]
        %v1687 = vlaneseq
        %v1688 = vshrl.u32 %v1687, 7
        %v1689 = vsub.s32 0, %v1688
        %v1690 = vrot.slane %v1685, %v1689
        %v1691 = vlaneseq
        %v1692 = vshrl.u32 %v1691, 7
        %v1693 = vsub.s32 1, %v1692
        %v1694 = vrot.slane %v1685, %v1693
        %v1697 = vadd.f32 %v1683, %v1690
        %v1698 = vadd.f32 %v1684, %v1694
        %v1699 = vmax.f32 %v1697, 0.0
        %v1700 = vmax.f32 %v1698, 0.0
        %v1701 = vpack.c.bf16 %v1699, %v1699
        %v1702 = vpack.c.bf16 %v1700, %v1700
        %v1703 = vld [vmem:[#allocation22] sm:$0xff]
        %v1704 = vld [vmem:[#allocation22 + $0x8] sm:$0xff]
        %v1705 = vld [vmem:[#allocation22 + $0x10] sm:$0xff]
        %v1706 = vld [vmem:[#allocation22 + $0x18] sm:$0xff]
        %v1707 = vld [vmem:[#allocation22 + $0x20] sm:$0xff]
        %v1708 = vld [vmem:[#allocation22 + $0x28] sm:$0xff]
        %v1709 = vld [vmem:[#allocation22 + $0x30] sm:$0xff]
        %v1710 = vld [vmem:[#allocation22 + $0x38] sm:$0xff]
        %v1711 = vld [vmem:[#allocation22 + $0x40] sm:$0xff]
        %v1712 = vld [vmem:[#allocation22 + $0x48] sm:$0xff]
        %v1713 = vld [vmem:[#allocation22 + $0x50] sm:$0xff]
        %v1714 = vld [vmem:[#allocation22 + $0x58] sm:$0xff]
        %v1715 = vld [vmem:[#allocation22 + $0x60] sm:$0xff]
        %v1716 = vld [vmem:[#allocation22 + $0x68] sm:$0xff]
        %v1717 = vld [vmem:[#allocation22 + $0x70] sm:$0xff]
        %v1718 = vld [vmem:[#allocation22 + $0x78] sm:$0xff]
        %v1719 = vld [vmem:[#allocation22 + $0x80] sm:$0xff]
        %v1720 = vld [vmem:[#allocation22 + $0x88] sm:$0xff]
        %v1721 = vld [vmem:[#allocation22 + $0x90] sm:$0xff]
        %v1722 = vld [vmem:[#allocation22 + $0x98] sm:$0xff]
        %v1723 = vld [vmem:[#allocation22 + $0xa0] sm:$0xff]
        %v1724 = vld [vmem:[#allocation22 + $0xa8] sm:$0xff]
        %v1725 = vld [vmem:[#allocation22 + $0xb0] sm:$0xff]
        %v1726 = vld [vmem:[#allocation22 + $0xb8] sm:$0xff]
        %v1727 = vld [vmem:[#allocation22 + $0xc0] sm:$0xff]
        %v1728 = vld [vmem:[#allocation22 + $0xc8] sm:$0xff]
        %v1729 = vld [vmem:[#allocation22 + $0xd0] sm:$0xff]
        %v1730 = vld [vmem:[#allocation22 + $0xd8] sm:$0xff]
        %v1731 = vld [vmem:[#allocation22 + $0xe0] sm:$0xff]
        %v1732 = vld [vmem:[#allocation22 + $0xe8] sm:$0xff]
        %v1733 = vld [vmem:[#allocation22 + $0xf0] sm:$0xff]
        %v1734 = vld [vmem:[#allocation22 + $0xf8] sm:$0xff]
        %v1767 = vunpack.c.l.b16 %v1703
        %v1768 = vunpack.c.h.b16 %v1703
        %v1769 = vunpack.c.l.b16 %v1704
        %v1770 = vunpack.c.h.b16 %v1704
        %v1771 = vunpack.c.l.b16 %v1705
        %v1772 = vunpack.c.h.b16 %v1705
        %v1773 = vunpack.c.l.b16 %v1706
        %v1774 = vunpack.c.h.b16 %v1706
        %v1775 = vunpack.c.l.b16 %v1707
        %v1776 = vunpack.c.h.b16 %v1707
        %v1777 = vunpack.c.l.b16 %v1708
        %v1778 = vunpack.c.h.b16 %v1708
        %v1779 = vunpack.c.l.b16 %v1709
        %v1780 = vunpack.c.h.b16 %v1709
        %v1781 = vunpack.c.l.b16 %v1710
        %v1782 = vunpack.c.h.b16 %v1710
        %v1783 = vunpack.c.l.b16 %v1711
        %v1784 = vunpack.c.h.b16 %v1711
        %v1785 = vunpack.c.l.b16 %v1712
        %v1786 = vunpack.c.h.b16 %v1712
        %v1787 = vunpack.c.l.b16 %v1713
        %v1788 = vunpack.c.h.b16 %v1713
        %v1789 = vunpack.c.l.b16 %v1714
        %v1790 = vunpack.c.h.b16 %v1714
        %v1791 = vunpack.c.l.b16 %v1715
        %v1792 = vunpack.c.h.b16 %v1715
        %v1793 = vunpack.c.l.b16 %v1716
        %v1794 = vunpack.c.h.b16 %v1716
        %v1795 = vunpack.c.l.b16 %v1717
        %v1796 = vunpack.c.h.b16 %v1717
        %v1797 = vunpack.c.l.b16 %v1718
        %v1798 = vunpack.c.h.b16 %v1718
        %v1799 = vunpack.c.l.b16 %v1719
        %v1800 = vunpack.c.h.b16 %v1719
        %v1801 = vunpack.c.l.b16 %v1720
        %v1802 = vunpack.c.h.b16 %v1720
        %v1803 = vunpack.c.l.b16 %v1721
        %v1804 = vunpack.c.h.b16 %v1721
        %v1805 = vunpack.c.l.b16 %v1722
        %v1806 = vunpack.c.h.b16 %v1722
        %v1807 = vunpack.c.l.b16 %v1723
        %v1808 = vunpack.c.h.b16 %v1723
        %v1809 = vunpack.c.l.b16 %v1724
        %v1810 = vunpack.c.h.b16 %v1724
        %v1811 = vunpack.c.l.b16 %v1725
        %v1812 = vunpack.c.h.b16 %v1725
        %v1813 = vunpack.c.l.b16 %v1726
        %v1814 = vunpack.c.h.b16 %v1726
        %v1815 = vunpack.c.l.b16 %v1727
        %v1816 = vunpack.c.h.b16 %v1727
        %v1817 = vunpack.c.l.b16 %v1728
        %v1818 = vunpack.c.h.b16 %v1728
        %v1819 = vunpack.c.l.b16 %v1729
        %v1820 = vunpack.c.h.b16 %v1729
        %v1821 = vunpack.c.l.b16 %v1730
        %v1822 = vunpack.c.h.b16 %v1730
        %v1823 = vunpack.c.l.b16 %v1731
        %v1824 = vunpack.c.h.b16 %v1731
        %v1825 = vunpack.c.l.b16 %v1732
        %v1826 = vunpack.c.h.b16 %v1732
        %v1827 = vunpack.c.l.b16 %v1733
        %v1828 = vunpack.c.h.b16 %v1733
        %v1829 = vunpack.c.l.b16 %v1734
        %v1830 = vunpack.c.h.b16 %v1734
        %v1831 = vpack.c.b16 %v1769, %v1767
        %v1832 = vpack.c.b16 %v1770, %v1768
        %v1833 = vpack.c.b16 %v1773, %v1771
        %v1834 = vpack.c.b16 %v1774, %v1772
        %v1835 = vpack.c.b16 %v1777, %v1775
        %v1836 = vpack.c.b16 %v1778, %v1776
        %v1837 = vpack.c.b16 %v1781, %v1779
        %v1838 = vpack.c.b16 %v1782, %v1780
        %v1839 = vpack.c.b16 %v1785, %v1783
        %v1840 = vpack.c.b16 %v1786, %v1784
        %v1841 = vpack.c.b16 %v1789, %v1787
        %v1842 = vpack.c.b16 %v1790, %v1788
        %v1843 = vpack.c.b16 %v1793, %v1791
        %v1844 = vpack.c.b16 %v1794, %v1792
        %v1845 = vpack.c.b16 %v1797, %v1795
        %v1846 = vpack.c.b16 %v1798, %v1796
        %v1847 = vpack.c.b16 %v1801, %v1799
        %v1848 = vpack.c.b16 %v1802, %v1800
        %v1849 = vpack.c.b16 %v1805, %v1803
        %v1850 = vpack.c.b16 %v1806, %v1804
        %v1851 = vpack.c.b16 %v1809, %v1807
        %v1852 = vpack.c.b16 %v1810, %v1808
        %v1853 = vpack.c.b16 %v1813, %v1811
        %v1854 = vpack.c.b16 %v1814, %v1812
        %v1855 = vpack.c.b16 %v1817, %v1815
        %v1856 = vpack.c.b16 %v1818, %v1816
        %v1857 = vpack.c.b16 %v1821, %v1819
        %v1858 = vpack.c.b16 %v1822, %v1820
        %v1859 = vpack.c.b16 %v1825, %v1823
        %v1860 = vpack.c.b16 %v1826, %v1824
        %v1861 = vpack.c.b16 %v1829, %v1827
        %v1862 = vpack.c.b16 %v1830, %v1828
        %1895 = vmatprep.subr.bf16.mxu0 %v1832
        %1896 = vmatpush1.bf16.msra.mxu0 %v1831
        %1897 = vmatprep.subr.bf16.mxu0 %v1834
        %1898 = vmatpush1.bf16.msra.mxu0 %v1833
        %1899 = vmatprep.subr.bf16.mxu0 %v1836
        %1900 = vmatpush1.bf16.msra.mxu0 %v1835
        %1901 = vmatprep.subr.bf16.mxu0 %v1838
        %1902 = vmatpush1.bf16.msra.mxu0 %v1837
        %1903 = vmatprep.subr.bf16.mxu0 %v1840
        %1904 = vmatpush1.bf16.msra.mxu0 %v1839
        %1905 = vmatprep.subr.bf16.mxu0 %v1842
        %1906 = vmatpush1.bf16.msra.mxu0 %v1841
        %1907 = vmatprep.subr.bf16.mxu0 %v1844
        %1908 = vmatpush1.bf16.msra.mxu0 %v1843
        %1909 = vmatprep.subr.bf16.mxu0 %v1846
        %1910 = vmatpush1.bf16.msra.mxu0 %v1845
        %1911 = vmatprep.subr.bf16.mxu0 %v1848
        %1912 = vmatpush1.bf16.msra.mxu0 %v1847
        %1913 = vmatprep.subr.bf16.mxu0 %v1850
        %1914 = vmatpush1.bf16.msra.mxu0 %v1849
        %1915 = vmatprep.subr.bf16.mxu0 %v1852
        %1916 = vmatpush1.bf16.msra.mxu0 %v1851
        %1917 = vmatprep.subr.bf16.mxu0 %v1854
        %1918 = vmatpush1.bf16.msra.mxu0 %v1853
        %1919 = vmatprep.subr.bf16.mxu0 %v1856
        %1920 = vmatpush1.bf16.msra.mxu0 %v1855
        %1921 = vmatprep.subr.bf16.mxu0 %v1858
        %1922 = vmatpush1.bf16.msra.mxu0 %v1857
        %1923 = vmatprep.subr.bf16.mxu0 %v1860
        %1924 = vmatpush1.bf16.msra.mxu0 %v1859
        %1925 = vmatprep.subr.bf16.mxu0 %v1862
        %1926 = vmatpush1.bf16.msra.mxu0 %v1861
        %1927 = vmatprep.mubr.bf16.mxu0 %v1702
        %1928 = vmatmul.mubr.bf16.gmra.mrb[0].mxu0 %v1701
        %v1929 = vpop.f32.mrb[0].mxu0
        %v1930 = vadd.f32 0.0, %v1929
        %v1931 = vpop.f32.mrb[0].mxu0
        %v1932 = vadd.f32 0.0, %v1931
        %v1933 = vpop.f32.mrb[0].mxu0
        %v1934 = vpop.f32.mrb[0].mxu0
        %1935 = vdwg.mxu0
        %v1936 = vld [vmem:[#allocation23] sm:$0x3]
        %v1938 = vlaneseq
        %v1939 = vshrl.u32 %v1938, 7
        %v1940 = vsub.s32 0, %v1939
        %v1941 = vrot.slane %v1936, %v1940
        %v1942 = vlaneseq
        %v1943 = vshrl.u32 %v1942, 7
        %v1944 = vsub.s32 1, %v1943
        %v1945 = vrot.slane %v1936, %v1944
        %v1948 = vmul.f32 %v1930, %v1941
        %v1949 = vmul.f32 %v1932, %v1945
        %v1950 = vld [vmem:[#allocation25] sm:$0x3]
        %v1952 = vlaneseq
        %v1953 = vshrl.u32 %v1952, 7
        %v1954 = vsub.s32 0, %v1953
        %v1955 = vrot.slane %v1950, %v1954
        %v1956 = vlaneseq
        %v1957 = vshrl.u32 %v1956, 7
        %v1958 = vsub.s32 1, %v1957
        %v1959 = vrot.slane %v1950, %v1958
        %v1962 = vadd.f32 %v1948, %v1955
        %v1963 = vadd.f32 %v1949, %v1959
        %v1964 = vmax.f32 %v1962, 0.0
        %v1965 = vmax.f32 %v1963, 0.0
        %v1966 = vpack.c.bf16 %v1964, %v1964
        %v1967 = vpack.c.bf16 %v1965, %v1965
        %v1968 = vld [vmem:[#allocation26] sm:$0xff]
        %v1969 = vld [vmem:[#allocation26 + $0x8] sm:$0xff]
        %v1970 = vld [vmem:[#allocation26 + $0x10] sm:$0xff]
        %v1971 = vld [vmem:[#allocation26 + $0x18] sm:$0xff]
        %v1972 = vld [vmem:[#allocation26 + $0x20] sm:$0xff]
        %v1973 = vld [vmem:[#allocation26 + $0x28] sm:$0xff]
        %v1974 = vld [vmem:[#allocation26 + $0x30] sm:$0xff]
        %v1975 = vld [vmem:[#allocation26 + $0x38] sm:$0xff]
        %v1976 = vld [vmem:[#allocation26 + $0x40] sm:$0xff]
        %v1977 = vld [vmem:[#allocation26 + $0x48] sm:$0xff]
        %v1978 = vld [vmem:[#allocation26 + $0x50] sm:$0xff]
        %v1979 = vld [vmem:[#allocation26 + $0x58] sm:$0xff]
        %v1980 = vld [vmem:[#allocation26 + $0x60] sm:$0xff]
        %v1981 = vld [vmem:[#allocation26 + $0x68] sm:$0xff]
        %v1982 = vld [vmem:[#allocation26 + $0x70] sm:$0xff]
        %v1983 = vld [vmem:[#allocation26 + $0x78] sm:$0xff]
        %v1984 = vld [vmem:[#allocation26 + $0x80] sm:$0xff]
        %v1985 = vld [vmem:[#allocation26 + $0x88] sm:$0xff]
        %v1986 = vld [vmem:[#allocation26 + $0x90] sm:$0xff]
        %v1987 = vld [vmem:[#allocation26 + $0x98] sm:$0xff]
        %v1988 = vld [vmem:[#allocation26 + $0xa0] sm:$0xff]
        %v1989 = vld [vmem:[#allocation26 + $0xa8] sm:$0xff]
        %v1990 = vld [vmem:[#allocation26 + $0xb0] sm:$0xff]
        %v1991 = vld [vmem:[#allocation26 + $0xb8] sm:$0xff]
        %v1992 = vld [vmem:[#allocation26 + $0xc0] sm:$0xff]
        %v1993 = vld [vmem:[#allocation26 + $0xc8] sm:$0xff]
        %v1994 = vld [vmem:[#allocation26 + $0xd0] sm:$0xff]
        %v1995 = vld [vmem:[#allocation26 + $0xd8] sm:$0xff]
        %v1996 = vld [vmem:[#allocation26 + $0xe0] sm:$0xff]
        %v1997 = vld [vmem:[#allocation26 + $0xe8] sm:$0xff]
        %v1998 = vld [vmem:[#allocation26 + $0xf0] sm:$0xff]
        %v1999 = vld [vmem:[#allocation26 + $0xf8] sm:$0xff]
        %v2000 = vld [vmem:[#allocation26 + $0x100] sm:$0xff]
        %v2001 = vld [vmem:[#allocation26 + $0x108] sm:$0xff]
        %v2002 = vld [vmem:[#allocation26 + $0x110] sm:$0xff]
        %v2003 = vld [vmem:[#allocation26 + $0x118] sm:$0xff]
        %v2004 = vld [vmem:[#allocation26 + $0x120] sm:$0xff]
        %v2005 = vld [vmem:[#allocation26 + $0x128] sm:$0xff]
        %v2006 = vld [vmem:[#allocation26 + $0x130] sm:$0xff]
        %v2007 = vld [vmem:[#allocation26 + $0x138] sm:$0xff]
        %v2008 = vld [vmem:[#allocation26 + $0x140] sm:$0xff]
        %v2009 = vld [vmem:[#allocation26 + $0x148] sm:$0xff]
        %v2010 = vld [vmem:[#allocation26 + $0x150] sm:$0xff]
        %v2011 = vld [vmem:[#allocation26 + $0x158] sm:$0xff]
        %v2012 = vld [vmem:[#allocation26 + $0x160] sm:$0xff]
        %v2013 = vld [vmem:[#allocation26 + $0x168] sm:$0xff]
        %v2014 = vld [vmem:[#allocation26 + $0x170] sm:$0xff]
        %v2015 = vld [vmem:[#allocation26 + $0x178] sm:$0xff]
        %v2016 = vld [vmem:[#allocation26 + $0x180] sm:$0xff]
        %v2017 = vld [vmem:[#allocation26 + $0x188] sm:$0xff]
        %v2018 = vld [vmem:[#allocation26 + $0x190] sm:$0xff]
        %v2019 = vld [vmem:[#allocation26 + $0x198] sm:$0xff]
        %v2020 = vld [vmem:[#allocation26 + $0x1a0] sm:$0xff]
        %v2021 = vld [vmem:[#allocation26 + $0x1a8] sm:$0xff]
        %v2022 = vld [vmem:[#allocation26 + $0x1b0] sm:$0xff]
        %v2023 = vld [vmem:[#allocation26 + $0x1b8] sm:$0xff]
        %v2024 = vld [vmem:[#allocation26 + $0x1c0] sm:$0xff]
        %v2025 = vld [vmem:[#allocation26 + $0x1c8] sm:$0xff]
        %v2026 = vld [vmem:[#allocation26 + $0x1d0] sm:$0xff]
        %v2027 = vld [vmem:[#allocation26 + $0x1d8] sm:$0xff]
        %v2028 = vld [vmem:[#allocation26 + $0x1e0] sm:$0xff]
        %v2029 = vld [vmem:[#allocation26 + $0x1e8] sm:$0xff]
        %v2030 = vld [vmem:[#allocation26 + $0x1f0] sm:$0xff]
        %v2031 = vld [vmem:[#allocation26 + $0x1f8] sm:$0xff]
        %v2032 = vld [vmem:[#allocation26 + $0x200] sm:$0xff]
        %v2033 = vld [vmem:[#allocation26 + $0x208] sm:$0xff]
        %v2034 = vld [vmem:[#allocation26 + $0x210] sm:$0xff]
        %v2035 = vld [vmem:[#allocation26 + $0x218] sm:$0xff]
        %v2036 = vld [vmem:[#allocation26 + $0x220] sm:$0xff]
        %v2037 = vld [vmem:[#allocation26 + $0x228] sm:$0xff]
        %v2038 = vld [vmem:[#allocation26 + $0x230] sm:$0xff]
        %v2039 = vld [vmem:[#allocation26 + $0x238] sm:$0xff]
        %v2040 = vld [vmem:[#allocation26 + $0x240] sm:$0xff]
        %v2041 = vld [vmem:[#allocation26 + $0x248] sm:$0xff]
        %v2042 = vld [vmem:[#allocation26 + $0x250] sm:$0xff]
        %v2043 = vld [vmem:[#allocation26 + $0x258] sm:$0xff]
        %v2044 = vld [vmem:[#allocation26 + $0x260] sm:$0xff]
        %v2045 = vld [vmem:[#allocation26 + $0x268] sm:$0xff]
        %v2046 = vld [vmem:[#allocation26 + $0x270] sm:$0xff]
        %v2047 = vld [vmem:[#allocation26 + $0x278] sm:$0xff]
        %v2048 = vld [vmem:[#allocation26 + $0x280] sm:$0xff]
        %v2049 = vld [vmem:[#allocation26 + $0x288] sm:$0xff]
        %v2050 = vld [vmem:[#allocation26 + $0x290] sm:$0xff]
        %v2051 = vld [vmem:[#allocation26 + $0x298] sm:$0xff]
        %v2052 = vld [vmem:[#allocation26 + $0x2a0] sm:$0xff]
        %v2053 = vld [vmem:[#allocation26 + $0x2a8] sm:$0xff]
        %v2054 = vld [vmem:[#allocation26 + $0x2b0] sm:$0xff]
        %v2055 = vld [vmem:[#allocation26 + $0x2b8] sm:$0xff]
        %v2056 = vld [vmem:[#allocation26 + $0x2c0] sm:$0xff]
        %v2057 = vld [vmem:[#allocation26 + $0x2c8] sm:$0xff]
        %v2058 = vld [vmem:[#allocation26 + $0x2d0] sm:$0xff]
        %v2059 = vld [vmem:[#allocation26 + $0x2d8] sm:$0xff]
        %v2060 = vld [vmem:[#allocation26 + $0x2e0] sm:$0xff]
        %v2061 = vld [vmem:[#allocation26 + $0x2e8] sm:$0xff]
        %v2062 = vld [vmem:[#allocation26 + $0x2f0] sm:$0xff]
        %v2063 = vld [vmem:[#allocation26 + $0x2f8] sm:$0xff]
        %v2064 = vld [vmem:[#allocation26 + $0x300] sm:$0xff]
        %v2065 = vld [vmem:[#allocation26 + $0x308] sm:$0xff]
        %v2066 = vld [vmem:[#allocation26 + $0x310] sm:$0xff]
        %v2067 = vld [vmem:[#allocation26 + $0x318] sm:$0xff]
        %v2068 = vld [vmem:[#allocation26 + $0x320] sm:$0xff]
        %v2069 = vld [vmem:[#allocation26 + $0x328] sm:$0xff]
        %v2070 = vld [vmem:[#allocation26 + $0x330] sm:$0xff]
        %v2071 = vld [vmem:[#allocation26 + $0x338] sm:$0xff]
        %v2072 = vld [vmem:[#allocation26 + $0x340] sm:$0xff]
        %v2073 = vld [vmem:[#allocation26 + $0x348] sm:$0xff]
        %v2074 = vld [vmem:[#allocation26 + $0x350] sm:$0xff]
        %v2075 = vld [vmem:[#allocation26 + $0x358] sm:$0xff]
        %v2076 = vld [vmem:[#allocation26 + $0x360] sm:$0xff]
        %v2077 = vld [vmem:[#allocation26 + $0x368] sm:$0xff]
        %v2078 = vld [vmem:[#allocation26 + $0x370] sm:$0xff]
        %v2079 = vld [vmem:[#allocation26 + $0x378] sm:$0xff]
        %v2080 = vld [vmem:[#allocation26 + $0x380] sm:$0xff]
        %v2081 = vld [vmem:[#allocation26 + $0x388] sm:$0xff]
        %v2082 = vld [vmem:[#allocation26 + $0x390] sm:$0xff]
        %v2083 = vld [vmem:[#allocation26 + $0x398] sm:$0xff]
        %v2084 = vld [vmem:[#allocation26 + $0x3a0] sm:$0xff]
        %v2085 = vld [vmem:[#allocation26 + $0x3a8] sm:$0xff]
        %v2086 = vld [vmem:[#allocation26 + $0x3b0] sm:$0xff]
        %v2087 = vld [vmem:[#allocation26 + $0x3b8] sm:$0xff]
        %v2088 = vld [vmem:[#allocation26 + $0x3c0] sm:$0xff]
        %v2089 = vld [vmem:[#allocation26 + $0x3c8] sm:$0xff]
        %v2090 = vld [vmem:[#allocation26 + $0x3d0] sm:$0xff]
        %v2091 = vld [vmem:[#allocation26 + $0x3d8] sm:$0xff]
        %v2092 = vld [vmem:[#allocation26 + $0x3e0] sm:$0xff]
        %v2093 = vld [vmem:[#allocation26 + $0x3e8] sm:$0xff]
        %v2094 = vld [vmem:[#allocation26 + $0x3f0] sm:$0xff]
        %v2095 = vld [vmem:[#allocation26 + $0x3f8] sm:$0xff]
        %v2096 = vld [vmem:[#allocation26 + $0x400] sm:$0xff]
        %v2097 = vld [vmem:[#allocation26 + $0x408] sm:$0xff]
        %v2098 = vld [vmem:[#allocation26 + $0x410] sm:$0xff]
        %v2099 = vld [vmem:[#allocation26 + $0x418] sm:$0xff]
        %v2100 = vld [vmem:[#allocation26 + $0x420] sm:$0xff]
        %v2101 = vld [vmem:[#allocation26 + $0x428] sm:$0xff]
        %v2102 = vld [vmem:[#allocation26 + $0x430] sm:$0xff]
        %v2103 = vld [vmem:[#allocation26 + $0x438] sm:$0xff]
        %v2104 = vld [vmem:[#allocation26 + $0x440] sm:$0xff]
        %v2105 = vld [vmem:[#allocation26 + $0x448] sm:$0xff]
        %v2106 = vld [vmem:[#allocation26 + $0x450] sm:$0xff]
        %v2107 = vld [vmem:[#allocation26 + $0x458] sm:$0xff]
        %v2108 = vld [vmem:[#allocation26 + $0x460] sm:$0xff]
        %v2109 = vld [vmem:[#allocation26 + $0x468] sm:$0xff]
        %v2110 = vld [vmem:[#allocation26 + $0x470] sm:$0xff]
        %v2111 = vld [vmem:[#allocation26 + $0x478] sm:$0xff]
        %v2112 = vld [vmem:[#allocation26 + $0x480] sm:$0xff]
        %v2113 = vld [vmem:[#allocation26 + $0x488] sm:$0xff]
        %v2114 = vld [vmem:[#allocation26 + $0x490] sm:$0xff]
        %v2115 = vld [vmem:[#allocation26 + $0x498] sm:$0xff]
        %v2116 = vld [vmem:[#allocation26 + $0x4a0] sm:$0xff]
        %v2117 = vld [vmem:[#allocation26 + $0x4a8] sm:$0xff]
        %v2118 = vld [vmem:[#allocation26 + $0x4b0] sm:$0xff]
        %v2119 = vld [vmem:[#allocation26 + $0x4b8] sm:$0xff]
        %v2120 = vld [vmem:[#allocation26 + $0x4c0] sm:$0xff]
        %v2121 = vld [vmem:[#allocation26 + $0x4c8] sm:$0xff]
        %v2122 = vld [vmem:[#allocation26 + $0x4d0] sm:$0xff]
        %v2123 = vld [vmem:[#allocation26 + $0x4d8] sm:$0xff]
        %v2124 = vld [vmem:[#allocation26 + $0x4e0] sm:$0xff]
        %v2125 = vld [vmem:[#allocation26 + $0x4e8] sm:$0xff]
        %v2126 = vld [vmem:[#allocation26 + $0x4f0] sm:$0xff]
        %v2127 = vld [vmem:[#allocation26 + $0x4f8] sm:$0xff]
        %v2128 = vld [vmem:[#allocation26 + $0x500] sm:$0xff]
        %v2129 = vld [vmem:[#allocation26 + $0x508] sm:$0xff]
        %v2130 = vld [vmem:[#allocation26 + $0x510] sm:$0xff]
        %v2131 = vld [vmem:[#allocation26 + $0x518] sm:$0xff]
        %v2132 = vld [vmem:[#allocation26 + $0x520] sm:$0xff]
        %v2133 = vld [vmem:[#allocation26 + $0x528] sm:$0xff]
        %v2134 = vld [vmem:[#allocation26 + $0x530] sm:$0xff]
        %v2135 = vld [vmem:[#allocation26 + $0x538] sm:$0xff]
        %v2136 = vld [vmem:[#allocation26 + $0x540] sm:$0xff]
        %v2137 = vld [vmem:[#allocation26 + $0x548] sm:$0xff]
        %v2138 = vld [vmem:[#allocation26 + $0x550] sm:$0xff]
        %v2139 = vld [vmem:[#allocation26 + $0x558] sm:$0xff]
        %v2140 = vld [vmem:[#allocation26 + $0x560] sm:$0xff]
        %v2141 = vld [vmem:[#allocation26 + $0x568] sm:$0xff]
        %v2142 = vld [vmem:[#allocation26 + $0x570] sm:$0xff]
        %v2143 = vld [vmem:[#allocation26 + $0x578] sm:$0xff]
        %v2144 = vld [vmem:[#allocation26 + $0x580] sm:$0xff]
        %v2145 = vld [vmem:[#allocation26 + $0x588] sm:$0xff]
        %v2146 = vld [vmem:[#allocation26 + $0x590] sm:$0xff]
        %v2147 = vld [vmem:[#allocation26 + $0x598] sm:$0xff]
        %v2148 = vld [vmem:[#allocation26 + $0x5a0] sm:$0xff]
        %v2149 = vld [vmem:[#allocation26 + $0x5a8] sm:$0xff]
        %v2150 = vld [vmem:[#allocation26 + $0x5b0] sm:$0xff]
        %v2151 = vld [vmem:[#allocation26 + $0x5b8] sm:$0xff]
        %v2152 = vld [vmem:[#allocation26 + $0x5c0] sm:$0xff]
        %v2153 = vld [vmem:[#allocation26 + $0x5c8] sm:$0xff]
        %v2154 = vld [vmem:[#allocation26 + $0x5d0] sm:$0xff]
        %v2155 = vld [vmem:[#allocation26 + $0x5d8] sm:$0xff]
        %v2156 = vld [vmem:[#allocation26 + $0x5e0] sm:$0xff]
        %v2157 = vld [vmem:[#allocation26 + $0x5e8] sm:$0xff]
        %v2158 = vld [vmem:[#allocation26 + $0x5f0] sm:$0xff]
        %v2159 = vld [vmem:[#allocation26 + $0x5f8] sm:$0xff]
        %v2160 = vld [vmem:[#allocation26 + $0x600] sm:$0xff]
        %v2161 = vld [vmem:[#allocation26 + $0x608] sm:$0xff]
        %v2162 = vld [vmem:[#allocation26 + $0x610] sm:$0xff]
        %v2163 = vld [vmem:[#allocation26 + $0x618] sm:$0xff]
        %v2164 = vld [vmem:[#allocation26 + $0x620] sm:$0xff]
        %v2165 = vld [vmem:[#allocation26 + $0x628] sm:$0xff]
        %v2166 = vld [vmem:[#allocation26 + $0x630] sm:$0xff]
        %v2167 = vld [vmem:[#allocation26 + $0x638] sm:$0xff]
        %v2168 = vld [vmem:[#allocation26 + $0x640] sm:$0xff]
        %v2169 = vld [vmem:[#allocation26 + $0x648] sm:$0xff]
        %v2170 = vld [vmem:[#allocation26 + $0x650] sm:$0xff]
        %v2171 = vld [vmem:[#allocation26 + $0x658] sm:$0xff]
        %v2172 = vld [vmem:[#allocation26 + $0x660] sm:$0xff]
        %v2173 = vld [vmem:[#allocation26 + $0x668] sm:$0xff]
        %v2174 = vld [vmem:[#allocation26 + $0x670] sm:$0xff]
        %v2175 = vld [vmem:[#allocation26 + $0x678] sm:$0xff]
        %v2176 = vld [vmem:[#allocation26 + $0x680] sm:$0xff]
        %v2177 = vld [vmem:[#allocation26 + $0x688] sm:$0xff]
        %v2178 = vld [vmem:[#allocation26 + $0x690] sm:$0xff]
        %v2179 = vld [vmem:[#allocation26 + $0x698] sm:$0xff]
        %v2180 = vld [vmem:[#allocation26 + $0x6a0] sm:$0xff]
        %v2181 = vld [vmem:[#allocation26 + $0x6a8] sm:$0xff]
        %v2182 = vld [vmem:[#allocation26 + $0x6b0] sm:$0xff]
        %v2183 = vld [vmem:[#allocation26 + $0x6b8] sm:$0xff]
        %v2184 = vld [vmem:[#allocation26 + $0x6c0] sm:$0xff]
        %v2185 = vld [vmem:[#allocation26 + $0x6c8] sm:$0xff]
        %v2186 = vld [vmem:[#allocation26 + $0x6d0] sm:$0xff]
        %v2187 = vld [vmem:[#allocation26 + $0x6d8] sm:$0xff]
        %v2188 = vld [vmem:[#allocation26 + $0x6e0] sm:$0xff]
        %v2189 = vld [vmem:[#allocation26 + $0x6e8] sm:$0xff]
        %v2190 = vld [vmem:[#allocation26 + $0x6f0] sm:$0xff]
        %v2191 = vld [vmem:[#allocation26 + $0x6f8] sm:$0xff]
        %v2192 = vld [vmem:[#allocation26 + $0x700] sm:$0xff]
        %v2193 = vld [vmem:[#allocation26 + $0x708] sm:$0xff]
        %v2194 = vld [vmem:[#allocation26 + $0x710] sm:$0xff]
        %v2195 = vld [vmem:[#allocation26 + $0x718] sm:$0xff]
        %v2196 = vld [vmem:[#allocation26 + $0x720] sm:$0xff]
        %v2197 = vld [vmem:[#allocation26 + $0x728] sm:$0xff]
        %v2198 = vld [vmem:[#allocation26 + $0x730] sm:$0xff]
        %v2199 = vld [vmem:[#allocation26 + $0x738] sm:$0xff]
        %v2200 = vld [vmem:[#allocation26 + $0x740] sm:$0xff]
        %v2201 = vld [vmem:[#allocation26 + $0x748] sm:$0xff]
        %v2202 = vld [vmem:[#allocation26 + $0x750] sm:$0xff]
        %v2203 = vld [vmem:[#allocation26 + $0x758] sm:$0xff]
        %v2204 = vld [vmem:[#allocation26 + $0x760] sm:$0xff]
        %v2205 = vld [vmem:[#allocation26 + $0x768] sm:$0xff]
        %v2206 = vld [vmem:[#allocation26 + $0x770] sm:$0xff]
        %v2207 = vld [vmem:[#allocation26 + $0x778] sm:$0xff]
        %v2208 = vld [vmem:[#allocation26 + $0x780] sm:$0xff]
        %v2209 = vld [vmem:[#allocation26 + $0x788] sm:$0xff]
        %v2210 = vld [vmem:[#allocation26 + $0x790] sm:$0xff]
        %v2211 = vld [vmem:[#allocation26 + $0x798] sm:$0xff]
        %v2212 = vld [vmem:[#allocation26 + $0x7a0] sm:$0xff]
        %v2213 = vld [vmem:[#allocation26 + $0x7a8] sm:$0xff]
        %v2214 = vld [vmem:[#allocation26 + $0x7b0] sm:$0xff]
        %v2215 = vld [vmem:[#allocation26 + $0x7b8] sm:$0xff]
        %v2216 = vld [vmem:[#allocation26 + $0x7c0] sm:$0xff]
        %v2217 = vld [vmem:[#allocation26 + $0x7c8] sm:$0xff]
        %v2218 = vld [vmem:[#allocation26 + $0x7d0] sm:$0xff]
        %v2219 = vld [vmem:[#allocation26 + $0x7d8] sm:$0xff]
        %v2220 = vld [vmem:[#allocation26 + $0x7e0] sm:$0xff]
        %v2221 = vld [vmem:[#allocation26 + $0x7e8] sm:$0xff]
        %v2222 = vld [vmem:[#allocation26 + $0x7f0] sm:$0xff]
        %v2223 = vld [vmem:[#allocation26 + $0x7f8] sm:$0xff]
        %v2224 = vld [vmem:[#allocation26 + $0x800] sm:$0xff]
        %v2225 = vld [vmem:[#allocation26 + $0x808] sm:$0xff]
        %v2226 = vld [vmem:[#allocation26 + $0x810] sm:$0xff]
        %v2227 = vld [vmem:[#allocation26 + $0x818] sm:$0xff]
        %v2228 = vld [vmem:[#allocation26 + $0x820] sm:$0xff]
        %v2229 = vld [vmem:[#allocation26 + $0x828] sm:$0xff]
        %v2230 = vld [vmem:[#allocation26 + $0x830] sm:$0xff]
        %v2231 = vld [vmem:[#allocation26 + $0x838] sm:$0xff]
        %v2232 = vld [vmem:[#allocation26 + $0x840] sm:$0xff]
        %v2233 = vld [vmem:[#allocation26 + $0x848] sm:$0xff]
        %v2234 = vld [vmem:[#allocation26 + $0x850] sm:$0xff]
        %v2235 = vld [vmem:[#allocation26 + $0x858] sm:$0xff]
        %v2236 = vld [vmem:[#allocation26 + $0x860] sm:$0xff]
        %v2237 = vld [vmem:[#allocation26 + $0x868] sm:$0xff]
        %v2238 = vld [vmem:[#allocation26 + $0x870] sm:$0xff]
        %v2239 = vld [vmem:[#allocation26 + $0x878] sm:$0xff]
        %v2240 = vld [vmem:[#allocation26 + $0x880] sm:$0xff]
        %v2241 = vld [vmem:[#allocation26 + $0x888] sm:$0xff]
        %v2242 = vld [vmem:[#allocation26 + $0x890] sm:$0xff]
        %v2243 = vld [vmem:[#allocation26 + $0x898] sm:$0xff]
        %v2244 = vld [vmem:[#allocation26 + $0x8a0] sm:$0xff]
        %v2245 = vld [vmem:[#allocation26 + $0x8a8] sm:$0xff]
        %v2246 = vld [vmem:[#allocation26 + $0x8b0] sm:$0xff]
        %v2247 = vld [vmem:[#allocation26 + $0x8b8] sm:$0xff]
        %v2248 = vld [vmem:[#allocation26 + $0x8c0] sm:$0xff]
        %v2249 = vld [vmem:[#allocation26 + $0x8c8] sm:$0xff]
        %v2250 = vld [vmem:[#allocation26 + $0x8d0] sm:$0xff]
        %v2251 = vld [vmem:[#allocation26 + $0x8d8] sm:$0xff]
        %v2252 = vld [vmem:[#allocation26 + $0x8e0] sm:$0xff]
        %v2253 = vld [vmem:[#allocation26 + $0x8e8] sm:$0xff]
        %v2254 = vld [vmem:[#allocation26 + $0x8f0] sm:$0xff]
        %v2255 = vld [vmem:[#allocation26 + $0x8f8] sm:$0xff]
        %v2256 = vld [vmem:[#allocation26 + $0x900] sm:$0xff]
        %v2257 = vld [vmem:[#allocation26 + $0x908] sm:$0xff]
        %v2258 = vld [vmem:[#allocation26 + $0x910] sm:$0xff]
        %v2259 = vld [vmem:[#allocation26 + $0x918] sm:$0xff]
        %v2260 = vld [vmem:[#allocation26 + $0x920] sm:$0xff]
        %v2261 = vld [vmem:[#allocation26 + $0x928] sm:$0xff]
        %v2262 = vld [vmem:[#allocation26 + $0x930] sm:$0xff]
        %v2263 = vld [vmem:[#allocation26 + $0x938] sm:$0xff]
        %v2264 = vld [vmem:[#allocation26 + $0x940] sm:$0xff]
        %v2265 = vld [vmem:[#allocation26 + $0x948] sm:$0xff]
        %v2266 = vld [vmem:[#allocation26 + $0x950] sm:$0xff]
        %v2267 = vld [vmem:[#allocation26 + $0x958] sm:$0xff]
        %v2268 = vld [vmem:[#allocation26 + $0x960] sm:$0xff]
        %v2269 = vld [vmem:[#allocation26 + $0x968] sm:$0xff]
        %v2270 = vld [vmem:[#allocation26 + $0x970] sm:$0xff]
        %v2271 = vld [vmem:[#allocation26 + $0x978] sm:$0xff]
        %v2272 = vld [vmem:[#allocation26 + $0x980] sm:$0xff]
        %v2273 = vld [vmem:[#allocation26 + $0x988] sm:$0xff]
        %v2274 = vld [vmem:[#allocation26 + $0x990] sm:$0xff]
        %v2275 = vld [vmem:[#allocation26 + $0x998] sm:$0xff]
        %v2276 = vld [vmem:[#allocation26 + $0x9a0] sm:$0xff]
        %v2277 = vld [vmem:[#allocation26 + $0x9a8] sm:$0xff]
        %v2278 = vld [vmem:[#allocation26 + $0x9b0] sm:$0xff]
        %v2279 = vld [vmem:[#allocation26 + $0x9b8] sm:$0xff]
        %v2280 = vld [vmem:[#allocation26 + $0x9c0] sm:$0xff]
        %v2281 = vld [vmem:[#allocation26 + $0x9c8] sm:$0xff]
        %v2282 = vld [vmem:[#allocation26 + $0x9d0] sm:$0xff]
        %v2283 = vld [vmem:[#allocation26 + $0x9d8] sm:$0xff]
        %v2284 = vld [vmem:[#allocation26 + $0x9e0] sm:$0xff]
        %v2285 = vld [vmem:[#allocation26 + $0x9e8] sm:$0xff]
        %v2286 = vld [vmem:[#allocation26 + $0x9f0] sm:$0xff]
        %v2287 = vld [vmem:[#allocation26 + $0x9f8] sm:$0xff]
        %v2288 = vld [vmem:[#allocation26 + $0xa00] sm:$0xff]
        %v2289 = vld [vmem:[#allocation26 + $0xa08] sm:$0xff]
        %v2290 = vld [vmem:[#allocation26 + $0xa10] sm:$0xff]
        %v2291 = vld [vmem:[#allocation26 + $0xa18] sm:$0xff]
        %v2292 = vld [vmem:[#allocation26 + $0xa20] sm:$0xff]
        %v2293 = vld [vmem:[#allocation26 + $0xa28] sm:$0xff]
        %v2294 = vld [vmem:[#allocation26 + $0xa30] sm:$0xff]
        %v2295 = vld [vmem:[#allocation26 + $0xa38] sm:$0xff]
        %v2296 = vld [vmem:[#allocation26 + $0xa40] sm:$0xff]
        %v2297 = vld [vmem:[#allocation26 + $0xa48] sm:$0xff]
        %v2298 = vld [vmem:[#allocation26 + $0xa50] sm:$0xff]
        %v2299 = vld [vmem:[#allocation26 + $0xa58] sm:$0xff]
        %v2300 = vld [vmem:[#allocation26 + $0xa60] sm:$0xff]
        %v2301 = vld [vmem:[#allocation26 + $0xa68] sm:$0xff]
        %v2302 = vld [vmem:[#allocation26 + $0xa70] sm:$0xff]
        %v2303 = vld [vmem:[#allocation26 + $0xa78] sm:$0xff]
        %v2304 = vld [vmem:[#allocation26 + $0xa80] sm:$0xff]
        %v2305 = vld [vmem:[#allocation26 + $0xa88] sm:$0xff]
        %v2306 = vld [vmem:[#allocation26 + $0xa90] sm:$0xff]
        %v2307 = vld [vmem:[#allocation26 + $0xa98] sm:$0xff]
        %v2308 = vld [vmem:[#allocation26 + $0xaa0] sm:$0xff]
        %v2309 = vld [vmem:[#allocation26 + $0xaa8] sm:$0xff]
        %v2310 = vld [vmem:[#allocation26 + $0xab0] sm:$0xff]
        %v2311 = vld [vmem:[#allocation26 + $0xab8] sm:$0xff]
        %v2312 = vld [vmem:[#allocation26 + $0xac0] sm:$0xff]
        %v2313 = vld [vmem:[#allocation26 + $0xac8] sm:$0xff]
        %v2314 = vld [vmem:[#allocation26 + $0xad0] sm:$0xff]
        %v2315 = vld [vmem:[#allocation26 + $0xad8] sm:$0xff]
        %v2316 = vld [vmem:[#allocation26 + $0xae0] sm:$0xff]
        %v2317 = vld [vmem:[#allocation26 + $0xae8] sm:$0xff]
        %v2318 = vld [vmem:[#allocation26 + $0xaf0] sm:$0xff]
        %v2319 = vld [vmem:[#allocation26 + $0xaf8] sm:$0xff]
        %v2320 = vld [vmem:[#allocation26 + $0xb00] sm:$0xff]
        %v2321 = vld [vmem:[#allocation26 + $0xb08] sm:$0xff]
        %v2322 = vld [vmem:[#allocation26 + $0xb10] sm:$0xff]
        %v2323 = vld [vmem:[#allocation26 + $0xb18] sm:$0xff]
        %v2324 = vld [vmem:[#allocation26 + $0xb20] sm:$0xff]
        %v2325 = vld [vmem:[#allocation26 + $0xb28] sm:$0xff]
        %v2326 = vld [vmem:[#allocation26 + $0xb30] sm:$0xff]
        %v2327 = vld [vmem:[#allocation26 + $0xb38] sm:$0xff]
        %v2328 = vld [vmem:[#allocation26 + $0xb40] sm:$0xff]
        %v2329 = vld [vmem:[#allocation26 + $0xb48] sm:$0xff]
        %v2330 = vld [vmem:[#allocation26 + $0xb50] sm:$0xff]
        %v2331 = vld [vmem:[#allocation26 + $0xb58] sm:$0xff]
        %v2332 = vld [vmem:[#allocation26 + $0xb60] sm:$0xff]
        %v2333 = vld [vmem:[#allocation26 + $0xb68] sm:$0xff]
        %v2334 = vld [vmem:[#allocation26 + $0xb70] sm:$0xff]
        %v2335 = vld [vmem:[#allocation26 + $0xb78] sm:$0xff]
        %v2336 = vld [vmem:[#allocation26 + $0xb80] sm:$0xff]
        %v2337 = vld [vmem:[#allocation26 + $0xb88] sm:$0xff]
        %v2338 = vld [vmem:[#allocation26 + $0xb90] sm:$0xff]
        %v2339 = vld [vmem:[#allocation26 + $0xb98] sm:$0xff]
        %v2340 = vld [vmem:[#allocation26 + $0xba0] sm:$0xff]
        %v2341 = vld [vmem:[#allocation26 + $0xba8] sm:$0xff]
        %v2342 = vld [vmem:[#allocation26 + $0xbb0] sm:$0xff]
        %v2343 = vld [vmem:[#allocation26 + $0xbb8] sm:$0xff]
        %v2344 = vld [vmem:[#allocation26 + $0xbc0] sm:$0xff]
        %v2345 = vld [vmem:[#allocation26 + $0xbc8] sm:$0xff]
        %v2346 = vld [vmem:[#allocation26 + $0xbd0] sm:$0xff]
        %v2347 = vld [vmem:[#allocation26 + $0xbd8] sm:$0xff]
        %v2348 = vld [vmem:[#allocation26 + $0xbe0] sm:$0xff]
        %v2349 = vld [vmem:[#allocation26 + $0xbe8] sm:$0xff]
        %v2350 = vld [vmem:[#allocation26 + $0xbf0] sm:$0xff]
        %v2351 = vld [vmem:[#allocation26 + $0xbf8] sm:$0xff]
        %v2352 = vld [vmem:[#allocation26 + $0xc00] sm:$0xff]
        %v2353 = vld [vmem:[#allocation26 + $0xc08] sm:$0xff]
        %v2354 = vld [vmem:[#allocation26 + $0xc10] sm:$0xff]
        %v2355 = vld [vmem:[#allocation26 + $0xc18] sm:$0xff]
        %v2356 = vld [vmem:[#allocation26 + $0xc20] sm:$0xff]
        %v2357 = vld [vmem:[#allocation26 + $0xc28] sm:$0xff]
        %v2358 = vld [vmem:[#allocation26 + $0xc30] sm:$0xff]
        %v2359 = vld [vmem:[#allocation26 + $0xc38] sm:$0xff]
        %v2360 = vld [vmem:[#allocation26 + $0xc40] sm:$0xff]
        %v2361 = vld [vmem:[#allocation26 + $0xc48] sm:$0xff]
        %v2362 = vld [vmem:[#allocation26 + $0xc50] sm:$0xff]
        %v2363 = vld [vmem:[#allocation26 + $0xc58] sm:$0xff]
        %v2364 = vld [vmem:[#allocation26 + $0xc60] sm:$0xff]
        %v2365 = vld [vmem:[#allocation26 + $0xc68] sm:$0xff]
        %v2366 = vld [vmem:[#allocation26 + $0xc70] sm:$0xff]
        %v2367 = vld [vmem:[#allocation26 + $0xc78] sm:$0xff]
        %v2368 = vld [vmem:[#allocation26 + $0xc80] sm:$0xff]
        %v2369 = vld [vmem:[#allocation26 + $0xc88] sm:$0xff]
        %v2370 = vld [vmem:[#allocation26 + $0xc90] sm:$0xff]
        %v2371 = vld [vmem:[#allocation26 + $0xc98] sm:$0xff]
        %v2372 = vld [vmem:[#allocation26 + $0xca0] sm:$0xff]
        %v2373 = vld [vmem:[#allocation26 + $0xca8] sm:$0xff]
        %v2374 = vld [vmem:[#allocation26 + $0xcb0] sm:$0xff]
        %v2375 = vld [vmem:[#allocation26 + $0xcb8] sm:$0xff]
        %v2376 = vld [vmem:[#allocation26 + $0xcc0] sm:$0xff]
        %v2377 = vld [vmem:[#allocation26 + $0xcc8] sm:$0xff]
        %v2378 = vld [vmem:[#allocation26 + $0xcd0] sm:$0xff]
        %v2379 = vld [vmem:[#allocation26 + $0xcd8] sm:$0xff]
        %v2380 = vld [vmem:[#allocation26 + $0xce0] sm:$0xff]
        %v2381 = vld [vmem:[#allocation26 + $0xce8] sm:$0xff]
        %v2382 = vld [vmem:[#allocation26 + $0xcf0] sm:$0xff]
        %v2383 = vld [vmem:[#allocation26 + $0xcf8] sm:$0xff]
        %v2384 = vld [vmem:[#allocation26 + $0xd00] sm:$0xff]
        %v2385 = vld [vmem:[#allocation26 + $0xd08] sm:$0xff]
        %v2386 = vld [vmem:[#allocation26 + $0xd10] sm:$0xff]
        %v2387 = vld [vmem:[#allocation26 + $0xd18] sm:$0xff]
        %v2388 = vld [vmem:[#allocation26 + $0xd20] sm:$0xff]
        %v2389 = vld [vmem:[#allocation26 + $0xd28] sm:$0xff]
        %v2390 = vld [vmem:[#allocation26 + $0xd30] sm:$0xff]
        %v2391 = vld [vmem:[#allocation26 + $0xd38] sm:$0xff]
        %v2392 = vld [vmem:[#allocation26 + $0xd40] sm:$0xff]
        %v2393 = vld [vmem:[#allocation26 + $0xd48] sm:$0xff]
        %v2394 = vld [vmem:[#allocation26 + $0xd50] sm:$0xff]
        %v2395 = vld [vmem:[#allocation26 + $0xd58] sm:$0xff]
        %v2396 = vld [vmem:[#allocation26 + $0xd60] sm:$0xff]
        %v2397 = vld [vmem:[#allocation26 + $0xd68] sm:$0xff]
        %v2398 = vld [vmem:[#allocation26 + $0xd70] sm:$0xff]
        %v2399 = vld [vmem:[#allocation26 + $0xd78] sm:$0xff]
        %v2400 = vld [vmem:[#allocation26 + $0xd80] sm:$0xff]
        %v2401 = vld [vmem:[#allocation26 + $0xd88] sm:$0xff]
        %v2402 = vld [vmem:[#allocation26 + $0xd90] sm:$0xff]
        %v2403 = vld [vmem:[#allocation26 + $0xd98] sm:$0xff]
        %v2404 = vld [vmem:[#allocation26 + $0xda0] sm:$0xff]
        %v2405 = vld [vmem:[#allocation26 + $0xda8] sm:$0xff]
        %v2406 = vld [vmem:[#allocation26 + $0xdb0] sm:$0xff]
        %v2407 = vld [vmem:[#allocation26 + $0xdb8] sm:$0xff]
        %v2408 = vld [vmem:[#allocation26 + $0xdc0] sm:$0xff]
        %v2409 = vld [vmem:[#allocation26 + $0xdc8] sm:$0xff]
        %v2410 = vld [vmem:[#allocation26 + $0xdd0] sm:$0xff]
        %v2411 = vld [vmem:[#allocation26 + $0xdd8] sm:$0xff]
        %v2412 = vld [vmem:[#allocation26 + $0xde0] sm:$0xff]
        %v2413 = vld [vmem:[#allocation26 + $0xde8] sm:$0xff]
        %v2414 = vld [vmem:[#allocation26 + $0xdf0] sm:$0xff]
        %v2415 = vld [vmem:[#allocation26 + $0xdf8] sm:$0xff]
        %v2416 = vld [vmem:[#allocation26 + $0xe00] sm:$0xff]
        %v2417 = vld [vmem:[#allocation26 + $0xe08] sm:$0xff]
        %v2418 = vld [vmem:[#allocation26 + $0xe10] sm:$0xff]
        %v2419 = vld [vmem:[#allocation26 + $0xe18] sm:$0xff]
        %v2420 = vld [vmem:[#allocation26 + $0xe20] sm:$0xff]
        %v2421 = vld [vmem:[#allocation26 + $0xe28] sm:$0xff]
        %v2422 = vld [vmem:[#allocation26 + $0xe30] sm:$0xff]
        %v2423 = vld [vmem:[#allocation26 + $0xe38] sm:$0xff]
        %v2424 = vld [vmem:[#allocation26 + $0xe40] sm:$0xff]
        %v2425 = vld [vmem:[#allocation26 + $0xe48] sm:$0xff]
        %v2426 = vld [vmem:[#allocation26 + $0xe50] sm:$0xff]
        %v2427 = vld [vmem:[#allocation26 + $0xe58] sm:$0xff]
        %v2428 = vld [vmem:[#allocation26 + $0xe60] sm:$0xff]
        %v2429 = vld [vmem:[#allocation26 + $0xe68] sm:$0xff]
        %v2430 = vld [vmem:[#allocation26 + $0xe70] sm:$0xff]
        %v2431 = vld [vmem:[#allocation26 + $0xe78] sm:$0xff]
        %v2432 = vld [vmem:[#allocation26 + $0xe80] sm:$0xff]
        %v2433 = vld [vmem:[#allocation26 + $0xe88] sm:$0xff]
        %v2434 = vld [vmem:[#allocation26 + $0xe90] sm:$0xff]
        %v2435 = vld [vmem:[#allocation26 + $0xe98] sm:$0xff]
        %v2436 = vld [vmem:[#allocation26 + $0xea0] sm:$0xff]
        %v2437 = vld [vmem:[#allocation26 + $0xea8] sm:$0xff]
        %v2438 = vld [vmem:[#allocation26 + $0xeb0] sm:$0xff]
        %v2439 = vld [vmem:[#allocation26 + $0xeb8] sm:$0xff]
        %v2440 = vld [vmem:[#allocation26 + $0xec0] sm:$0xff]
        %v2441 = vld [vmem:[#allocation26 + $0xec8] sm:$0xff]
        %v2442 = vld [vmem:[#allocation26 + $0xed0] sm:$0xff]
        %v2443 = vld [vmem:[#allocation26 + $0xed8] sm:$0xff]
        %v2444 = vld [vmem:[#allocation26 + $0xee0] sm:$0xff]
        %v2445 = vld [vmem:[#allocation26 + $0xee8] sm:$0xff]
        %v2446 = vld [vmem:[#allocation26 + $0xef0] sm:$0xff]
        %v2447 = vld [vmem:[#allocation26 + $0xef8] sm:$0xff]
        %v2448 = vld [vmem:[#allocation26 + $0xf00] sm:$0xff]
        %v2449 = vld [vmem:[#allocation26 + $0xf08] sm:$0xff]
        %v2450 = vld [vmem:[#allocation26 + $0xf10] sm:$0xff]
        %v2451 = vld [vmem:[#allocation26 + $0xf18] sm:$0xff]
        %v2452 = vld [vmem:[#allocation26 + $0xf20] sm:$0xff]
        %v2453 = vld [vmem:[#allocation26 + $0xf28] sm:$0xff]
        %v2454 = vld [vmem:[#allocation26 + $0xf30] sm:$0xff]
        %v2455 = vld [vmem:[#allocation26 + $0xf38] sm:$0xff]
        %v2456 = vld [vmem:[#allocation26 + $0xf40] sm:$0xff]
        %v2457 = vld [vmem:[#allocation26 + $0xf48] sm:$0xff]
        %v2458 = vld [vmem:[#allocation26 + $0xf50] sm:$0xff]
        %v2459 = vld [vmem:[#allocation26 + $0xf58] sm:$0xff]
        %v2460 = vld [vmem:[#allocation26 + $0xf60] sm:$0xff]
        %v2461 = vld [vmem:[#allocation26 + $0xf68] sm:$0xff]
        %v2462 = vld [vmem:[#allocation26 + $0xf70] sm:$0xff]
        %v2463 = vld [vmem:[#allocation26 + $0xf78] sm:$0xff]
        %v2464 = vld [vmem:[#allocation26 + $0xf80] sm:$0xff]
        %v2465 = vld [vmem:[#allocation26 + $0xf88] sm:$0xff]
        %v2466 = vld [vmem:[#allocation26 + $0xf90] sm:$0xff]
        %v2467 = vld [vmem:[#allocation26 + $0xf98] sm:$0xff]
        %v2468 = vld [vmem:[#allocation26 + $0xfa0] sm:$0xff]
        %v2469 = vld [vmem:[#allocation26 + $0xfa8] sm:$0xff]
        %v2470 = vld [vmem:[#allocation26 + $0xfb0] sm:$0xff]
        %v2471 = vld [vmem:[#allocation26 + $0xfb8] sm:$0xff]
        %v2472 = vld [vmem:[#allocation26 + $0xfc0] sm:$0xff]
        %v2473 = vld [vmem:[#allocation26 + $0xfc8] sm:$0xff]
        %v2474 = vld [vmem:[#allocation26 + $0xfd0] sm:$0xff]
        %v2475 = vld [vmem:[#allocation26 + $0xfd8] sm:$0xff]
        %v2476 = vld [vmem:[#allocation26 + $0xfe0] sm:$0xff]
        %v2477 = vld [vmem:[#allocation26 + $0xfe8] sm:$0xff]
        %v2478 = vld [vmem:[#allocation26 + $0xff0] sm:$0xff]
        %v2479 = vld [vmem:[#allocation26 + $0xff8] sm:$0xff]
        %v2480 = vld [vmem:[#allocation28] sm:$0xff]
        %v2481 = vld [vmem:[#allocation28 + $0x8] sm:$0xff]
        %v2482 = vld [vmem:[#allocation28 + $0x10] sm:$0xff]
        %v2483 = vld [vmem:[#allocation28 + $0x18] sm:$0xff]
        %v2996 = vunpack.c.l.b16 %v1968
        %v2997 = vunpack.c.h.b16 %v1968
        %v2998 = vunpack.c.l.b16 %v1969
        %v2999 = vunpack.c.h.b16 %v1969
        %v3000 = vunpack.c.l.b16 %v1970
        %v3001 = vunpack.c.h.b16 %v1970
        %v3002 = vunpack.c.l.b16 %v1971
        %v3003 = vunpack.c.h.b16 %v1971
        %v3004 = vunpack.c.l.b16 %v1972
        %v3005 = vunpack.c.h.b16 %v1972
        %v3006 = vunpack.c.l.b16 %v1973
        %v3007 = vunpack.c.h.b16 %v1973
        %v3008 = vunpack.c.l.b16 %v1974
        %v3009 = vunpack.c.h.b16 %v1974
        %v3010 = vunpack.c.l.b16 %v1975
        %v3011 = vunpack.c.h.b16 %v1975
        %v3012 = vunpack.c.l.b16 %v1976
        %v3013 = vunpack.c.h.b16 %v1976
        %v3014 = vunpack.c.l.b16 %v1977
        %v3015 = vunpack.c.h.b16 %v1977
        %v3016 = vunpack.c.l.b16 %v1978
        %v3017 = vunpack.c.h.b16 %v1978
        %v3018 = vunpack.c.l.b16 %v1979
        %v3019 = vunpack.c.h.b16 %v1979
        %v3020 = vunpack.c.l.b16 %v1980
        %v3021 = vunpack.c.h.b16 %v1980
        %v3022 = vunpack.c.l.b16 %v1981
        %v3023 = vunpack.c.h.b16 %v1981
        %v3024 = vunpack.c.l.b16 %v1982
        %v3025 = vunpack.c.h.b16 %v1982
        %v3026 = vunpack.c.l.b16 %v1983
        %v3027 = vunpack.c.h.b16 %v1983
        %v3028 = vunpack.c.l.b16 %v1984
        %v3029 = vunpack.c.h.b16 %v1984
        %v3030 = vunpack.c.l.b16 %v1985
        %v3031 = vunpack.c.h.b16 %v1985
        %v3032 = vunpack.c.l.b16 %v1986
        %v3033 = vunpack.c.h.b16 %v1986
        %v3034 = vunpack.c.l.b16 %v1987
        %v3035 = vunpack.c.h.b16 %v1987
        %v3036 = vunpack.c.l.b16 %v1988
        %v3037 = vunpack.c.h.b16 %v1988
        %v3038 = vunpack.c.l.b16 %v1989
        %v3039 = vunpack.c.h.b16 %v1989
        %v3040 = vunpack.c.l.b16 %v1990
        %v3041 = vunpack.c.h.b16 %v1990
        %v3042 = vunpack.c.l.b16 %v1991
        %v3043 = vunpack.c.h.b16 %v1991
        %v3044 = vunpack.c.l.b16 %v1992
        %v3045 = vunpack.c.h.b16 %v1992
        %v3046 = vunpack.c.l.b16 %v1993
        %v3047 = vunpack.c.h.b16 %v1993
        %v3048 = vunpack.c.l.b16 %v1994
        %v3049 = vunpack.c.h.b16 %v1994
        %v3050 = vunpack.c.l.b16 %v1995
        %v3051 = vunpack.c.h.b16 %v1995
        %v3052 = vunpack.c.l.b16 %v1996
        %v3053 = vunpack.c.h.b16 %v1996
        %v3054 = vunpack.c.l.b16 %v1997
        %v3055 = vunpack.c.h.b16 %v1997
        %v3056 = vunpack.c.l.b16 %v1998
        %v3057 = vunpack.c.h.b16 %v1998
        %v3058 = vunpack.c.l.b16 %v1999
        %v3059 = vunpack.c.h.b16 %v1999
        %v3060 = vunpack.c.l.b16 %v2000
        %v3061 = vunpack.c.h.b16 %v2000
        %v3062 = vunpack.c.l.b16 %v2001
        %v3063 = vunpack.c.h.b16 %v2001
        %v3064 = vunpack.c.l.b16 %v2002
        %v3065 = vunpack.c.h.b16 %v2002
        %v3066 = vunpack.c.l.b16 %v2003
        %v3067 = vunpack.c.h.b16 %v2003
        %v3068 = vunpack.c.l.b16 %v2004
        %v3069 = vunpack.c.h.b16 %v2004
        %v3070 = vunpack.c.l.b16 %v2005
        %v3071 = vunpack.c.h.b16 %v2005
        %v3072 = vunpack.c.l.b16 %v2006
        %v3073 = vunpack.c.h.b16 %v2006
        %v3074 = vunpack.c.l.b16 %v2007
        %v3075 = vunpack.c.h.b16 %v2007
        %v3076 = vunpack.c.l.b16 %v2008
        %v3077 = vunpack.c.h.b16 %v2008
        %v3078 = vunpack.c.l.b16 %v2009
        %v3079 = vunpack.c.h.b16 %v2009
        %v3080 = vunpack.c.l.b16 %v2010
        %v3081 = vunpack.c.h.b16 %v2010
        %v3082 = vunpack.c.l.b16 %v2011
        %v3083 = vunpack.c.h.b16 %v2011
        %v3084 = vunpack.c.l.b16 %v2012
        %v3085 = vunpack.c.h.b16 %v2012
        %v3086 = vunpack.c.l.b16 %v2013
        %v3087 = vunpack.c.h.b16 %v2013
        %v3088 = vunpack.c.l.b16 %v2014
        %v3089 = vunpack.c.h.b16 %v2014
        %v3090 = vunpack.c.l.b16 %v2015
        %v3091 = vunpack.c.h.b16 %v2015
        %v3092 = vunpack.c.l.b16 %v2016
        %v3093 = vunpack.c.h.b16 %v2016
        %v3094 = vunpack.c.l.b16 %v2017
        %v3095 = vunpack.c.h.b16 %v2017
        %v3096 = vunpack.c.l.b16 %v2018
        %v3097 = vunpack.c.h.b16 %v2018
        %v3098 = vunpack.c.l.b16 %v2019
        %v3099 = vunpack.c.h.b16 %v2019
        %v3100 = vunpack.c.l.b16 %v2020
        %v3101 = vunpack.c.h.b16 %v2020
        %v3102 = vunpack.c.l.b16 %v2021
        %v3103 = vunpack.c.h.b16 %v2021
        %v3104 = vunpack.c.l.b16 %v2022
        %v3105 = vunpack.c.h.b16 %v2022
        %v3106 = vunpack.c.l.b16 %v2023
        %v3107 = vunpack.c.h.b16 %v2023
        %v3108 = vunpack.c.l.b16 %v2024
        %v3109 = vunpack.c.h.b16 %v2024
        %v3110 = vunpack.c.l.b16 %v2025
        %v3111 = vunpack.c.h.b16 %v2025
        %v3112 = vunpack.c.l.b16 %v2026
        %v3113 = vunpack.c.h.b16 %v2026
        %v3114 = vunpack.c.l.b16 %v2027
        %v3115 = vunpack.c.h.b16 %v2027
        %v3116 = vunpack.c.l.b16 %v2028
        %v3117 = vunpack.c.h.b16 %v2028
        %v3118 = vunpack.c.l.b16 %v2029
        %v3119 = vunpack.c.h.b16 %v2029
        %v3120 = vunpack.c.l.b16 %v2030
        %v3121 = vunpack.c.h.b16 %v2030
        %v3122 = vunpack.c.l.b16 %v2031
        %v3123 = vunpack.c.h.b16 %v2031
        %v3124 = vunpack.c.l.b16 %v2032
        %v3125 = vunpack.c.h.b16 %v2032
        %v3126 = vunpack.c.l.b16 %v2033
        %v3127 = vunpack.c.h.b16 %v2033
        %v3128 = vunpack.c.l.b16 %v2034
        %v3129 = vunpack.c.h.b16 %v2034
        %v3130 = vunpack.c.l.b16 %v2035
        %v3131 = vunpack.c.h.b16 %v2035
        %v3132 = vunpack.c.l.b16 %v2036
        %v3133 = vunpack.c.h.b16 %v2036
        %v3134 = vunpack.c.l.b16 %v2037
        %v3135 = vunpack.c.h.b16 %v2037
        %v3136 = vunpack.c.l.b16 %v2038
        %v3137 = vunpack.c.h.b16 %v2038
        %v3138 = vunpack.c.l.b16 %v2039
        %v3139 = vunpack.c.h.b16 %v2039
        %v3140 = vunpack.c.l.b16 %v2040
        %v3141 = vunpack.c.h.b16 %v2040
        %v3142 = vunpack.c.l.b16 %v2041
        %v3143 = vunpack.c.h.b16 %v2041
        %v3144 = vunpack.c.l.b16 %v2042
        %v3145 = vunpack.c.h.b16 %v2042
        %v3146 = vunpack.c.l.b16 %v2043
        %v3147 = vunpack.c.h.b16 %v2043
        %v3148 = vunpack.c.l.b16 %v2044
        %v3149 = vunpack.c.h.b16 %v2044
        %v3150 = vunpack.c.l.b16 %v2045
        %v3151 = vunpack.c.h.b16 %v2045
        %v3152 = vunpack.c.l.b16 %v2046
        %v3153 = vunpack.c.h.b16 %v2046
        %v3154 = vunpack.c.l.b16 %v2047
        %v3155 = vunpack.c.h.b16 %v2047
        %v3156 = vunpack.c.l.b16 %v2048
        %v3157 = vunpack.c.h.b16 %v2048
        %v3158 = vunpack.c.l.b16 %v2049
        %v3159 = vunpack.c.h.b16 %v2049
        %v3160 = vunpack.c.l.b16 %v2050
        %v3161 = vunpack.c.h.b16 %v2050
        %v3162 = vunpack.c.l.b16 %v2051
        %v3163 = vunpack.c.h.b16 %v2051
        %v3164 = vunpack.c.l.b16 %v2052
        %v3165 = vunpack.c.h.b16 %v2052
        %v3166 = vunpack.c.l.b16 %v2053
        %v3167 = vunpack.c.h.b16 %v2053
        %v3168 = vunpack.c.l.b16 %v2054
        %v3169 = vunpack.c.h.b16 %v2054
        %v3170 = vunpack.c.l.b16 %v2055
        %v3171 = vunpack.c.h.b16 %v2055
        %v3172 = vunpack.c.l.b16 %v2056
        %v3173 = vunpack.c.h.b16 %v2056
        %v3174 = vunpack.c.l.b16 %v2057
        %v3175 = vunpack.c.h.b16 %v2057
        %v3176 = vunpack.c.l.b16 %v2058
        %v3177 = vunpack.c.h.b16 %v2058
        %v3178 = vunpack.c.l.b16 %v2059
        %v3179 = vunpack.c.h.b16 %v2059
        %v3180 = vunpack.c.l.b16 %v2060
        %v3181 = vunpack.c.h.b16 %v2060
        %v3182 = vunpack.c.l.b16 %v2061
        %v3183 = vunpack.c.h.b16 %v2061
        %v3184 = vunpack.c.l.b16 %v2062
        %v3185 = vunpack.c.h.b16 %v2062
        %v3186 = vunpack.c.l.b16 %v2063
        %v3187 = vunpack.c.h.b16 %v2063
        %v3188 = vunpack.c.l.b16 %v2064
        %v3189 = vunpack.c.h.b16 %v2064
        %v3190 = vunpack.c.l.b16 %v2065
        %v3191 = vunpack.c.h.b16 %v2065
        %v3192 = vunpack.c.l.b16 %v2066
        %v3193 = vunpack.c.h.b16 %v2066
        %v3194 = vunpack.c.l.b16 %v2067
        %v3195 = vunpack.c.h.b16 %v2067
        %v3196 = vunpack.c.l.b16 %v2068
        %v3197 = vunpack.c.h.b16 %v2068
        %v3198 = vunpack.c.l.b16 %v2069
        %v3199 = vunpack.c.h.b16 %v2069
        %v3200 = vunpack.c.l.b16 %v2070
        %v3201 = vunpack.c.h.b16 %v2070
        %v3202 = vunpack.c.l.b16 %v2071
        %v3203 = vunpack.c.h.b16 %v2071
        %v3204 = vunpack.c.l.b16 %v2072
        %v3205 = vunpack.c.h.b16 %v2072
        %v3206 = vunpack.c.l.b16 %v2073
        %v3207 = vunpack.c.h.b16 %v2073
        %v3208 = vunpack.c.l.b16 %v2074
        %v3209 = vunpack.c.h.b16 %v2074
        %v3210 = vunpack.c.l.b16 %v2075
        %v3211 = vunpack.c.h.b16 %v2075
        %v3212 = vunpack.c.l.b16 %v2076
        %v3213 = vunpack.c.h.b16 %v2076
        %v3214 = vunpack.c.l.b16 %v2077
        %v3215 = vunpack.c.h.b16 %v2077
        %v3216 = vunpack.c.l.b16 %v2078
        %v3217 = vunpack.c.h.b16 %v2078
        %v3218 = vunpack.c.l.b16 %v2079
        %v3219 = vunpack.c.h.b16 %v2079
        %v3220 = vunpack.c.l.b16 %v2080
        %v3221 = vunpack.c.h.b16 %v2080
        %v3222 = vunpack.c.l.b16 %v2081
        %v3223 = vunpack.c.h.b16 %v2081
        %v3224 = vunpack.c.l.b16 %v2082
        %v3225 = vunpack.c.h.b16 %v2082
        %v3226 = vunpack.c.l.b16 %v2083
        %v3227 = vunpack.c.h.b16 %v2083
        %v3228 = vunpack.c.l.b16 %v2084
        %v3229 = vunpack.c.h.b16 %v2084
        %v3230 = vunpack.c.l.b16 %v2085
        %v3231 = vunpack.c.h.b16 %v2085
        %v3232 = vunpack.c.l.b16 %v2086
        %v3233 = vunpack.c.h.b16 %v2086
        %v3234 = vunpack.c.l.b16 %v2087
        %v3235 = vunpack.c.h.b16 %v2087
        %v3236 = vunpack.c.l.b16 %v2088
        %v3237 = vunpack.c.h.b16 %v2088
        %v3238 = vunpack.c.l.b16 %v2089
        %v3239 = vunpack.c.h.b16 %v2089
        %v3240 = vunpack.c.l.b16 %v2090
        %v3241 = vunpack.c.h.b16 %v2090
        %v3242 = vunpack.c.l.b16 %v2091
        %v3243 = vunpack.c.h.b16 %v2091
        %v3244 = vunpack.c.l.b16 %v2092
        %v3245 = vunpack.c.h.b16 %v2092
        %v3246 = vunpack.c.l.b16 %v2093
        %v3247 = vunpack.c.h.b16 %v2093
        %v3248 = vunpack.c.l.b16 %v2094
        %v3249 = vunpack.c.h.b16 %v2094
        %v3250 = vunpack.c.l.b16 %v2095
        %v3251 = vunpack.c.h.b16 %v2095
        %v3252 = vunpack.c.l.b16 %v2096
        %v3253 = vunpack.c.h.b16 %v2096
        %v3254 = vunpack.c.l.b16 %v2097
        %v3255 = vunpack.c.h.b16 %v2097
        %v3256 = vunpack.c.l.b16 %v2098
        %v3257 = vunpack.c.h.b16 %v2098
        %v3258 = vunpack.c.l.b16 %v2099
        %v3259 = vunpack.c.h.b16 %v2099
        %v3260 = vunpack.c.l.b16 %v2100
        %v3261 = vunpack.c.h.b16 %v2100
        %v3262 = vunpack.c.l.b16 %v2101
        %v3263 = vunpack.c.h.b16 %v2101
        %v3264 = vunpack.c.l.b16 %v2102
        %v3265 = vunpack.c.h.b16 %v2102
        %v3266 = vunpack.c.l.b16 %v2103
        %v3267 = vunpack.c.h.b16 %v2103
        %v3268 = vunpack.c.l.b16 %v2104
        %v3269 = vunpack.c.h.b16 %v2104
        %v3270 = vunpack.c.l.b16 %v2105
        %v3271 = vunpack.c.h.b16 %v2105
        %v3272 = vunpack.c.l.b16 %v2106
        %v3273 = vunpack.c.h.b16 %v2106
        %v3274 = vunpack.c.l.b16 %v2107
        %v3275 = vunpack.c.h.b16 %v2107
        %v3276 = vunpack.c.l.b16 %v2108
        %v3277 = vunpack.c.h.b16 %v2108
        %v3278 = vunpack.c.l.b16 %v2109
        %v3279 = vunpack.c.h.b16 %v2109
        %v3280 = vunpack.c.l.b16 %v2110
        %v3281 = vunpack.c.h.b16 %v2110
        %v3282 = vunpack.c.l.b16 %v2111
        %v3283 = vunpack.c.h.b16 %v2111
        %v3284 = vunpack.c.l.b16 %v2112
        %v3285 = vunpack.c.h.b16 %v2112
        %v3286 = vunpack.c.l.b16 %v2113
        %v3287 = vunpack.c.h.b16 %v2113
        %v3288 = vunpack.c.l.b16 %v2114
        %v3289 = vunpack.c.h.b16 %v2114
        %v3290 = vunpack.c.l.b16 %v2115
        %v3291 = vunpack.c.h.b16 %v2115
        %v3292 = vunpack.c.l.b16 %v2116
        %v3293 = vunpack.c.h.b16 %v2116
        %v3294 = vunpack.c.l.b16 %v2117
        %v3295 = vunpack.c.h.b16 %v2117
        %v3296 = vunpack.c.l.b16 %v2118
        %v3297 = vunpack.c.h.b16 %v2118
        %v3298 = vunpack.c.l.b16 %v2119
        %v3299 = vunpack.c.h.b16 %v2119
        %v3300 = vunpack.c.l.b16 %v2120
        %v3301 = vunpack.c.h.b16 %v2120
        %v3302 = vunpack.c.l.b16 %v2121
        %v3303 = vunpack.c.h.b16 %v2121
        %v3304 = vunpack.c.l.b16 %v2122
        %v3305 = vunpack.c.h.b16 %v2122
        %v3306 = vunpack.c.l.b16 %v2123
        %v3307 = vunpack.c.h.b16 %v2123
        %v3308 = vunpack.c.l.b16 %v2124
        %v3309 = vunpack.c.h.b16 %v2124
        %v3310 = vunpack.c.l.b16 %v2125
        %v3311 = vunpack.c.h.b16 %v2125
        %v3312 = vunpack.c.l.b16 %v2126
        %v3313 = vunpack.c.h.b16 %v2126
        %v3314 = vunpack.c.l.b16 %v2127
        %v3315 = vunpack.c.h.b16 %v2127
        %v3316 = vunpack.c.l.b16 %v2128
        %v3317 = vunpack.c.h.b16 %v2128
        %v3318 = vunpack.c.l.b16 %v2129
        %v3319 = vunpack.c.h.b16 %v2129
        %v3320 = vunpack.c.l.b16 %v2130
        %v3321 = vunpack.c.h.b16 %v2130
        %v3322 = vunpack.c.l.b16 %v2131
        %v3323 = vunpack.c.h.b16 %v2131
        %v3324 = vunpack.c.l.b16 %v2132
        %v3325 = vunpack.c.h.b16 %v2132
        %v3326 = vunpack.c.l.b16 %v2133
        %v3327 = vunpack.c.h.b16 %v2133
        %v3328 = vunpack.c.l.b16 %v2134
        %v3329 = vunpack.c.h.b16 %v2134
        %v3330 = vunpack.c.l.b16 %v2135
        %v3331 = vunpack.c.h.b16 %v2135
        %v3332 = vunpack.c.l.b16 %v2136
        %v3333 = vunpack.c.h.b16 %v2136
        %v3334 = vunpack.c.l.b16 %v2137
        %v3335 = vunpack.c.h.b16 %v2137
        %v3336 = vunpack.c.l.b16 %v2138
        %v3337 = vunpack.c.h.b16 %v2138
        %v3338 = vunpack.c.l.b16 %v2139
        %v3339 = vunpack.c.h.b16 %v2139
        %v3340 = vunpack.c.l.b16 %v2140
        %v3341 = vunpack.c.h.b16 %v2140
        %v3342 = vunpack.c.l.b16 %v2141
        %v3343 = vunpack.c.h.b16 %v2141
        %v3344 = vunpack.c.l.b16 %v2142
        %v3345 = vunpack.c.h.b16 %v2142
        %v3346 = vunpack.c.l.b16 %v2143
        %v3347 = vunpack.c.h.b16 %v2143
        %v3348 = vunpack.c.l.b16 %v2144
        %v3349 = vunpack.c.h.b16 %v2144
        %v3350 = vunpack.c.l.b16 %v2145
        %v3351 = vunpack.c.h.b16 %v2145
        %v3352 = vunpack.c.l.b16 %v2146
        %v3353 = vunpack.c.h.b16 %v2146
        %v3354 = vunpack.c.l.b16 %v2147
        %v3355 = vunpack.c.h.b16 %v2147
        %v3356 = vunpack.c.l.b16 %v2148
        %v3357 = vunpack.c.h.b16 %v2148
        %v3358 = vunpack.c.l.b16 %v2149
        %v3359 = vunpack.c.h.b16 %v2149
        %v3360 = vunpack.c.l.b16 %v2150
        %v3361 = vunpack.c.h.b16 %v2150
        %v3362 = vunpack.c.l.b16 %v2151
        %v3363 = vunpack.c.h.b16 %v2151
        %v3364 = vunpack.c.l.b16 %v2152
        %v3365 = vunpack.c.h.b16 %v2152
        %v3366 = vunpack.c.l.b16 %v2153
        %v3367 = vunpack.c.h.b16 %v2153
        %v3368 = vunpack.c.l.b16 %v2154
        %v3369 = vunpack.c.h.b16 %v2154
        %v3370 = vunpack.c.l.b16 %v2155
        %v3371 = vunpack.c.h.b16 %v2155
        %v3372 = vunpack.c.l.b16 %v2156
        %v3373 = vunpack.c.h.b16 %v2156
        %v3374 = vunpack.c.l.b16 %v2157
        %v3375 = vunpack.c.h.b16 %v2157
        %v3376 = vunpack.c.l.b16 %v2158
        %v3377 = vunpack.c.h.b16 %v2158
        %v3378 = vunpack.c.l.b16 %v2159
        %v3379 = vunpack.c.h.b16 %v2159
        %v3380 = vunpack.c.l.b16 %v2160
        %v3381 = vunpack.c.h.b16 %v2160
        %v3382 = vunpack.c.l.b16 %v2161
        %v3383 = vunpack.c.h.b16 %v2161
        %v3384 = vunpack.c.l.b16 %v2162
        %v3385 = vunpack.c.h.b16 %v2162
        %v3386 = vunpack.c.l.b16 %v2163
        %v3387 = vunpack.c.h.b16 %v2163
        %v3388 = vunpack.c.l.b16 %v2164
        %v3389 = vunpack.c.h.b16 %v2164
        %v3390 = vunpack.c.l.b16 %v2165
        %v3391 = vunpack.c.h.b16 %v2165
        %v3392 = vunpack.c.l.b16 %v2166
        %v3393 = vunpack.c.h.b16 %v2166
        %v3394 = vunpack.c.l.b16 %v2167
        %v3395 = vunpack.c.h.b16 %v2167
        %v3396 = vunpack.c.l.b16 %v2168
        %v3397 = vunpack.c.h.b16 %v2168
        %v3398 = vunpack.c.l.b16 %v2169
        %v3399 = vunpack.c.h.b16 %v2169
        %v3400 = vunpack.c.l.b16 %v2170
        %v3401 = vunpack.c.h.b16 %v2170
        %v3402 = vunpack.c.l.b16 %v2171
        %v3403 = vunpack.c.h.b16 %v2171
        %v3404 = vunpack.c.l.b16 %v2172
        %v3405 = vunpack.c.h.b16 %v2172
        %v3406 = vunpack.c.l.b16 %v2173
        %v3407 = vunpack.c.h.b16 %v2173
        %v3408 = vunpack.c.l.b16 %v2174
        %v3409 = vunpack.c.h.b16 %v2174
        %v3410 = vunpack.c.l.b16 %v2175
        %v3411 = vunpack.c.h.b16 %v2175
        %v3412 = vunpack.c.l.b16 %v2176
        %v3413 = vunpack.c.h.b16 %v2176
        %v3414 = vunpack.c.l.b16 %v2177
        %v3415 = vunpack.c.h.b16 %v2177
        %v3416 = vunpack.c.l.b16 %v2178
        %v3417 = vunpack.c.h.b16 %v2178
        %v3418 = vunpack.c.l.b16 %v2179
        %v3419 = vunpack.c.h.b16 %v2179
        %v3420 = vunpack.c.l.b16 %v2180
        %v3421 = vunpack.c.h.b16 %v2180
        %v3422 = vunpack.c.l.b16 %v2181
        %v3423 = vunpack.c.h.b16 %v2181
        %v3424 = vunpack.c.l.b16 %v2182
        %v3425 = vunpack.c.h.b16 %v2182
        %v3426 = vunpack.c.l.b16 %v2183
        %v3427 = vunpack.c.h.b16 %v2183
        %v3428 = vunpack.c.l.b16 %v2184
        %v3429 = vunpack.c.h.b16 %v2184
        %v3430 = vunpack.c.l.b16 %v2185
        %v3431 = vunpack.c.h.b16 %v2185
        %v3432 = vunpack.c.l.b16 %v2186
        %v3433 = vunpack.c.h.b16 %v2186
        %v3434 = vunpack.c.l.b16 %v2187
        %v3435 = vunpack.c.h.b16 %v2187
        %v3436 = vunpack.c.l.b16 %v2188
        %v3437 = vunpack.c.h.b16 %v2188
        %v3438 = vunpack.c.l.b16 %v2189
        %v3439 = vunpack.c.h.b16 %v2189
        %v3440 = vunpack.c.l.b16 %v2190
        %v3441 = vunpack.c.h.b16 %v2190
        %v3442 = vunpack.c.l.b16 %v2191
        %v3443 = vunpack.c.h.b16 %v2191
        %v3444 = vunpack.c.l.b16 %v2192
        %v3445 = vunpack.c.h.b16 %v2192
        %v3446 = vunpack.c.l.b16 %v2193
        %v3447 = vunpack.c.h.b16 %v2193
        %v3448 = vunpack.c.l.b16 %v2194
        %v3449 = vunpack.c.h.b16 %v2194
        %v3450 = vunpack.c.l.b16 %v2195
        %v3451 = vunpack.c.h.b16 %v2195
        %v3452 = vunpack.c.l.b16 %v2196
        %v3453 = vunpack.c.h.b16 %v2196
        %v3454 = vunpack.c.l.b16 %v2197
        %v3455 = vunpack.c.h.b16 %v2197
        %v3456 = vunpack.c.l.b16 %v2198
        %v3457 = vunpack.c.h.b16 %v2198
        %v3458 = vunpack.c.l.b16 %v2199
        %v3459 = vunpack.c.h.b16 %v2199
        %v3460 = vunpack.c.l.b16 %v2200
        %v3461 = vunpack.c.h.b16 %v2200
        %v3462 = vunpack.c.l.b16 %v2201
        %v3463 = vunpack.c.h.b16 %v2201
        %v3464 = vunpack.c.l.b16 %v2202
        %v3465 = vunpack.c.h.b16 %v2202
        %v3466 = vunpack.c.l.b16 %v2203
        %v3467 = vunpack.c.h.b16 %v2203
        %v3468 = vunpack.c.l.b16 %v2204
        %v3469 = vunpack.c.h.b16 %v2204
        %v3470 = vunpack.c.l.b16 %v2205
        %v3471 = vunpack.c.h.b16 %v2205
        %v3472 = vunpack.c.l.b16 %v2206
        %v3473 = vunpack.c.h.b16 %v2206
        %v3474 = vunpack.c.l.b16 %v2207
        %v3475 = vunpack.c.h.b16 %v2207
        %v3476 = vunpack.c.l.b16 %v2208
        %v3477 = vunpack.c.h.b16 %v2208
        %v3478 = vunpack.c.l.b16 %v2209
        %v3479 = vunpack.c.h.b16 %v2209
        %v3480 = vunpack.c.l.b16 %v2210
        %v3481 = vunpack.c.h.b16 %v2210
        %v3482 = vunpack.c.l.b16 %v2211
        %v3483 = vunpack.c.h.b16 %v2211
        %v3484 = vunpack.c.l.b16 %v2212
        %v3485 = vunpack.c.h.b16 %v2212
        %v3486 = vunpack.c.l.b16 %v2213
        %v3487 = vunpack.c.h.b16 %v2213
        %v3488 = vunpack.c.l.b16 %v2214
        %v3489 = vunpack.c.h.b16 %v2214
        %v3490 = vunpack.c.l.b16 %v2215
        %v3491 = vunpack.c.h.b16 %v2215
        %v3492 = vunpack.c.l.b16 %v2216
        %v3493 = vunpack.c.h.b16 %v2216
        %v3494 = vunpack.c.l.b16 %v2217
        %v3495 = vunpack.c.h.b16 %v2217
        %v3496 = vunpack.c.l.b16 %v2218
        %v3497 = vunpack.c.h.b16 %v2218
        %v3498 = vunpack.c.l.b16 %v2219
        %v3499 = vunpack.c.h.b16 %v2219
        %v3500 = vunpack.c.l.b16 %v2220
        %v3501 = vunpack.c.h.b16 %v2220
        %v3502 = vunpack.c.l.b16 %v2221
        %v3503 = vunpack.c.h.b16 %v2221
        %v3504 = vunpack.c.l.b16 %v2222
        %v3505 = vunpack.c.h.b16 %v2222
        %v3506 = vunpack.c.l.b16 %v2223
        %v3507 = vunpack.c.h.b16 %v2223
        %v3508 = vunpack.c.l.b16 %v2224
        %v3509 = vunpack.c.h.b16 %v2224
        %v3510 = vunpack.c.l.b16 %v2225
        %v3511 = vunpack.c.h.b16 %v2225
        %v3512 = vunpack.c.l.b16 %v2226
        %v3513 = vunpack.c.h.b16 %v2226
        %v3514 = vunpack.c.l.b16 %v2227
        %v3515 = vunpack.c.h.b16 %v2227
        %v3516 = vunpack.c.l.b16 %v2228
        %v3517 = vunpack.c.h.b16 %v2228
        %v3518 = vunpack.c.l.b16 %v2229
        %v3519 = vunpack.c.h.b16 %v2229
        %v3520 = vunpack.c.l.b16 %v2230
        %v3521 = vunpack.c.h.b16 %v2230
        %v3522 = vunpack.c.l.b16 %v2231
        %v3523 = vunpack.c.h.b16 %v2231
        %v3524 = vunpack.c.l.b16 %v2232
        %v3525 = vunpack.c.h.b16 %v2232
        %v3526 = vunpack.c.l.b16 %v2233
        %v3527 = vunpack.c.h.b16 %v2233
        %v3528 = vunpack.c.l.b16 %v2234
        %v3529 = vunpack.c.h.b16 %v2234
        %v3530 = vunpack.c.l.b16 %v2235
        %v3531 = vunpack.c.h.b16 %v2235
        %v3532 = vunpack.c.l.b16 %v2236
        %v3533 = vunpack.c.h.b16 %v2236
        %v3534 = vunpack.c.l.b16 %v2237
        %v3535 = vunpack.c.h.b16 %v2237
        %v3536 = vunpack.c.l.b16 %v2238
        %v3537 = vunpack.c.h.b16 %v2238
        %v3538 = vunpack.c.l.b16 %v2239
        %v3539 = vunpack.c.h.b16 %v2239
        %v3540 = vunpack.c.l.b16 %v2240
        %v3541 = vunpack.c.h.b16 %v2240
        %v3542 = vunpack.c.l.b16 %v2241
        %v3543 = vunpack.c.h.b16 %v2241
        %v3544 = vunpack.c.l.b16 %v2242
        %v3545 = vunpack.c.h.b16 %v2242
        %v3546 = vunpack.c.l.b16 %v2243
        %v3547 = vunpack.c.h.b16 %v2243
        %v3548 = vunpack.c.l.b16 %v2244
        %v3549 = vunpack.c.h.b16 %v2244
        %v3550 = vunpack.c.l.b16 %v2245
        %v3551 = vunpack.c.h.b16 %v2245
        %v3552 = vunpack.c.l.b16 %v2246
        %v3553 = vunpack.c.h.b16 %v2246
        %v3554 = vunpack.c.l.b16 %v2247
        %v3555 = vunpack.c.h.b16 %v2247
        %v3556 = vunpack.c.l.b16 %v2248
        %v3557 = vunpack.c.h.b16 %v2248
        %v3558 = vunpack.c.l.b16 %v2249
        %v3559 = vunpack.c.h.b16 %v2249
        %v3560 = vunpack.c.l.b16 %v2250
        %v3561 = vunpack.c.h.b16 %v2250
        %v3562 = vunpack.c.l.b16 %v2251
        %v3563 = vunpack.c.h.b16 %v2251
        %v3564 = vunpack.c.l.b16 %v2252
        %v3565 = vunpack.c.h.b16 %v2252
        %v3566 = vunpack.c.l.b16 %v2253
        %v3567 = vunpack.c.h.b16 %v2253
        %v3568 = vunpack.c.l.b16 %v2254
        %v3569 = vunpack.c.h.b16 %v2254
        %v3570 = vunpack.c.l.b16 %v2255
        %v3571 = vunpack.c.h.b16 %v2255
        %v3572 = vunpack.c.l.b16 %v2256
        %v3573 = vunpack.c.h.b16 %v2256
        %v3574 = vunpack.c.l.b16 %v2257
        %v3575 = vunpack.c.h.b16 %v2257
        %v3576 = vunpack.c.l.b16 %v2258
        %v3577 = vunpack.c.h.b16 %v2258
        %v3578 = vunpack.c.l.b16 %v2259
        %v3579 = vunpack.c.h.b16 %v2259
        %v3580 = vunpack.c.l.b16 %v2260
        %v3581 = vunpack.c.h.b16 %v2260
        %v3582 = vunpack.c.l.b16 %v2261
        %v3583 = vunpack.c.h.b16 %v2261
        %v3584 = vunpack.c.l.b16 %v2262
        %v3585 = vunpack.c.h.b16 %v2262
        %v3586 = vunpack.c.l.b16 %v2263
        %v3587 = vunpack.c.h.b16 %v2263
        %v3588 = vunpack.c.l.b16 %v2264
        %v3589 = vunpack.c.h.b16 %v2264
        %v3590 = vunpack.c.l.b16 %v2265
        %v3591 = vunpack.c.h.b16 %v2265
        %v3592 = vunpack.c.l.b16 %v2266
        %v3593 = vunpack.c.h.b16 %v2266
        %v3594 = vunpack.c.l.b16 %v2267
        %v3595 = vunpack.c.h.b16 %v2267
        %v3596 = vunpack.c.l.b16 %v2268
        %v3597 = vunpack.c.h.b16 %v2268
        %v3598 = vunpack.c.l.b16 %v2269
        %v3599 = vunpack.c.h.b16 %v2269
        %v3600 = vunpack.c.l.b16 %v2270
        %v3601 = vunpack.c.h.b16 %v2270
        %v3602 = vunpack.c.l.b16 %v2271
        %v3603 = vunpack.c.h.b16 %v2271
        %v3604 = vunpack.c.l.b16 %v2272
        %v3605 = vunpack.c.h.b16 %v2272
        %v3606 = vunpack.c.l.b16 %v2273
        %v3607 = vunpack.c.h.b16 %v2273
        %v3608 = vunpack.c.l.b16 %v2274
        %v3609 = vunpack.c.h.b16 %v2274
        %v3610 = vunpack.c.l.b16 %v2275
        %v3611 = vunpack.c.h.b16 %v2275
        %v3612 = vunpack.c.l.b16 %v2276
        %v3613 = vunpack.c.h.b16 %v2276
        %v3614 = vunpack.c.l.b16 %v2277
        %v3615 = vunpack.c.h.b16 %v2277
        %v3616 = vunpack.c.l.b16 %v2278
        %v3617 = vunpack.c.h.b16 %v2278
        %v3618 = vunpack.c.l.b16 %v2279
        %v3619 = vunpack.c.h.b16 %v2279
        %v3620 = vunpack.c.l.b16 %v2280
        %v3621 = vunpack.c.h.b16 %v2280
        %v3622 = vunpack.c.l.b16 %v2281
        %v3623 = vunpack.c.h.b16 %v2281
        %v3624 = vunpack.c.l.b16 %v2282
        %v3625 = vunpack.c.h.b16 %v2282
        %v3626 = vunpack.c.l.b16 %v2283
        %v3627 = vunpack.c.h.b16 %v2283
        %v3628 = vunpack.c.l.b16 %v2284
        %v3629 = vunpack.c.h.b16 %v2284
        %v3630 = vunpack.c.l.b16 %v2285
        %v3631 = vunpack.c.h.b16 %v2285
        %v3632 = vunpack.c.l.b16 %v2286
        %v3633 = vunpack.c.h.b16 %v2286
        %v3634 = vunpack.c.l.b16 %v2287
        %v3635 = vunpack.c.h.b16 %v2287
        %v3636 = vunpack.c.l.b16 %v2288
        %v3637 = vunpack.c.h.b16 %v2288
        %v3638 = vunpack.c.l.b16 %v2289
        %v3639 = vunpack.c.h.b16 %v2289
        %v3640 = vunpack.c.l.b16 %v2290
        %v3641 = vunpack.c.h.b16 %v2290
        %v3642 = vunpack.c.l.b16 %v2291
        %v3643 = vunpack.c.h.b16 %v2291
        %v3644 = vunpack.c.l.b16 %v2292
        %v3645 = vunpack.c.h.b16 %v2292
        %v3646 = vunpack.c.l.b16 %v2293
        %v3647 = vunpack.c.h.b16 %v2293
        %v3648 = vunpack.c.l.b16 %v2294
        %v3649 = vunpack.c.h.b16 %v2294
        %v3650 = vunpack.c.l.b16 %v2295
        %v3651 = vunpack.c.h.b16 %v2295
        %v3652 = vunpack.c.l.b16 %v2296
        %v3653 = vunpack.c.h.b16 %v2296
        %v3654 = vunpack.c.l.b16 %v2297
        %v3655 = vunpack.c.h.b16 %v2297
        %v3656 = vunpack.c.l.b16 %v2298
        %v3657 = vunpack.c.h.b16 %v2298
        %v3658 = vunpack.c.l.b16 %v2299
        %v3659 = vunpack.c.h.b16 %v2299
        %v3660 = vunpack.c.l.b16 %v2300
        %v3661 = vunpack.c.h.b16 %v2300
        %v3662 = vunpack.c.l.b16 %v2301
        %v3663 = vunpack.c.h.b16 %v2301
        %v3664 = vunpack.c.l.b16 %v2302
        %v3665 = vunpack.c.h.b16 %v2302
        %v3666 = vunpack.c.l.b16 %v2303
        %v3667 = vunpack.c.h.b16 %v2303
        %v3668 = vunpack.c.l.b16 %v2304
        %v3669 = vunpack.c.h.b16 %v2304
        %v3670 = vunpack.c.l.b16 %v2305
        %v3671 = vunpack.c.h.b16 %v2305
        %v3672 = vunpack.c.l.b16 %v2306
        %v3673 = vunpack.c.h.b16 %v2306
        %v3674 = vunpack.c.l.b16 %v2307
        %v3675 = vunpack.c.h.b16 %v2307
        %v3676 = vunpack.c.l.b16 %v2308
        %v3677 = vunpack.c.h.b16 %v2308
        %v3678 = vunpack.c.l.b16 %v2309
        %v3679 = vunpack.c.h.b16 %v2309
        %v3680 = vunpack.c.l.b16 %v2310
        %v3681 = vunpack.c.h.b16 %v2310
        %v3682 = vunpack.c.l.b16 %v2311
        %v3683 = vunpack.c.h.b16 %v2311
        %v3684 = vunpack.c.l.b16 %v2312
        %v3685 = vunpack.c.h.b16 %v2312
        %v3686 = vunpack.c.l.b16 %v2313
        %v3687 = vunpack.c.h.b16 %v2313
        %v3688 = vunpack.c.l.b16 %v2314
        %v3689 = vunpack.c.h.b16 %v2314
        %v3690 = vunpack.c.l.b16 %v2315
        %v3691 = vunpack.c.h.b16 %v2315
        %v3692 = vunpack.c.l.b16 %v2316
        %v3693 = vunpack.c.h.b16 %v2316
        %v3694 = vunpack.c.l.b16 %v2317
        %v3695 = vunpack.c.h.b16 %v2317
        %v3696 = vunpack.c.l.b16 %v2318
        %v3697 = vunpack.c.h.b16 %v2318
        %v3698 = vunpack.c.l.b16 %v2319
        %v3699 = vunpack.c.h.b16 %v2319
        %v3700 = vunpack.c.l.b16 %v2320
        %v3701 = vunpack.c.h.b16 %v2320
        %v3702 = vunpack.c.l.b16 %v2321
        %v3703 = vunpack.c.h.b16 %v2321
        %v3704 = vunpack.c.l.b16 %v2322
        %v3705 = vunpack.c.h.b16 %v2322
        %v3706 = vunpack.c.l.b16 %v2323
        %v3707 = vunpack.c.h.b16 %v2323
        %v3708 = vunpack.c.l.b16 %v2324
        %v3709 = vunpack.c.h.b16 %v2324
        %v3710 = vunpack.c.l.b16 %v2325
        %v3711 = vunpack.c.h.b16 %v2325
        %v3712 = vunpack.c.l.b16 %v2326
        %v3713 = vunpack.c.h.b16 %v2326
        %v3714 = vunpack.c.l.b16 %v2327
        %v3715 = vunpack.c.h.b16 %v2327
        %v3716 = vunpack.c.l.b16 %v2328
        %v3717 = vunpack.c.h.b16 %v2328
        %v3718 = vunpack.c.l.b16 %v2329
        %v3719 = vunpack.c.h.b16 %v2329
        %v3720 = vunpack.c.l.b16 %v2330
        %v3721 = vunpack.c.h.b16 %v2330
        %v3722 = vunpack.c.l.b16 %v2331
        %v3723 = vunpack.c.h.b16 %v2331
        %v3724 = vunpack.c.l.b16 %v2332
        %v3725 = vunpack.c.h.b16 %v2332
        %v3726 = vunpack.c.l.b16 %v2333
        %v3727 = vunpack.c.h.b16 %v2333
        %v3728 = vunpack.c.l.b16 %v2334
        %v3729 = vunpack.c.h.b16 %v2334
        %v3730 = vunpack.c.l.b16 %v2335
        %v3731 = vunpack.c.h.b16 %v2335
        %v3732 = vunpack.c.l.b16 %v2336
        %v3733 = vunpack.c.h.b16 %v2336
        %v3734 = vunpack.c.l.b16 %v2337
        %v3735 = vunpack.c.h.b16 %v2337
        %v3736 = vunpack.c.l.b16 %v2338
        %v3737 = vunpack.c.h.b16 %v2338
        %v3738 = vunpack.c.l.b16 %v2339
        %v3739 = vunpack.c.h.b16 %v2339
        %v3740 = vunpack.c.l.b16 %v2340
        %v3741 = vunpack.c.h.b16 %v2340
        %v3742 = vunpack.c.l.b16 %v2341
        %v3743 = vunpack.c.h.b16 %v2341
        %v3744 = vunpack.c.l.b16 %v2342
        %v3745 = vunpack.c.h.b16 %v2342
        %v3746 = vunpack.c.l.b16 %v2343
        %v3747 = vunpack.c.h.b16 %v2343
        %v3748 = vunpack.c.l.b16 %v2344
        %v3749 = vunpack.c.h.b16 %v2344
        %v3750 = vunpack.c.l.b16 %v2345
        %v3751 = vunpack.c.h.b16 %v2345
        %v3752 = vunpack.c.l.b16 %v2346
        %v3753 = vunpack.c.h.b16 %v2346
        %v3754 = vunpack.c.l.b16 %v2347
        %v3755 = vunpack.c.h.b16 %v2347
        %v3756 = vunpack.c.l.b16 %v2348
        %v3757 = vunpack.c.h.b16 %v2348
        %v3758 = vunpack.c.l.b16 %v2349
        %v3759 = vunpack.c.h.b16 %v2349
        %v3760 = vunpack.c.l.b16 %v2350
        %v3761 = vunpack.c.h.b16 %v2350
        %v3762 = vunpack.c.l.b16 %v2351
        %v3763 = vunpack.c.h.b16 %v2351
        %v3764 = vunpack.c.l.b16 %v2352
        %v3765 = vunpack.c.h.b16 %v2352
        %v3766 = vunpack.c.l.b16 %v2353
        %v3767 = vunpack.c.h.b16 %v2353
        %v3768 = vunpack.c.l.b16 %v2354
        %v3769 = vunpack.c.h.b16 %v2354
        %v3770 = vunpack.c.l.b16 %v2355
        %v3771 = vunpack.c.h.b16 %v2355
        %v3772 = vunpack.c.l.b16 %v2356
        %v3773 = vunpack.c.h.b16 %v2356
        %v3774 = vunpack.c.l.b16 %v2357
        %v3775 = vunpack.c.h.b16 %v2357
        %v3776 = vunpack.c.l.b16 %v2358
        %v3777 = vunpack.c.h.b16 %v2358
        %v3778 = vunpack.c.l.b16 %v2359
        %v3779 = vunpack.c.h.b16 %v2359
        %v3780 = vunpack.c.l.b16 %v2360
        %v3781 = vunpack.c.h.b16 %v2360
        %v3782 = vunpack.c.l.b16 %v2361
        %v3783 = vunpack.c.h.b16 %v2361
        %v3784 = vunpack.c.l.b16 %v2362
        %v3785 = vunpack.c.h.b16 %v2362
        %v3786 = vunpack.c.l.b16 %v2363
        %v3787 = vunpack.c.h.b16 %v2363
        %v3788 = vunpack.c.l.b16 %v2364
        %v3789 = vunpack.c.h.b16 %v2364
        %v3790 = vunpack.c.l.b16 %v2365
        %v3791 = vunpack.c.h.b16 %v2365
        %v3792 = vunpack.c.l.b16 %v2366
        %v3793 = vunpack.c.h.b16 %v2366
        %v3794 = vunpack.c.l.b16 %v2367
        %v3795 = vunpack.c.h.b16 %v2367
        %v3796 = vunpack.c.l.b16 %v2368
        %v3797 = vunpack.c.h.b16 %v2368
        %v3798 = vunpack.c.l.b16 %v2369
        %v3799 = vunpack.c.h.b16 %v2369
        %v3800 = vunpack.c.l.b16 %v2370
        %v3801 = vunpack.c.h.b16 %v2370
        %v3802 = vunpack.c.l.b16 %v2371
        %v3803 = vunpack.c.h.b16 %v2371
        %v3804 = vunpack.c.l.b16 %v2372
        %v3805 = vunpack.c.h.b16 %v2372
        %v3806 = vunpack.c.l.b16 %v2373
        %v3807 = vunpack.c.h.b16 %v2373
        %v3808 = vunpack.c.l.b16 %v2374
        %v3809 = vunpack.c.h.b16 %v2374
        %v3810 = vunpack.c.l.b16 %v2375
        %v3811 = vunpack.c.h.b16 %v2375
        %v3812 = vunpack.c.l.b16 %v2376
        %v3813 = vunpack.c.h.b16 %v2376
        %v3814 = vunpack.c.l.b16 %v2377
        %v3815 = vunpack.c.h.b16 %v2377
        %v3816 = vunpack.c.l.b16 %v2378
        %v3817 = vunpack.c.h.b16 %v2378
        %v3818 = vunpack.c.l.b16 %v2379
        %v3819 = vunpack.c.h.b16 %v2379
        %v3820 = vunpack.c.l.b16 %v2380
        %v3821 = vunpack.c.h.b16 %v2380
        %v3822 = vunpack.c.l.b16 %v2381
        %v3823 = vunpack.c.h.b16 %v2381
        %v3824 = vunpack.c.l.b16 %v2382
        %v3825 = vunpack.c.h.b16 %v2382
        %v3826 = vunpack.c.l.b16 %v2383
        %v3827 = vunpack.c.h.b16 %v2383
        %v3828 = vunpack.c.l.b16 %v2384
        %v3829 = vunpack.c.h.b16 %v2384
        %v3830 = vunpack.c.l.b16 %v2385
        %v3831 = vunpack.c.h.b16 %v2385
        %v3832 = vunpack.c.l.b16 %v2386
        %v3833 = vunpack.c.h.b16 %v2386
        %v3834 = vunpack.c.l.b16 %v2387
        %v3835 = vunpack.c.h.b16 %v2387
        %v3836 = vunpack.c.l.b16 %v2388
        %v3837 = vunpack.c.h.b16 %v2388
        %v3838 = vunpack.c.l.b16 %v2389
        %v3839 = vunpack.c.h.b16 %v2389
        %v3840 = vunpack.c.l.b16 %v2390
        %v3841 = vunpack.c.h.b16 %v2390
        %v3842 = vunpack.c.l.b16 %v2391
        %v3843 = vunpack.c.h.b16 %v2391
        %v3844 = vunpack.c.l.b16 %v2392
        %v3845 = vunpack.c.h.b16 %v2392
        %v3846 = vunpack.c.l.b16 %v2393
        %v3847 = vunpack.c.h.b16 %v2393
        %v3848 = vunpack.c.l.b16 %v2394
        %v3849 = vunpack.c.h.b16 %v2394
        %v3850 = vunpack.c.l.b16 %v2395
        %v3851 = vunpack.c.h.b16 %v2395
        %v3852 = vunpack.c.l.b16 %v2396
        %v3853 = vunpack.c.h.b16 %v2396
        %v3854 = vunpack.c.l.b16 %v2397
        %v3855 = vunpack.c.h.b16 %v2397
        %v3856 = vunpack.c.l.b16 %v2398
        %v3857 = vunpack.c.h.b16 %v2398
        %v3858 = vunpack.c.l.b16 %v2399
        %v3859 = vunpack.c.h.b16 %v2399
        %v3860 = vunpack.c.l.b16 %v2400
        %v3861 = vunpack.c.h.b16 %v2400
        %v3862 = vunpack.c.l.b16 %v2401
        %v3863 = vunpack.c.h.b16 %v2401
        %v3864 = vunpack.c.l.b16 %v2402
        %v3865 = vunpack.c.h.b16 %v2402
        %v3866 = vunpack.c.l.b16 %v2403
        %v3867 = vunpack.c.h.b16 %v2403
        %v3868 = vunpack.c.l.b16 %v2404
        %v3869 = vunpack.c.h.b16 %v2404
        %v3870 = vunpack.c.l.b16 %v2405
        %v3871 = vunpack.c.h.b16 %v2405
        %v3872 = vunpack.c.l.b16 %v2406
        %v3873 = vunpack.c.h.b16 %v2406
        %v3874 = vunpack.c.l.b16 %v2407
        %v3875 = vunpack.c.h.b16 %v2407
        %v3876 = vunpack.c.l.b16 %v2408
        %v3877 = vunpack.c.h.b16 %v2408
        %v3878 = vunpack.c.l.b16 %v2409
        %v3879 = vunpack.c.h.b16 %v2409
        %v3880 = vunpack.c.l.b16 %v2410
        %v3881 = vunpack.c.h.b16 %v2410
        %v3882 = vunpack.c.l.b16 %v2411
        %v3883 = vunpack.c.h.b16 %v2411
        %v3884 = vunpack.c.l.b16 %v2412
        %v3885 = vunpack.c.h.b16 %v2412
        %v3886 = vunpack.c.l.b16 %v2413
        %v3887 = vunpack.c.h.b16 %v2413
        %v3888 = vunpack.c.l.b16 %v2414
        %v3889 = vunpack.c.h.b16 %v2414
        %v3890 = vunpack.c.l.b16 %v2415
        %v3891 = vunpack.c.h.b16 %v2415
        %v3892 = vunpack.c.l.b16 %v2416
        %v3893 = vunpack.c.h.b16 %v2416
        %v3894 = vunpack.c.l.b16 %v2417
        %v3895 = vunpack.c.h.b16 %v2417
        %v3896 = vunpack.c.l.b16 %v2418
        %v3897 = vunpack.c.h.b16 %v2418
        %v3898 = vunpack.c.l.b16 %v2419
        %v3899 = vunpack.c.h.b16 %v2419
        %v3900 = vunpack.c.l.b16 %v2420
        %v3901 = vunpack.c.h.b16 %v2420
        %v3902 = vunpack.c.l.b16 %v2421
        %v3903 = vunpack.c.h.b16 %v2421
        %v3904 = vunpack.c.l.b16 %v2422
        %v3905 = vunpack.c.h.b16 %v2422
        %v3906 = vunpack.c.l.b16 %v2423
        %v3907 = vunpack.c.h.b16 %v2423
        %v3908 = vunpack.c.l.b16 %v2424
        %v3909 = vunpack.c.h.b16 %v2424
        %v3910 = vunpack.c.l.b16 %v2425
        %v3911 = vunpack.c.h.b16 %v2425
        %v3912 = vunpack.c.l.b16 %v2426
        %v3913 = vunpack.c.h.b16 %v2426
        %v3914 = vunpack.c.l.b16 %v2427
        %v3915 = vunpack.c.h.b16 %v2427
        %v3916 = vunpack.c.l.b16 %v2428
        %v3917 = vunpack.c.h.b16 %v2428
        %v3918 = vunpack.c.l.b16 %v2429
        %v3919 = vunpack.c.h.b16 %v2429
        %v3920 = vunpack.c.l.b16 %v2430
        %v3921 = vunpack.c.h.b16 %v2430
        %v3922 = vunpack.c.l.b16 %v2431
        %v3923 = vunpack.c.h.b16 %v2431
        %v3924 = vunpack.c.l.b16 %v2432
        %v3925 = vunpack.c.h.b16 %v2432
        %v3926 = vunpack.c.l.b16 %v2433
        %v3927 = vunpack.c.h.b16 %v2433
        %v3928 = vunpack.c.l.b16 %v2434
        %v3929 = vunpack.c.h.b16 %v2434
        %v3930 = vunpack.c.l.b16 %v2435
        %v3931 = vunpack.c.h.b16 %v2435
        %v3932 = vunpack.c.l.b16 %v2436
        %v3933 = vunpack.c.h.b16 %v2436
        %v3934 = vunpack.c.l.b16 %v2437
        %v3935 = vunpack.c.h.b16 %v2437
        %v3936 = vunpack.c.l.b16 %v2438
        %v3937 = vunpack.c.h.b16 %v2438
        %v3938 = vunpack.c.l.b16 %v2439
        %v3939 = vunpack.c.h.b16 %v2439
        %v3940 = vunpack.c.l.b16 %v2440
        %v3941 = vunpack.c.h.b16 %v2440
        %v3942 = vunpack.c.l.b16 %v2441
        %v3943 = vunpack.c.h.b16 %v2441
        %v3944 = vunpack.c.l.b16 %v2442
        %v3945 = vunpack.c.h.b16 %v2442
        %v3946 = vunpack.c.l.b16 %v2443
        %v3947 = vunpack.c.h.b16 %v2443
        %v3948 = vunpack.c.l.b16 %v2444
        %v3949 = vunpack.c.h.b16 %v2444
        %v3950 = vunpack.c.l.b16 %v2445
        %v3951 = vunpack.c.h.b16 %v2445
        %v3952 = vunpack.c.l.b16 %v2446
        %v3953 = vunpack.c.h.b16 %v2446
        %v3954 = vunpack.c.l.b16 %v2447
        %v3955 = vunpack.c.h.b16 %v2447
        %v3956 = vunpack.c.l.b16 %v2448
        %v3957 = vunpack.c.h.b16 %v2448
        %v3958 = vunpack.c.l.b16 %v2449
        %v3959 = vunpack.c.h.b16 %v2449
        %v3960 = vunpack.c.l.b16 %v2450
        %v3961 = vunpack.c.h.b16 %v2450
        %v3962 = vunpack.c.l.b16 %v2451
        %v3963 = vunpack.c.h.b16 %v2451
        %v3964 = vunpack.c.l.b16 %v2452
        %v3965 = vunpack.c.h.b16 %v2452
        %v3966 = vunpack.c.l.b16 %v2453
        %v3967 = vunpack.c.h.b16 %v2453
        %v3968 = vunpack.c.l.b16 %v2454
        %v3969 = vunpack.c.h.b16 %v2454
        %v3970 = vunpack.c.l.b16 %v2455
        %v3971 = vunpack.c.h.b16 %v2455
        %v3972 = vunpack.c.l.b16 %v2456
        %v3973 = vunpack.c.h.b16 %v2456
        %v3974 = vunpack.c.l.b16 %v2457
        %v3975 = vunpack.c.h.b16 %v2457
        %v3976 = vunpack.c.l.b16 %v2458
        %v3977 = vunpack.c.h.b16 %v2458
        %v3978 = vunpack.c.l.b16 %v2459
        %v3979 = vunpack.c.h.b16 %v2459
        %v3980 = vunpack.c.l.b16 %v2460
        %v3981 = vunpack.c.h.b16 %v2460
        %v3982 = vunpack.c.l.b16 %v2461
        %v3983 = vunpack.c.h.b16 %v2461
        %v3984 = vunpack.c.l.b16 %v2462
        %v3985 = vunpack.c.h.b16 %v2462
        %v3986 = vunpack.c.l.b16 %v2463
        %v3987 = vunpack.c.h.b16 %v2463
        %v3988 = vunpack.c.l.b16 %v2464
        %v3989 = vunpack.c.h.b16 %v2464
        %v3990 = vunpack.c.l.b16 %v2465
        %v3991 = vunpack.c.h.b16 %v2465
        %v3992 = vunpack.c.l.b16 %v2466
        %v3993 = vunpack.c.h.b16 %v2466
        %v3994 = vunpack.c.l.b16 %v2467
        %v3995 = vunpack.c.h.b16 %v2467
        %v3996 = vunpack.c.l.b16 %v2468
        %v3997 = vunpack.c.h.b16 %v2468
        %v3998 = vunpack.c.l.b16 %v2469
        %v3999 = vunpack.c.h.b16 %v2469
        %v4000 = vunpack.c.l.b16 %v2470
        %v4001 = vunpack.c.h.b16 %v2470
        %v4002 = vunpack.c.l.b16 %v2471
        %v4003 = vunpack.c.h.b16 %v2471
        %v4004 = vunpack.c.l.b16 %v2472
        %v4005 = vunpack.c.h.b16 %v2472
        %v4006 = vunpack.c.l.b16 %v2473
        %v4007 = vunpack.c.h.b16 %v2473
        %v4008 = vunpack.c.l.b16 %v2474
        %v4009 = vunpack.c.h.b16 %v2474
        %v4010 = vunpack.c.l.b16 %v2475
        %v4011 = vunpack.c.h.b16 %v2475
        %v4012 = vunpack.c.l.b16 %v2476
        %v4013 = vunpack.c.h.b16 %v2476
        %v4014 = vunpack.c.l.b16 %v2477
        %v4015 = vunpack.c.h.b16 %v2477
        %v4016 = vunpack.c.l.b16 %v2478
        %v4017 = vunpack.c.h.b16 %v2478
        %v4018 = vunpack.c.l.b16 %v2479
        %v4019 = vunpack.c.h.b16 %v2479
        %v4020 = vpack.c.b16 %v3028, %v2996
        %v4021 = vpack.c.b16 %v3029, %v2997
        %v4022 = vpack.c.b16 %v3030, %v2998
        %v4023 = vpack.c.b16 %v3031, %v2999
        %v4024 = vpack.c.b16 %v3032, %v3000
        %v4025 = vpack.c.b16 %v3033, %v3001
        %v4026 = vpack.c.b16 %v3034, %v3002
        %v4027 = vpack.c.b16 %v3035, %v3003
        %v4028 = vpack.c.b16 %v3036, %v3004
        %v4029 = vpack.c.b16 %v3037, %v3005
        %v4030 = vpack.c.b16 %v3038, %v3006
        %v4031 = vpack.c.b16 %v3039, %v3007
        %v4032 = vpack.c.b16 %v3040, %v3008
        %v4033 = vpack.c.b16 %v3041, %v3009
        %v4034 = vpack.c.b16 %v3042, %v3010
        %v4035 = vpack.c.b16 %v3043, %v3011
        %v4036 = vpack.c.b16 %v3044, %v3012
        %v4037 = vpack.c.b16 %v3045, %v3013
        %v4038 = vpack.c.b16 %v3046, %v3014
        %v4039 = vpack.c.b16 %v3047, %v3015
        %v4040 = vpack.c.b16 %v3048, %v3016
        %v4041 = vpack.c.b16 %v3049, %v3017
        %v4042 = vpack.c.b16 %v3050, %v3018
        %v4043 = vpack.c.b16 %v3051, %v3019
        %v4044 = vpack.c.b16 %v3052, %v3020
        %v4045 = vpack.c.b16 %v3053, %v3021
        %v4046 = vpack.c.b16 %v3054, %v3022
        %v4047 = vpack.c.b16 %v3055, %v3023
        %v4048 = vpack.c.b16 %v3056, %v3024
        %v4049 = vpack.c.b16 %v3057, %v3025
        %v4050 = vpack.c.b16 %v3058, %v3026
        %v4051 = vpack.c.b16 %v3059, %v3027
        %v4052 = vpack.c.b16 %v3092, %v3060
        %v4053 = vpack.c.b16 %v3093, %v3061
        %v4054 = vpack.c.b16 %v3094, %v3062
        %v4055 = vpack.c.b16 %v3095, %v3063
        %v4056 = vpack.c.b16 %v3096, %v3064
        %v4057 = vpack.c.b16 %v3097, %v3065
        %v4058 = vpack.c.b16 %v3098, %v3066
        %v4059 = vpack.c.b16 %v3099, %v3067
        %v4060 = vpack.c.b16 %v3100, %v3068
        %v4061 = vpack.c.b16 %v3101, %v3069
        %v4062 = vpack.c.b16 %v3102, %v3070
        %v4063 = vpack.c.b16 %v3103, %v3071
        %v4064 = vpack.c.b16 %v3104, %v3072
        %v4065 = vpack.c.b16 %v3105, %v3073
        %v4066 = vpack.c.b16 %v3106, %v3074
        %v4067 = vpack.c.b16 %v3107, %v3075
        %v4068 = vpack.c.b16 %v3108, %v3076
        %v4069 = vpack.c.b16 %v3109, %v3077
        %v4070 = vpack.c.b16 %v3110, %v3078
        %v4071 = vpack.c.b16 %v3111, %v3079
        %v4072 = vpack.c.b16 %v3112, %v3080
        %v4073 = vpack.c.b16 %v3113, %v3081
        %v4074 = vpack.c.b16 %v3114, %v3082
        %v4075 = vpack.c.b16 %v3115, %v3083
        %v4076 = vpack.c.b16 %v3116, %v3084
        %v4077 = vpack.c.b16 %v3117, %v3085
        %v4078 = vpack.c.b16 %v3118, %v3086
        %v4079 = vpack.c.b16 %v3119, %v3087
        %v4080 = vpack.c.b16 %v3120, %v3088
        %v4081 = vpack.c.b16 %v3121, %v3089
        %v4082 = vpack.c.b16 %v3122, %v3090
        %v4083 = vpack.c.b16 %v3123, %v3091
        %v4084 = vpack.c.b16 %v3156, %v3124
        %v4085 = vpack.c.b16 %v3157, %v3125
        %v4086 = vpack.c.b16 %v3158, %v3126
        %v4087 = vpack.c.b16 %v3159, %v3127
        %v4088 = vpack.c.b16 %v3160, %v3128
        %v4089 = vpack.c.b16 %v3161, %v3129
        %v4090 = vpack.c.b16 %v3162, %v3130
        %v4091 = vpack.c.b16 %v3163, %v3131
        %v4092 = vpack.c.b16 %v3164, %v3132
        %v4093 = vpack.c.b16 %v3165, %v3133
        %v4094 = vpack.c.b16 %v3166, %v3134
        %v4095 = vpack.c.b16 %v3167, %v3135
        %v4096 = vpack.c.b16 %v3168, %v3136
        %v4097 = vpack.c.b16 %v3169, %v3137
        %v4098 = vpack.c.b16 %v3170, %v3138
        %v4099 = vpack.c.b16 %v3171, %v3139
        %v4100 = vpack.c.b16 %v3172, %v3140
        %v4101 = vpack.c.b16 %v3173, %v3141
        %v4102 = vpack.c.b16 %v3174, %v3142
        %v4103 = vpack.c.b16 %v3175, %v3143
        %v4104 = vpack.c.b16 %v3176, %v3144
        %v4105 = vpack.c.b16 %v3177, %v3145
        %v4106 = vpack.c.b16 %v3178, %v3146
        %v4107 = vpack.c.b16 %v3179, %v3147
        %v4108 = vpack.c.b16 %v3180, %v3148
        %v4109 = vpack.c.b16 %v3181, %v3149
        %v4110 = vpack.c.b16 %v3182, %v3150
        %v4111 = vpack.c.b16 %v3183, %v3151
        %v4112 = vpack.c.b16 %v3184, %v3152
        %v4113 = vpack.c.b16 %v3185, %v3153
        %v4114 = vpack.c.b16 %v3186, %v3154
        %v4115 = vpack.c.b16 %v3187, %v3155
        %v4116 = vpack.c.b16 %v3220, %v3188
        %v4117 = vpack.c.b16 %v3221, %v3189
        %v4118 = vpack.c.b16 %v3222, %v3190
        %v4119 = vpack.c.b16 %v3223, %v3191
        %v4120 = vpack.c.b16 %v3224, %v3192
        %v4121 = vpack.c.b16 %v3225, %v3193
        %v4122 = vpack.c.b16 %v3226, %v3194
        %v4123 = vpack.c.b16 %v3227, %v3195
        %v4124 = vpack.c.b16 %v3228, %v3196
        %v4125 = vpack.c.b16 %v3229, %v3197
        %v4126 = vpack.c.b16 %v3230, %v3198
        %v4127 = vpack.c.b16 %v3231, %v3199
        %v4128 = vpack.c.b16 %v3232, %v3200
        %v4129 = vpack.c.b16 %v3233, %v3201
        %v4130 = vpack.c.b16 %v3234, %v3202
        %v4131 = vpack.c.b16 %v3235, %v3203
        %v4132 = vpack.c.b16 %v3236, %v3204
        %v4133 = vpack.c.b16 %v3237, %v3205
        %v4134 = vpack.c.b16 %v3238, %v3206
        %v4135 = vpack.c.b16 %v3239, %v3207
        %v4136 = vpack.c.b16 %v3240, %v3208
        %v4137 = vpack.c.b16 %v3241, %v3209
        %v4138 = vpack.c.b16 %v3242, %v3210
        %v4139 = vpack.c.b16 %v3243, %v3211
        %v4140 = vpack.c.b16 %v3244, %v3212
        %v4141 = vpack.c.b16 %v3245, %v3213
        %v4142 = vpack.c.b16 %v3246, %v3214
        %v4143 = vpack.c.b16 %v3247, %v3215
        %v4144 = vpack.c.b16 %v3248, %v3216
        %v4145 = vpack.c.b16 %v3249, %v3217
        %v4146 = vpack.c.b16 %v3250, %v3218
        %v4147 = vpack.c.b16 %v3251, %v3219
        %v4148 = vpack.c.b16 %v3284, %v3252
        %v4149 = vpack.c.b16 %v3285, %v3253
        %v4150 = vpack.c.b16 %v3286, %v3254
        %v4151 = vpack.c.b16 %v3287, %v3255
        %v4152 = vpack.c.b16 %v3288, %v3256
        %v4153 = vpack.c.b16 %v3289, %v3257
        %v4154 = vpack.c.b16 %v3290, %v3258
        %v4155 = vpack.c.b16 %v3291, %v3259
        %v4156 = vpack.c.b16 %v3292, %v3260
        %v4157 = vpack.c.b16 %v3293, %v3261
        %v4158 = vpack.c.b16 %v3294, %v3262
        %v4159 = vpack.c.b16 %v3295, %v3263
        %v4160 = vpack.c.b16 %v3296, %v3264
        %v4161 = vpack.c.b16 %v3297, %v3265
        %v4162 = vpack.c.b16 %v3298, %v3266
        %v4163 = vpack.c.b16 %v3299, %v3267
        %v4164 = vpack.c.b16 %v3300, %v3268
        %v4165 = vpack.c.b16 %v3301, %v3269
        %v4166 = vpack.c.b16 %v3302, %v3270
        %v4167 = vpack.c.b16 %v3303, %v3271
        %v4168 = vpack.c.b16 %v3304, %v3272
        %v4169 = vpack.c.b16 %v3305, %v3273
        %v4170 = vpack.c.b16 %v3306, %v3274
        %v4171 = vpack.c.b16 %v3307, %v3275
        %v4172 = vpack.c.b16 %v3308, %v3276
        %v4173 = vpack.c.b16 %v3309, %v3277
        %v4174 = vpack.c.b16 %v3310, %v3278
        %v4175 = vpack.c.b16 %v3311, %v3279
        %v4176 = vpack.c.b16 %v3312, %v3280
        %v4177 = vpack.c.b16 %v3313, %v3281
        %v4178 = vpack.c.b16 %v3314, %v3282
        %v4179 = vpack.c.b16 %v3315, %v3283
        %v4180 = vpack.c.b16 %v3348, %v3316
        %v4181 = vpack.c.b16 %v3349, %v3317
        %v4182 = vpack.c.b16 %v3350, %v3318
        %v4183 = vpack.c.b16 %v3351, %v3319
        %v4184 = vpack.c.b16 %v3352, %v3320
        %v4185 = vpack.c.b16 %v3353, %v3321
        %v4186 = vpack.c.b16 %v3354, %v3322
        %v4187 = vpack.c.b16 %v3355, %v3323
        %v4188 = vpack.c.b16 %v3356, %v3324
        %v4189 = vpack.c.b16 %v3357, %v3325
        %v4190 = vpack.c.b16 %v3358, %v3326
        %v4191 = vpack.c.b16 %v3359, %v3327
        %v4192 = vpack.c.b16 %v3360, %v3328
        %v4193 = vpack.c.b16 %v3361, %v3329
        %v4194 = vpack.c.b16 %v3362, %v3330
        %v4195 = vpack.c.b16 %v3363, %v3331
        %v4196 = vpack.c.b16 %v3364, %v3332
        %v4197 = vpack.c.b16 %v3365, %v3333
        %v4198 = vpack.c.b16 %v3366, %v3334
        %v4199 = vpack.c.b16 %v3367, %v3335
        %v4200 = vpack.c.b16 %v3368, %v3336
        %v4201 = vpack.c.b16 %v3369, %v3337
        %v4202 = vpack.c.b16 %v3370, %v3338
        %v4203 = vpack.c.b16 %v3371, %v3339
        %v4204 = vpack.c.b16 %v3372, %v3340
        %v4205 = vpack.c.b16 %v3373, %v3341
        %v4206 = vpack.c.b16 %v3374, %v3342
        %v4207 = vpack.c.b16 %v3375, %v3343
        %v4208 = vpack.c.b16 %v3376, %v3344
        %v4209 = vpack.c.b16 %v3377, %v3345
        %v4210 = vpack.c.b16 %v3378, %v3346
        %v4211 = vpack.c.b16 %v3379, %v3347
        %v4212 = vpack.c.b16 %v3412, %v3380
        %v4213 = vpack.c.b16 %v3413, %v3381
        %v4214 = vpack.c.b16 %v3414, %v3382
        %v4215 = vpack.c.b16 %v3415, %v3383
        %v4216 = vpack.c.b16 %v3416, %v3384
        %v4217 = vpack.c.b16 %v3417, %v3385
        %v4218 = vpack.c.b16 %v3418, %v3386
        %v4219 = vpack.c.b16 %v3419, %v3387
        %v4220 = vpack.c.b16 %v3420, %v3388
        %v4221 = vpack.c.b16 %v3421, %v3389
        %v4222 = vpack.c.b16 %v3422, %v3390
        %v4223 = vpack.c.b16 %v3423, %v3391
        %v4224 = vpack.c.b16 %v3424, %v3392
        %v4225 = vpack.c.b16 %v3425, %v3393
        %v4226 = vpack.c.b16 %v3426, %v3394
        %v4227 = vpack.c.b16 %v3427, %v3395
        %v4228 = vpack.c.b16 %v3428, %v3396
        %v4229 = vpack.c.b16 %v3429, %v3397
        %v4230 = vpack.c.b16 %v3430, %v3398
        %v4231 = vpack.c.b16 %v3431, %v3399
        %v4232 = vpack.c.b16 %v3432, %v3400
        %v4233 = vpack.c.b16 %v3433, %v3401
        %v4234 = vpack.c.b16 %v3434, %v3402
        %v4235 = vpack.c.b16 %v3435, %v3403
        %v4236 = vpack.c.b16 %v3436, %v3404
        %v4237 = vpack.c.b16 %v3437, %v3405
        %v4238 = vpack.c.b16 %v3438, %v3406
        %v4239 = vpack.c.b16 %v3439, %v3407
        %v4240 = vpack.c.b16 %v3440, %v3408
        %v4241 = vpack.c.b16 %v3441, %v3409
        %v4242 = vpack.c.b16 %v3442, %v3410
        %v4243 = vpack.c.b16 %v3443, %v3411
        %v4244 = vpack.c.b16 %v3476, %v3444
        %v4245 = vpack.c.b16 %v3477, %v3445
        %v4246 = vpack.c.b16 %v3478, %v3446
        %v4247 = vpack.c.b16 %v3479, %v3447
        %v4248 = vpack.c.b16 %v3480, %v3448
        %v4249 = vpack.c.b16 %v3481, %v3449
        %v4250 = vpack.c.b16 %v3482, %v3450
        %v4251 = vpack.c.b16 %v3483, %v3451
        %v4252 = vpack.c.b16 %v3484, %v3452
        %v4253 = vpack.c.b16 %v3485, %v3453
        %v4254 = vpack.c.b16 %v3486, %v3454
        %v4255 = vpack.c.b16 %v3487, %v3455
        %v4256 = vpack.c.b16 %v3488, %v3456
        %v4257 = vpack.c.b16 %v3489, %v3457
        %v4258 = vpack.c.b16 %v3490, %v3458
        %v4259 = vpack.c.b16 %v3491, %v3459
        %v4260 = vpack.c.b16 %v3492, %v3460
        %v4261 = vpack.c.b16 %v3493, %v3461
        %v4262 = vpack.c.b16 %v3494, %v3462
        %v4263 = vpack.c.b16 %v3495, %v3463
        %v4264 = vpack.c.b16 %v3496, %v3464
        %v4265 = vpack.c.b16 %v3497, %v3465
        %v4266 = vpack.c.b16 %v3498, %v3466
        %v4267 = vpack.c.b16 %v3499, %v3467
        %v4268 = vpack.c.b16 %v3500, %v3468
        %v4269 = vpack.c.b16 %v3501, %v3469
        %v4270 = vpack.c.b16 %v3502, %v3470
        %v4271 = vpack.c.b16 %v3503, %v3471
        %v4272 = vpack.c.b16 %v3504, %v3472
        %v4273 = vpack.c.b16 %v3505, %v3473
        %v4274 = vpack.c.b16 %v3506, %v3474
        %v4275 = vpack.c.b16 %v3507, %v3475
        %v4276 = vpack.c.b16 %v3540, %v3508
        %v4277 = vpack.c.b16 %v3541, %v3509
        %v4278 = vpack.c.b16 %v3542, %v3510
        %v4279 = vpack.c.b16 %v3543, %v3511
        %v4280 = vpack.c.b16 %v3544, %v3512
        %v4281 = vpack.c.b16 %v3545, %v3513
        %v4282 = vpack.c.b16 %v3546, %v3514
        %v4283 = vpack.c.b16 %v3547, %v3515
        %v4284 = vpack.c.b16 %v3548, %v3516
        %v4285 = vpack.c.b16 %v3549, %v3517
        %v4286 = vpack.c.b16 %v3550, %v3518
        %v4287 = vpack.c.b16 %v3551, %v3519
        %v4288 = vpack.c.b16 %v3552, %v3520
        %v4289 = vpack.c.b16 %v3553, %v3521
        %v4290 = vpack.c.b16 %v3554, %v3522
        %v4291 = vpack.c.b16 %v3555, %v3523
        %v4292 = vpack.c.b16 %v3556, %v3524
        %v4293 = vpack.c.b16 %v3557, %v3525
        %v4294 = vpack.c.b16 %v3558, %v3526
        %v4295 = vpack.c.b16 %v3559, %v3527
        %v4296 = vpack.c.b16 %v3560, %v3528
        %v4297 = vpack.c.b16 %v3561, %v3529
        %v4298 = vpack.c.b16 %v3562, %v3530
        %v4299 = vpack.c.b16 %v3563, %v3531
        %v4300 = vpack.c.b16 %v3564, %v3532
        %v4301 = vpack.c.b16 %v3565, %v3533
        %v4302 = vpack.c.b16 %v3566, %v3534
        %v4303 = vpack.c.b16 %v3567, %v3535
        %v4304 = vpack.c.b16 %v3568, %v3536
        %v4305 = vpack.c.b16 %v3569, %v3537
        %v4306 = vpack.c.b16 %v3570, %v3538
        %v4307 = vpack.c.b16 %v3571, %v3539
        %v4308 = vpack.c.b16 %v3604, %v3572
        %v4309 = vpack.c.b16 %v3605, %v3573
        %v4310 = vpack.c.b16 %v3606, %v3574
        %v4311 = vpack.c.b16 %v3607, %v3575
        %v4312 = vpack.c.b16 %v3608, %v3576
        %v4313 = vpack.c.b16 %v3609, %v3577
        %v4314 = vpack.c.b16 %v3610, %v3578
        %v4315 = vpack.c.b16 %v3611, %v3579
        %v4316 = vpack.c.b16 %v3612, %v3580
        %v4317 = vpack.c.b16 %v3613, %v3581
        %v4318 = vpack.c.b16 %v3614, %v3582
        %v4319 = vpack.c.b16 %v3615, %v3583
        %v4320 = vpack.c.b16 %v3616, %v3584
        %v4321 = vpack.c.b16 %v3617, %v3585
        %v4322 = vpack.c.b16 %v3618, %v3586
        %v4323 = vpack.c.b16 %v3619, %v3587
        %v4324 = vpack.c.b16 %v3620, %v3588
        %v4325 = vpack.c.b16 %v3621, %v3589
        %v4326 = vpack.c.b16 %v3622, %v3590
        %v4327 = vpack.c.b16 %v3623, %v3591
        %v4328 = vpack.c.b16 %v3624, %v3592
        %v4329 = vpack.c.b16 %v3625, %v3593
        %v4330 = vpack.c.b16 %v3626, %v3594
        %v4331 = vpack.c.b16 %v3627, %v3595
        %v4332 = vpack.c.b16 %v3628, %v3596
        %v4333 = vpack.c.b16 %v3629, %v3597
        %v4334 = vpack.c.b16 %v3630, %v3598
        %v4335 = vpack.c.b16 %v3631, %v3599
        %v4336 = vpack.c.b16 %v3632, %v3600
        %v4337 = vpack.c.b16 %v3633, %v3601
        %v4338 = vpack.c.b16 %v3634, %v3602
        %v4339 = vpack.c.b16 %v3635, %v3603
        %v4340 = vpack.c.b16 %v3668, %v3636
        %v4341 = vpack.c.b16 %v3669, %v3637
        %v4342 = vpack.c.b16 %v3670, %v3638
        %v4343 = vpack.c.b16 %v3671, %v3639
        %v4344 = vpack.c.b16 %v3672, %v3640
        %v4345 = vpack.c.b16 %v3673, %v3641
        %v4346 = vpack.c.b16 %v3674, %v3642
        %v4347 = vpack.c.b16 %v3675, %v3643
        %v4348 = vpack.c.b16 %v3676, %v3644
        %v4349 = vpack.c.b16 %v3677, %v3645
        %v4350 = vpack.c.b16 %v3678, %v3646
        %v4351 = vpack.c.b16 %v3679, %v3647
        %v4352 = vpack.c.b16 %v3680, %v3648
        %v4353 = vpack.c.b16 %v3681, %v3649
        %v4354 = vpack.c.b16 %v3682, %v3650
        %v4355 = vpack.c.b16 %v3683, %v3651
        %v4356 = vpack.c.b16 %v3684, %v3652
        %v4357 = vpack.c.b16 %v3685, %v3653
        %v4358 = vpack.c.b16 %v3686, %v3654
        %v4359 = vpack.c.b16 %v3687, %v3655
        %v4360 = vpack.c.b16 %v3688, %v3656
        %v4361 = vpack.c.b16 %v3689, %v3657
        %v4362 = vpack.c.b16 %v3690, %v3658
        %v4363 = vpack.c.b16 %v3691, %v3659
        %v4364 = vpack.c.b16 %v3692, %v3660
        %v4365 = vpack.c.b16 %v3693, %v3661
        %v4366 = vpack.c.b16 %v3694, %v3662
        %v4367 = vpack.c.b16 %v3695, %v3663
        %v4368 = vpack.c.b16 %v3696, %v3664
        %v4369 = vpack.c.b16 %v3697, %v3665
        %v4370 = vpack.c.b16 %v3698, %v3666
        %v4371 = vpack.c.b16 %v3699, %v3667
        %v4372 = vpack.c.b16 %v3732, %v3700
        %v4373 = vpack.c.b16 %v3733, %v3701
        %v4374 = vpack.c.b16 %v3734, %v3702
        %v4375 = vpack.c.b16 %v3735, %v3703
        %v4376 = vpack.c.b16 %v3736, %v3704
        %v4377 = vpack.c.b16 %v3737, %v3705
        %v4378 = vpack.c.b16 %v3738, %v3706
        %v4379 = vpack.c.b16 %v3739, %v3707
        %v4380 = vpack.c.b16 %v3740, %v3708
        %v4381 = vpack.c.b16 %v3741, %v3709
        %v4382 = vpack.c.b16 %v3742, %v3710
        %v4383 = vpack.c.b16 %v3743, %v3711
        %v4384 = vpack.c.b16 %v3744, %v3712
        %v4385 = vpack.c.b16 %v3745, %v3713
        %v4386 = vpack.c.b16 %v3746, %v3714
        %v4387 = vpack.c.b16 %v3747, %v3715
        %v4388 = vpack.c.b16 %v3748, %v3716
        %v4389 = vpack.c.b16 %v3749, %v3717
        %v4390 = vpack.c.b16 %v3750, %v3718
        %v4391 = vpack.c.b16 %v3751, %v3719
        %v4392 = vpack.c.b16 %v3752, %v3720
        %v4393 = vpack.c.b16 %v3753, %v3721
        %v4394 = vpack.c.b16 %v3754, %v3722
        %v4395 = vpack.c.b16 %v3755, %v3723
        %v4396 = vpack.c.b16 %v3756, %v3724
        %v4397 = vpack.c.b16 %v3757, %v3725
        %v4398 = vpack.c.b16 %v3758, %v3726
        %v4399 = vpack.c.b16 %v3759, %v3727
        %v4400 = vpack.c.b16 %v3760, %v3728
        %v4401 = vpack.c.b16 %v3761, %v3729
        %v4402 = vpack.c.b16 %v3762, %v3730
        %v4403 = vpack.c.b16 %v3763, %v3731
        %v4404 = vpack.c.b16 %v3796, %v3764
        %v4405 = vpack.c.b16 %v3797, %v3765
        %v4406 = vpack.c.b16 %v3798, %v3766
        %v4407 = vpack.c.b16 %v3799, %v3767
        %v4408 = vpack.c.b16 %v3800, %v3768
        %v4409 = vpack.c.b16 %v3801, %v3769
        %v4410 = vpack.c.b16 %v3802, %v3770
        %v4411 = vpack.c.b16 %v3803, %v3771
        %v4412 = vpack.c.b16 %v3804, %v3772
        %v4413 = vpack.c.b16 %v3805, %v3773
        %v4414 = vpack.c.b16 %v3806, %v3774
        %v4415 = vpack.c.b16 %v3807, %v3775
        %v4416 = vpack.c.b16 %v3808, %v3776
        %v4417 = vpack.c.b16 %v3809, %v3777
        %v4418 = vpack.c.b16 %v3810, %v3778
        %v4419 = vpack.c.b16 %v3811, %v3779
        %v4420 = vpack.c.b16 %v3812, %v3780
        %v4421 = vpack.c.b16 %v3813, %v3781
        %v4422 = vpack.c.b16 %v3814, %v3782
        %v4423 = vpack.c.b16 %v3815, %v3783
        %v4424 = vpack.c.b16 %v3816, %v3784
        %v4425 = vpack.c.b16 %v3817, %v3785
        %v4426 = vpack.c.b16 %v3818, %v3786
        %v4427 = vpack.c.b16 %v3819, %v3787
        %v4428 = vpack.c.b16 %v3820, %v3788
        %v4429 = vpack.c.b16 %v3821, %v3789
        %v4430 = vpack.c.b16 %v3822, %v3790
        %v4431 = vpack.c.b16 %v3823, %v3791
        %v4432 = vpack.c.b16 %v3824, %v3792
        %v4433 = vpack.c.b16 %v3825, %v3793
        %v4434 = vpack.c.b16 %v3826, %v3794
        %v4435 = vpack.c.b16 %v3827, %v3795
        %v4436 = vpack.c.b16 %v3860, %v3828
        %v4437 = vpack.c.b16 %v3861, %v3829
        %v4438 = vpack.c.b16 %v3862, %v3830
        %v4439 = vpack.c.b16 %v3863, %v3831
        %v4440 = vpack.c.b16 %v3864, %v3832
        %v4441 = vpack.c.b16 %v3865, %v3833
        %v4442 = vpack.c.b16 %v3866, %v3834
        %v4443 = vpack.c.b16 %v3867, %v3835
        %v4444 = vpack.c.b16 %v3868, %v3836
        %v4445 = vpack.c.b16 %v3869, %v3837
        %v4446 = vpack.c.b16 %v3870, %v3838
        %v4447 = vpack.c.b16 %v3871, %v3839
        %v4448 = vpack.c.b16 %v3872, %v3840
        %v4449 = vpack.c.b16 %v3873, %v3841
        %v4450 = vpack.c.b16 %v3874, %v3842
        %v4451 = vpack.c.b16 %v3875, %v3843
        %v4452 = vpack.c.b16 %v3876, %v3844
        %v4453 = vpack.c.b16 %v3877, %v3845
        %v4454 = vpack.c.b16 %v3878, %v3846
        %v4455 = vpack.c.b16 %v3879, %v3847
        %v4456 = vpack.c.b16 %v3880, %v3848
        %v4457 = vpack.c.b16 %v3881, %v3849
        %v4458 = vpack.c.b16 %v3882, %v3850
        %v4459 = vpack.c.b16 %v3883, %v3851
        %v4460 = vpack.c.b16 %v3884, %v3852
        %v4461 = vpack.c.b16 %v3885, %v3853
        %v4462 = vpack.c.b16 %v3886, %v3854
        %v4463 = vpack.c.b16 %v3887, %v3855
        %v4464 = vpack.c.b16 %v3888, %v3856
        %v4465 = vpack.c.b16 %v3889, %v3857
        %v4466 = vpack.c.b16 %v3890, %v3858
        %v4467 = vpack.c.b16 %v3891, %v3859
        %v4468 = vpack.c.b16 %v3924, %v3892
        %v4469 = vpack.c.b16 %v3925, %v3893
        %v4470 = vpack.c.b16 %v3926, %v3894
        %v4471 = vpack.c.b16 %v3927, %v3895
        %v4472 = vpack.c.b16 %v3928, %v3896
        %v4473 = vpack.c.b16 %v3929, %v3897
        %v4474 = vpack.c.b16 %v3930, %v3898
        %v4475 = vpack.c.b16 %v3931, %v3899
        %v4476 = vpack.c.b16 %v3932, %v3900
        %v4477 = vpack.c.b16 %v3933, %v3901
        %v4478 = vpack.c.b16 %v3934, %v3902
        %v4479 = vpack.c.b16 %v3935, %v3903
        %v4480 = vpack.c.b16 %v3936, %v3904
        %v4481 = vpack.c.b16 %v3937, %v3905
        %v4482 = vpack.c.b16 %v3938, %v3906
        %v4483 = vpack.c.b16 %v3939, %v3907
        %v4484 = vpack.c.b16 %v3940, %v3908
        %v4485 = vpack.c.b16 %v3941, %v3909
        %v4486 = vpack.c.b16 %v3942, %v3910
        %v4487 = vpack.c.b16 %v3943, %v3911
        %v4488 = vpack.c.b16 %v3944, %v3912
        %v4489 = vpack.c.b16 %v3945, %v3913
        %v4490 = vpack.c.b16 %v3946, %v3914
        %v4491 = vpack.c.b16 %v3947, %v3915
        %v4492 = vpack.c.b16 %v3948, %v3916
        %v4493 = vpack.c.b16 %v3949, %v3917
        %v4494 = vpack.c.b16 %v3950, %v3918
        %v4495 = vpack.c.b16 %v3951, %v3919
        %v4496 = vpack.c.b16 %v3952, %v3920
        %v4497 = vpack.c.b16 %v3953, %v3921
        %v4498 = vpack.c.b16 %v3954, %v3922
        %v4499 = vpack.c.b16 %v3955, %v3923
        %v4500 = vpack.c.b16 %v3988, %v3956
        %v4501 = vpack.c.b16 %v3989, %v3957
        %v4502 = vpack.c.b16 %v3990, %v3958
        %v4503 = vpack.c.b16 %v3991, %v3959
        %v4504 = vpack.c.b16 %v3992, %v3960
        %v4505 = vpack.c.b16 %v3993, %v3961
        %v4506 = vpack.c.b16 %v3994, %v3962
        %v4507 = vpack.c.b16 %v3995, %v3963
        %v4508 = vpack.c.b16 %v3996, %v3964
        %v4509 = vpack.c.b16 %v3997, %v3965
        %v4510 = vpack.c.b16 %v3998, %v3966
        %v4511 = vpack.c.b16 %v3999, %v3967
        %v4512 = vpack.c.b16 %v4000, %v3968
        %v4513 = vpack.c.b16 %v4001, %v3969
        %v4514 = vpack.c.b16 %v4002, %v3970
        %v4515 = vpack.c.b16 %v4003, %v3971
        %v4516 = vpack.c.b16 %v4004, %v3972
        %v4517 = vpack.c.b16 %v4005, %v3973
        %v4518 = vpack.c.b16 %v4006, %v3974
        %v4519 = vpack.c.b16 %v4007, %v3975
        %v4520 = vpack.c.b16 %v4008, %v3976
        %v4521 = vpack.c.b16 %v4009, %v3977
        %v4522 = vpack.c.b16 %v4010, %v3978
        %v4523 = vpack.c.b16 %v4011, %v3979
        %v4524 = vpack.c.b16 %v4012, %v3980
        %v4525 = vpack.c.b16 %v4013, %v3981
        %v4526 = vpack.c.b16 %v4014, %v3982
        %v4527 = vpack.c.b16 %v4015, %v3983
        %v4528 = vpack.c.b16 %v4016, %v3984
        %v4529 = vpack.c.b16 %v4017, %v3985
        %v4530 = vpack.c.b16 %v4018, %v3986
        %v4531 = vpack.c.b16 %v4019, %v3987
        %v5048 = vlaneseq
        %v5049 = vshrl.u32 %v5048, 7
        %v5050 = vsub.s32 0, %v5049
        %v5051 = vrot.slane %v2480, %v5050
        %v5052 = vlaneseq
        %v5053 = vshrl.u32 %v5052, 7
        %v5054 = vsub.s32 1, %v5053
        %v5055 = vrot.slane %v2480, %v5054
        %v5056 = vlaneseq
        %v5057 = vshrl.u32 %v5056, 7
        %v5058 = vsub.s32 2, %v5057
        %v5059 = vrot.slane %v2480, %v5058
        %v5060 = vlaneseq
        %v5061 = vshrl.u32 %v5060, 7
        %v5062 = vsub.s32 3, %v5061
        %v5063 = vrot.slane %v2480, %v5062
        %v5064 = vlaneseq
        %v5065 = vshrl.u32 %v5064, 7
        %v5066 = vsub.s32 4, %v5065
        %v5067 = vrot.slane %v2480, %v5066
        %v5068 = vlaneseq
        %v5069 = vshrl.u32 %v5068, 7
        %v5070 = vsub.s32 5, %v5069
        %v5071 = vrot.slane %v2480, %v5070
        %v5072 = vlaneseq
        %v5073 = vshrl.u32 %v5072, 7
        %v5074 = vsub.s32 6, %v5073
        %v5075 = vrot.slane %v2480, %v5074
        %v5076 = vlaneseq
        %v5077 = vshrl.u32 %v5076, 7
        %v5078 = vsub.s32 7, %v5077
        %v5079 = vrot.slane %v2480, %v5078
        %v5080 = vlaneseq
        %v5081 = vshrl.u32 %v5080, 7
        %v5082 = vsub.s32 0, %v5081
        %v5083 = vrot.slane %v2481, %v5082
        %v5084 = vlaneseq
        %v5085 = vshrl.u32 %v5084, 7
        %v5086 = vsub.s32 1, %v5085
        %v5087 = vrot.slane %v2481, %v5086
        %v5088 = vlaneseq
        %v5089 = vshrl.u32 %v5088, 7
        %v5090 = vsub.s32 2, %v5089
        %v5091 = vrot.slane %v2481, %v5090
        %v5092 = vlaneseq
        %v5093 = vshrl.u32 %v5092, 7
        %v5094 = vsub.s32 3, %v5093
        %v5095 = vrot.slane %v2481, %v5094
        %v5096 = vlaneseq
        %v5097 = vshrl.u32 %v5096, 7
        %v5098 = vsub.s32 4, %v5097
        %v5099 = vrot.slane %v2481, %v5098
        %v5100 = vlaneseq
        %v5101 = vshrl.u32 %v5100, 7
        %v5102 = vsub.s32 5, %v5101
        %v5103 = vrot.slane %v2481, %v5102
        %v5104 = vlaneseq
        %v5105 = vshrl.u32 %v5104, 7
        %v5106 = vsub.s32 6, %v5105
        %v5107 = vrot.slane %v2481, %v5106
        %v5108 = vlaneseq
        %v5109 = vshrl.u32 %v5108, 7
        %v5110 = vsub.s32 7, %v5109
        %v5111 = vrot.slane %v2481, %v5110
        %v5112 = vlaneseq
        %v5113 = vshrl.u32 %v5112, 7
        %v5114 = vsub.s32 0, %v5113
        %v5115 = vrot.slane %v2482, %v5114
        %v5116 = vlaneseq
        %v5117 = vshrl.u32 %v5116, 7
        %v5118 = vsub.s32 1, %v5117
        %v5119 = vrot.slane %v2482, %v5118
        %v5120 = vlaneseq
        %v5121 = vshrl.u32 %v5120, 7
        %v5122 = vsub.s32 2, %v5121
        %v5123 = vrot.slane %v2482, %v5122
        %v5124 = vlaneseq
        %v5125 = vshrl.u32 %v5124, 7
        %v5126 = vsub.s32 3, %v5125
        %v5127 = vrot.slane %v2482, %v5126
        %v5128 = vlaneseq
        %v5129 = vshrl.u32 %v5128, 7
        %v5130 = vsub.s32 4, %v5129
        %v5131 = vrot.slane %v2482, %v5130
        %v5132 = vlaneseq
        %v5133 = vshrl.u32 %v5132, 7
        %v5134 = vsub.s32 5, %v5133
        %v5135 = vrot.slane %v2482, %v5134
        %v5136 = vlaneseq
        %v5137 = vshrl.u32 %v5136, 7
        %v5138 = vsub.s32 6, %v5137
        %v5139 = vrot.slane %v2482, %v5138
        %v5140 = vlaneseq
        %v5141 = vshrl.u32 %v5140, 7
        %v5142 = vsub.s32 7, %v5141
        %v5143 = vrot.slane %v2482, %v5142
        %v5144 = vlaneseq
        %v5145 = vshrl.u32 %v5144, 7
        %v5146 = vsub.s32 0, %v5145
        %v5147 = vrot.slane %v2483, %v5146
        %v5148 = vlaneseq
        %v5149 = vshrl.u32 %v5148, 7
        %v5150 = vsub.s32 1, %v5149
        %v5151 = vrot.slane %v2483, %v5150
        %v5152 = vlaneseq
        %v5153 = vshrl.u32 %v5152, 7
        %v5154 = vsub.s32 2, %v5153
        %v5155 = vrot.slane %v2483, %v5154
        %v5156 = vlaneseq
        %v5157 = vshrl.u32 %v5156, 7
        %v5158 = vsub.s32 3, %v5157
        %v5159 = vrot.slane %v2483, %v5158
        %v5160 = vlaneseq
        %v5161 = vshrl.u32 %v5160, 7
        %v5162 = vsub.s32 4, %v5161
        %v5163 = vrot.slane %v2483, %v5162
        %v5164 = vlaneseq
        %v5165 = vshrl.u32 %v5164, 7
        %v5166 = vsub.s32 5, %v5165
        %v5167 = vrot.slane %v2483, %v5166
        %v5168 = vlaneseq
        %v5169 = vshrl.u32 %v5168, 7
        %v5170 = vsub.s32 6, %v5169
        %v5171 = vrot.slane %v2483, %v5170
        %v5172 = vlaneseq
        %v5173 = vshrl.u32 %v5172, 7
        %v5174 = vsub.s32 7, %v5173
        %v5175 = vrot.slane %v2483, %v5174
        %5208 = vmatprep.subr.bf16.mxu0 %v4021
        %5209 = vmatpush1.bf16.msra.mxu0 %v4020
        %5210 = vmatprep.subr.bf16.mxu0 %v4053
        %5211 = vmatpush1.bf16.msra.mxu0 %v4052
        %5212 = vmatprep.subr.bf16.mxu0 %v4085
        %5213 = vmatpush1.bf16.msra.mxu0 %v4084
        %5214 = vmatprep.subr.bf16.mxu0 %v4117
        %5215 = vmatpush1.bf16.msra.mxu0 %v4116
        %5216 = vmatprep.subr.bf16.mxu0 %v4149
        %5217 = vmatpush1.bf16.msra.mxu0 %v4148
        %5218 = vmatprep.subr.bf16.mxu0 %v4181
        %5219 = vmatpush1.bf16.msra.mxu0 %v4180
        %5220 = vmatprep.subr.bf16.mxu0 %v4213
        %5221 = vmatpush1.bf16.msra.mxu0 %v4212
        %5222 = vmatprep.subr.bf16.mxu0 %v4245
        %5223 = vmatpush1.bf16.msra.mxu0 %v4244
        %5224 = vmatprep.subr.bf16.mxu0 %v4277
        %5225 = vmatpush1.bf16.msra.mxu0 %v4276
        %5226 = vmatprep.subr.bf16.mxu0 %v4309
        %5227 = vmatpush1.bf16.msra.mxu0 %v4308
        %5228 = vmatprep.subr.bf16.mxu0 %v4341
        %5229 = vmatpush1.bf16.msra.mxu0 %v4340
        %5230 = vmatprep.subr.bf16.mxu0 %v4373
        %5231 = vmatpush1.bf16.msra.mxu0 %v4372
        %5232 = vmatprep.subr.bf16.mxu0 %v4405
        %5233 = vmatpush1.bf16.msra.mxu0 %v4404
        %5234 = vmatprep.subr.bf16.mxu0 %v4437
        %5235 = vmatpush1.bf16.msra.mxu0 %v4436
        %5236 = vmatprep.subr.bf16.mxu0 %v4469
        %5237 = vmatpush1.bf16.msra.mxu0 %v4468
        %5238 = vmatprep.subr.bf16.mxu0 %v4501
        %5239 = vmatpush1.bf16.msra.mxu0 %v4500
        %5240 = vmatprep.mubr.bf16.mxu0 %v1967
        %5241 = vmatmul.mubr.bf16.gmra.mrb[0].mxu0 %v1966
        %v5242 = vpop.f32.mrb[0].mxu0
        %v5243 = vadd.f32 %v5051, %v5242
        %v5244 = vpop.f32.mrb[0].mxu0
        %v5245 = vadd.f32 %v5055, %v5244
        %v5246 = vpop.f32.mrb[0].mxu0
        %v5247 = vpop.f32.mrb[0].mxu0
        %5248 = vdwg.mxu0
        %5249 = vmatprep.subr.bf16.mxu0 %v4023
        %5250 = vmatpush1.bf16.msra.mxu0 %v4022
        %5251 = vmatprep.subr.bf16.mxu0 %v4055
        %5252 = vmatpush1.bf16.msra.mxu0 %v4054
        %5253 = vmatprep.subr.bf16.mxu0 %v4087
        %5254 = vmatpush1.bf16.msra.mxu0 %v4086
        %5255 = vmatprep.subr.bf16.mxu0 %v4119
        %5256 = vmatpush1.bf16.msra.mxu0 %v4118
        %5257 = vmatprep.subr.bf16.mxu0 %v4151
        %5258 = vmatpush1.bf16.msra.mxu0 %v4150
        %5259 = vmatprep.subr.bf16.mxu0 %v4183
        %5260 = vmatpush1.bf16.msra.mxu0 %v4182
        %5261 = vmatprep.subr.bf16.mxu0 %v4215
        %5262 = vmatpush1.bf16.msra.mxu0 %v4214
        %5263 = vmatprep.subr.bf16.mxu0 %v4247
        %5264 = vmatpush1.bf16.msra.mxu0 %v4246
        %5265 = vmatprep.subr.bf16.mxu0 %v4279
        %5266 = vmatpush1.bf16.msra.mxu0 %v4278
        %5267 = vmatprep.subr.bf16.mxu0 %v4311
        %5268 = vmatpush1.bf16.msra.mxu0 %v4310
        %5269 = vmatprep.subr.bf16.mxu0 %v4343
        %5270 = vmatpush1.bf16.msra.mxu0 %v4342
        %5271 = vmatprep.subr.bf16.mxu0 %v4375
        %5272 = vmatpush1.bf16.msra.mxu0 %v4374
        %5273 = vmatprep.subr.bf16.mxu0 %v4407
        %5274 = vmatpush1.bf16.msra.mxu0 %v4406
        %5275 = vmatprep.subr.bf16.mxu0 %v4439
        %5276 = vmatpush1.bf16.msra.mxu0 %v4438
        %5277 = vmatprep.subr.bf16.mxu0 %v4471
        %5278 = vmatpush1.bf16.msra.mxu0 %v4470
        %5279 = vmatprep.subr.bf16.mxu0 %v4503
        %5280 = vmatpush1.bf16.msra.mxu0 %v4502
        %5281 = vmatprep.mubr.bf16.mxu0 %v1967
        %5282 = vmatmul.mubr.bf16.gmra.mrb[0].mxu0 %v1966
        %v5283 = vpop.f32.mrb[0].mxu0
        %v5284 = vadd.f32 %v5059, %v5283
        %v5285 = vpop.f32.mrb[0].mxu0
        %v5286 = vadd.f32 %v5063, %v5285
        %v5287 = vpop.f32.mrb[0].mxu0
        %v5288 = vpop.f32.mrb[0].mxu0
        %5289 = vdwg.mxu0
        %5290 = vmatprep.subr.bf16.mxu0 %v4025
        %5291 = vmatpush1.bf16.msra.mxu0 %v4024
        %5292 = vmatprep.subr.bf16.mxu0 %v4057
        %5293 = vmatpush1.bf16.msra.mxu0 %v4056
        %5294 = vmatprep.subr.bf16.mxu0 %v4089
        %5295 = vmatpush1.bf16.msra.mxu0 %v4088
        %5296 = vmatprep.subr.bf16.mxu0 %v4121
        %5297 = vmatpush1.bf16.msra.mxu0 %v4120
        %5298 = vmatprep.subr.bf16.mxu0 %v4153
        %5299 = vmatpush1.bf16.msra.mxu0 %v4152
        %5300 = vmatprep.subr.bf16.mxu0 %v4185
        %5301 = vmatpush1.bf16.msra.mxu0 %v4184
        %5302 = vmatprep.subr.bf16.mxu0 %v4217
        %5303 = vmatpush1.bf16.msra.mxu0 %v4216
        %5304 = vmatprep.subr.bf16.mxu0 %v4249
        %5305 = vmatpush1.bf16.msra.mxu0 %v4248
        %5306 = vmatprep.subr.bf16.mxu0 %v4281
        %5307 = vmatpush1.bf16.msra.mxu0 %v4280
        %5308 = vmatprep.subr.bf16.mxu0 %v4313
        %5309 = vmatpush1.bf16.msra.mxu0 %v4312
        %5310 = vmatprep.subr.bf16.mxu0 %v4345
        %5311 = vmatpush1.bf16.msra.mxu0 %v4344
        %5312 = vmatprep.subr.bf16.mxu0 %v4377
        %5313 = vmatpush1.bf16.msra.mxu0 %v4376
        %5314 = vmatprep.subr.bf16.mxu0 %v4409
        %5315 = vmatpush1.bf16.msra.mxu0 %v4408
        %5316 = vmatprep.subr.bf16.mxu0 %v4441
        %5317 = vmatpush1.bf16.msra.mxu0 %v4440
        %5318 = vmatprep.subr.bf16.mxu0 %v4473
        %5319 = vmatpush1.bf16.msra.mxu0 %v4472
        %5320 = vmatprep.subr.bf16.mxu0 %v4505
        %5321 = vmatpush1.bf16.msra.mxu0 %v4504
        %5322 = vmatprep.mubr.bf16.mxu0 %v1967
        %5323 = vmatmul.mubr.bf16.gmra.mrb[0].mxu0 %v1966
        %v5324 = vpop.f32.mrb[0].mxu0
        %v5325 = vadd.f32 %v5067, %v5324
        %v5326 = vpop.f32.mrb[0].mxu0
        %v5327 = vadd.f32 %v5071, %v5326
        %v5328 = vpop.f32.mrb[0].mxu0
        %v5329 = vpop.f32.mrb[0].mxu0
        %5330 = vdwg.mxu0
        %5331 = vmatprep.subr.bf16.mxu0 %v4027
        %5332 = vmatpush1.bf16.msra.mxu0 %v4026
        %5333 = vmatprep.subr.bf16.mxu0 %v4059
        %5334 = vmatpush1.bf16.msra.mxu0 %v4058
        %5335 = vmatprep.subr.bf16.mxu0 %v4091
        %5336 = vmatpush1.bf16.msra.mxu0 %v4090
        %5337 = vmatprep.subr.bf16.mxu0 %v4123
        %5338 = vmatpush1.bf16.msra.mxu0 %v4122
        %5339 = vmatprep.subr.bf16.mxu0 %v4155
        %5340 = vmatpush1.bf16.msra.mxu0 %v4154
        %5341 = vmatprep.subr.bf16.mxu0 %v4187
        %5342 = vmatpush1.bf16.msra.mxu0 %v4186
        %5343 = vmatprep.subr.bf16.mxu0 %v4219
        %5344 = vmatpush1.bf16.msra.mxu0 %v4218
        %5345 = vmatprep.subr.bf16.mxu0 %v4251
        %5346 = vmatpush1.bf16.msra.mxu0 %v4250
        %5347 = vmatprep.subr.bf16.mxu0 %v4283
        %5348 = vmatpush1.bf16.msra.mxu0 %v4282
        %5349 = vmatprep.subr.bf16.mxu0 %v4315
        %5350 = vmatpush1.bf16.msra.mxu0 %v4314
        %5351 = vmatprep.subr.bf16.mxu0 %v4347
        %5352 = vmatpush1.bf16.msra.mxu0 %v4346
        %5353 = vmatprep.subr.bf16.mxu0 %v4379
        %5354 = vmatpush1.bf16.msra.mxu0 %v4378
        %5355 = vmatprep.subr.bf16.mxu0 %v4411
        %5356 = vmatpush1.bf16.msra.mxu0 %v4410
        %5357 = vmatprep.subr.bf16.mxu0 %v4443
        %5358 = vmatpush1.bf16.msra.mxu0 %v4442
        %5359 = vmatprep.subr.bf16.mxu0 %v4475
        %5360 = vmatpush1.bf16.msra.mxu0 %v4474
        %5361 = vmatprep.subr.bf16.mxu0 %v4507
        %5362 = vmatpush1.bf16.msra.mxu0 %v4506
        %5363 = vmatprep.mubr.bf16.mxu0 %v1967
        %5364 = vmatmul.mubr.bf16.gmra.mrb[0].mxu0 %v1966
        %v5365 = vpop.f32.mrb[0].mxu0
        %v5366 = vadd.f32 %v5075, %v5365
        %v5367 = vpop.f32.mrb[0].mxu0
        %v5368 = vadd.f32 %v5079, %v5367
        %v5369 = vpop.f32.mrb[0].mxu0
        %v5370 = vpop.f32.mrb[0].mxu0
        %5371 = vdwg.mxu0
        %5372 = vmatprep.subr.bf16.mxu0 %v4029
        %5373 = vmatpush1.bf16.msra.mxu0 %v4028
        %5374 = vmatprep.subr.bf16.mxu0 %v4061
        %5375 = vmatpush1.bf16.msra.mxu0 %v4060
        %5376 = vmatprep.subr.bf16.mxu0 %v4093
        %5377 = vmatpush1.bf16.msra.mxu0 %v4092
        %5378 = vmatprep.subr.bf16.mxu0 %v4125
        %5379 = vmatpush1.bf16.msra.mxu0 %v4124
        %5380 = vmatprep.subr.bf16.mxu0 %v4157
        %5381 = vmatpush1.bf16.msra.mxu0 %v4156
        %5382 = vmatprep.subr.bf16.mxu0 %v4189
        %5383 = vmatpush1.bf16.msra.mxu0 %v4188
        %5384 = vmatprep.subr.bf16.mxu0 %v4221
        %5385 = vmatpush1.bf16.msra.mxu0 %v4220
        %5386 = vmatprep.subr.bf16.mxu0 %v4253
        %5387 = vmatpush1.bf16.msra.mxu0 %v4252
        %5388 = vmatprep.subr.bf16.mxu0 %v4285
        %5389 = vmatpush1.bf16.msra.mxu0 %v4284
        %5390 = vmatprep.subr.bf16.mxu0 %v4317
        %5391 = vmatpush1.bf16.msra.mxu0 %v4316
        %5392 = vmatprep.subr.bf16.mxu0 %v4349
        %5393 = vmatpush1.bf16.msra.mxu0 %v4348
        %5394 = vmatprep.subr.bf16.mxu0 %v4381
        %5395 = vmatpush1.bf16.msra.mxu0 %v4380
        %5396 = vmatprep.subr.bf16.mxu0 %v4413
        %5397 = vmatpush1.bf16.msra.mxu0 %v4412
        %5398 = vmatprep.subr.bf16.mxu0 %v4445
        %5399 = vmatpush1.bf16.msra.mxu0 %v4444
        %5400 = vmatprep.subr.bf16.mxu0 %v4477
        %5401 = vmatpush1.bf16.msra.mxu0 %v4476
        %5402 = vmatprep.subr.bf16.mxu0 %v4509
        %5403 = vmatpush1.bf16.msra.mxu0 %v4508
        %5404 = vmatprep.mubr.bf16.mxu0 %v1967
        %5405 = vmatmul.mubr.bf16.gmra.mrb[0].mxu0 %v1966
        %v5406 = vpop.f32.mrb[0].mxu0
        %v5407 = vadd.f32 %v5083, %v5406
        %v5408 = vpop.f32.mrb[0].mxu0
        %v5409 = vadd.f32 %v5087, %v5408
        %v5410 = vpop.f32.mrb[0].mxu0
        %v5411 = vpop.f32.mrb[0].mxu0
        %5412 = vdwg.mxu0
        %5413 = vmatprep.subr.bf16.mxu0 %v4031
        %5414 = vmatpush1.bf16.msra.mxu0 %v4030
        %5415 = vmatprep.subr.bf16.mxu0 %v4063
        %5416 = vmatpush1.bf16.msra.mxu0 %v4062
        %5417 = vmatprep.subr.bf16.mxu0 %v4095
        %5418 = vmatpush1.bf16.msra.mxu0 %v4094
        %5419 = vmatprep.subr.bf16.mxu0 %v4127
        %5420 = vmatpush1.bf16.msra.mxu0 %v4126
        %5421 = vmatprep.subr.bf16.mxu0 %v4159
        %5422 = vmatpush1.bf16.msra.mxu0 %v4158
        %5423 = vmatprep.subr.bf16.mxu0 %v4191
        %5424 = vmatpush1.bf16.msra.mxu0 %v4190
        %5425 = vmatprep.subr.bf16.mxu0 %v4223
        %5426 = vmatpush1.bf16.msra.mxu0 %v4222
        %5427 = vmatprep.subr.bf16.mxu0 %v4255
        %5428 = vmatpush1.bf16.msra.mxu0 %v4254
        %5429 = vmatprep.subr.bf16.mxu0 %v4287
        %5430 = vmatpush1.bf16.msra.mxu0 %v4286
        %5431 = vmatprep.subr.bf16.mxu0 %v4319
        %5432 = vmatpush1.bf16.msra.mxu0 %v4318
        %5433 = vmatprep.subr.bf16.mxu0 %v4351
        %5434 = vmatpush1.bf16.msra.mxu0 %v4350
        %5435 = vmatprep.subr.bf16.mxu0 %v4383
        %5436 = vmatpush1.bf16.msra.mxu0 %v4382
        %5437 = vmatprep.subr.bf16.mxu0 %v4415
        %5438 = vmatpush1.bf16.msra.mxu0 %v4414
        %5439 = vmatprep.subr.bf16.mxu0 %v4447
        %5440 = vmatpush1.bf16.msra.mxu0 %v4446
        %5441 = vmatprep.subr.bf16.mxu0 %v4479
        %5442 = vmatpush1.bf16.msra.mxu0 %v4478
        %5443 = vmatprep.subr.bf16.mxu0 %v4511
        %5444 = vmatpush1.bf16.msra.mxu0 %v4510
        %5445 = vmatprep.mubr.bf16.mxu0 %v1967
        %5446 = vmatmul.mubr.bf16.gmra.mrb[0].mxu0 %v1966
        %v5447 = vpop.f32.mrb[0].mxu0
        %v5448 = vadd.f32 %v5091, %v5447
        %v5449 = vpop.f32.mrb[0].mxu0
        %v5450 = vadd.f32 %v5095, %v5449
        %v5451 = vpop.f32.mrb[0].mxu0
        %v5452 = vpop.f32.mrb[0].mxu0
        %5453 = vdwg.mxu0
        %5454 = vmatprep.subr.bf16.mxu0 %v4033
        %5455 = vmatpush1.bf16.msra.mxu0 %v4032
        %5456 = vmatprep.subr.bf16.mxu0 %v4065
        %5457 = vmatpush1.bf16.msra.mxu0 %v4064
        %5458 = vmatprep.subr.bf16.mxu0 %v4097
        %5459 = vmatpush1.bf16.msra.mxu0 %v4096
        %5460 = vmatprep.subr.bf16.mxu0 %v4129
        %5461 = vmatpush1.bf16.msra.mxu0 %v4128
        %5462 = vmatprep.subr.bf16.mxu0 %v4161
        %5463 = vmatpush1.bf16.msra.mxu0 %v4160
        %5464 = vmatprep.subr.bf16.mxu0 %v4193
        %5465 = vmatpush1.bf16.msra.mxu0 %v4192
        %5466 = vmatprep.subr.bf16.mxu0 %v4225
        %5467 = vmatpush1.bf16.msra.mxu0 %v4224
        %5468 = vmatprep.subr.bf16.mxu0 %v4257
        %5469 = vmatpush1.bf16.msra.mxu0 %v4256
        %5470 = vmatprep.subr.bf16.mxu0 %v4289
        %5471 = vmatpush1.bf16.msra.mxu0 %v4288
        %5472 = vmatprep.subr.bf16.mxu0 %v4321
        %5473 = vmatpush1.bf16.msra.mxu0 %v4320
        %5474 = vmatprep.subr.bf16.mxu0 %v4353
        %5475 = vmatpush1.bf16.msra.mxu0 %v4352
        %5476 = vmatprep.subr.bf16.mxu0 %v4385
        %5477 = vmatpush1.bf16.msra.mxu0 %v4384
        %5478 = vmatprep.subr.bf16.mxu0 %v4417
        %5479 = vmatpush1.bf16.msra.mxu0 %v4416
        %5480 = vmatprep.subr.bf16.mxu0 %v4449
        %5481 = vmatpush1.bf16.msra.mxu0 %v4448
        %5482 = vmatprep.subr.bf16.mxu0 %v4481
        %5483 = vmatpush1.bf16.msra.mxu0 %v4480
        %5484 = vmatprep.subr.bf16.mxu0 %v4513
        %5485 = vmatpush1.bf16.msra.mxu0 %v4512
        %5486 = vmatprep.mubr.bf16.mxu0 %v1967
        %5487 = vmatmul.mubr.bf16.gmra.mrb[0].mxu0 %v1966
        %v5488 = vpop.f32.mrb[0].mxu0
        %v5489 = vadd.f32 %v5099, %v5488
        %v5490 = vpop.f32.mrb[0].mxu0
        %v5491 = vadd.f32 %v5103, %v5490
        %v5492 = vpop.f32.mrb[0].mxu0
        %v5493 = vpop.f32.mrb[0].mxu0
        %5494 = vdwg.mxu0
        %5495 = vmatprep.subr.bf16.mxu0 %v4035
        %5496 = vmatpush1.bf16.msra.mxu0 %v4034
        %5497 = vmatprep.subr.bf16.mxu0 %v4067
        %5498 = vmatpush1.bf16.msra.mxu0 %v4066
        %5499 = vmatprep.subr.bf16.mxu0 %v4099
        %5500 = vmatpush1.bf16.msra.mxu0 %v4098
        %5501 = vmatprep.subr.bf16.mxu0 %v4131
        %5502 = vmatpush1.bf16.msra.mxu0 %v4130
        %5503 = vmatprep.subr.bf16.mxu0 %v4163
        %5504 = vmatpush1.bf16.msra.mxu0 %v4162
        %5505 = vmatprep.subr.bf16.mxu0 %v4195
        %5506 = vmatpush1.bf16.msra.mxu0 %v4194
        %5507 = vmatprep.subr.bf16.mxu0 %v4227
        %5508 = vmatpush1.bf16.msra.mxu0 %v4226
        %5509 = vmatprep.subr.bf16.mxu0 %v4259
        %5510 = vmatpush1.bf16.msra.mxu0 %v4258
        %5511 = vmatprep.subr.bf16.mxu0 %v4291
        %5512 = vmatpush1.bf16.msra.mxu0 %v4290
        %5513 = vmatprep.subr.bf16.mxu0 %v4323
        %5514 = vmatpush1.bf16.msra.mxu0 %v4322
        %5515 = vmatprep.subr.bf16.mxu0 %v4355
        %5516 = vmatpush1.bf16.msra.mxu0 %v4354
        %5517 = vmatprep.subr.bf16.mxu0 %v4387
        %5518 = vmatpush1.bf16.msra.mxu0 %v4386
        %5519 = vmatprep.subr.bf16.mxu0 %v4419
        %5520 = vmatpush1.bf16.msra.mxu0 %v4418
        %5521 = vmatprep.subr.bf16.mxu0 %v4451
        %5522 = vmatpush1.bf16.msra.mxu0 %v4450
        %5523 = vmatprep.subr.bf16.mxu0 %v4483
        %5524 = vmatpush1.bf16.msra.mxu0 %v4482
        %5525 = vmatprep.subr.bf16.mxu0 %v4515
        %5526 = vmatpush1.bf16.msra.mxu0 %v4514
        %5527 = vmatprep.mubr.bf16.mxu0 %v1967
        %5528 = vmatmul.mubr.bf16.gmra.mrb[0].mxu0 %v1966
        %v5529 = vpop.f32.mrb[0].mxu0
        %v5530 = vadd.f32 %v5107, %v5529
        %v5531 = vpop.f32.mrb[0].mxu0
        %v5532 = vadd.f32 %v5111, %v5531
        %v5533 = vpop.f32.mrb[0].mxu0
        %v5534 = vpop.f32.mrb[0].mxu0
        %5535 = vdwg.mxu0
        %5536 = vmatprep.subr.bf16.mxu0 %v4037
        %5537 = vmatpush1.bf16.msra.mxu0 %v4036
        %5538 = vmatprep.subr.bf16.mxu0 %v4069
        %5539 = vmatpush1.bf16.msra.mxu0 %v4068
        %5540 = vmatprep.subr.bf16.mxu0 %v4101
        %5541 = vmatpush1.bf16.msra.mxu0 %v4100
        %5542 = vmatprep.subr.bf16.mxu0 %v4133
        %5543 = vmatpush1.bf16.msra.mxu0 %v4132
        %5544 = vmatprep.subr.bf16.mxu0 %v4165
        %5545 = vmatpush1.bf16.msra.mxu0 %v4164
        %5546 = vmatprep.subr.bf16.mxu0 %v4197
        %5547 = vmatpush1.bf16.msra.mxu0 %v4196
        %5548 = vmatprep.subr.bf16.mxu0 %v4229
        %5549 = vmatpush1.bf16.msra.mxu0 %v4228
        %5550 = vmatprep.subr.bf16.mxu0 %v4261
        %5551 = vmatpush1.bf16.msra.mxu0 %v4260
        %5552 = vmatprep.subr.bf16.mxu0 %v4293
        %5553 = vmatpush1.bf16.msra.mxu0 %v4292
        %5554 = vmatprep.subr.bf16.mxu0 %v4325
        %5555 = vmatpush1.bf16.msra.mxu0 %v4324
        %5556 = vmatprep.subr.bf16.mxu0 %v4357
        %5557 = vmatpush1.bf16.msra.mxu0 %v4356
        %5558 = vmatprep.subr.bf16.mxu0 %v4389
        %5559 = vmatpush1.bf16.msra.mxu0 %v4388
        %5560 = vmatprep.subr.bf16.mxu0 %v4421
        %5561 = vmatpush1.bf16.msra.mxu0 %v4420
        %5562 = vmatprep.subr.bf16.mxu0 %v4453
        %5563 = vmatpush1.bf16.msra.mxu0 %v4452
        %5564 = vmatprep.subr.bf16.mxu0 %v4485
        %5565 = vmatpush1.bf16.msra.mxu0 %v4484
        %5566 = vmatprep.subr.bf16.mxu0 %v4517
        %5567 = vmatpush1.bf16.msra.mxu0 %v4516
        %5568 = vmatprep.mubr.bf16.mxu0 %v1967
        %5569 = vmatmul.mubr.bf16.gmra.mrb[0].mxu0 %v1966
        %v5570 = vpop.f32.mrb[0].mxu0
        %v5571 = vadd.f32 %v5115, %v5570
        %v5572 = vpop.f32.mrb[0].mxu0
        %v5573 = vadd.f32 %v5119, %v5572
        %v5574 = vpop.f32.mrb[0].mxu0
        %v5575 = vpop.f32.mrb[0].mxu0
        %5576 = vdwg.mxu0
        %5577 = vmatprep.subr.bf16.mxu0 %v4039
        %5578 = vmatpush1.bf16.msra.mxu0 %v4038
        %5579 = vmatprep.subr.bf16.mxu0 %v4071
        %5580 = vmatpush1.bf16.msra.mxu0 %v4070
        %5581 = vmatprep.subr.bf16.mxu0 %v4103
        %5582 = vmatpush1.bf16.msra.mxu0 %v4102
        %5583 = vmatprep.subr.bf16.mxu0 %v4135
        %5584 = vmatpush1.bf16.msra.mxu0 %v4134
        %5585 = vmatprep.subr.bf16.mxu0 %v4167
        %5586 = vmatpush1.bf16.msra.mxu0 %v4166
        %5587 = vmatprep.subr.bf16.mxu0 %v4199
        %5588 = vmatpush1.bf16.msra.mxu0 %v4198
        %5589 = vmatprep.subr.bf16.mxu0 %v4231
        %5590 = vmatpush1.bf16.msra.mxu0 %v4230
        %5591 = vmatprep.subr.bf16.mxu0 %v4263
        %5592 = vmatpush1.bf16.msra.mxu0 %v4262
        %5593 = vmatprep.subr.bf16.mxu0 %v4295
        %5594 = vmatpush1.bf16.msra.mxu0 %v4294
        %5595 = vmatprep.subr.bf16.mxu0 %v4327
        %5596 = vmatpush1.bf16.msra.mxu0 %v4326
        %5597 = vmatprep.subr.bf16.mxu0 %v4359
        %5598 = vmatpush1.bf16.msra.mxu0 %v4358
        %5599 = vmatprep.subr.bf16.mxu0 %v4391
        %5600 = vmatpush1.bf16.msra.mxu0 %v4390
        %5601 = vmatprep.subr.bf16.mxu0 %v4423
        %5602 = vmatpush1.bf16.msra.mxu0 %v4422
        %5603 = vmatprep.subr.bf16.mxu0 %v4455
        %5604 = vmatpush1.bf16.msra.mxu0 %v4454
        %5605 = vmatprep.subr.bf16.mxu0 %v4487
        %5606 = vmatpush1.bf16.msra.mxu0 %v4486
        %5607 = vmatprep.subr.bf16.mxu0 %v4519
        %5608 = vmatpush1.bf16.msra.mxu0 %v4518
        %5609 = vmatprep.mubr.bf16.mxu0 %v1967
        %5610 = vmatmul.mubr.bf16.gmra.mrb[0].mxu0 %v1966
        %v5611 = vpop.f32.mrb[0].mxu0
        %v5612 = vadd.f32 %v5123, %v5611
        %v5613 = vpop.f32.mrb[0].mxu0
        %v5614 = vadd.f32 %v5127, %v5613
        %v5615 = vpop.f32.mrb[0].mxu0
        %v5616 = vpop.f32.mrb[0].mxu0
        %5617 = vdwg.mxu0
        %5618 = vmatprep.subr.bf16.mxu0 %v4041
        %5619 = vmatpush1.bf16.msra.mxu0 %v4040
        %5620 = vmatprep.subr.bf16.mxu0 %v4073
        %5621 = vmatpush1.bf16.msra.mxu0 %v4072
        %5622 = vmatprep.subr.bf16.mxu0 %v4105
        %5623 = vmatpush1.bf16.msra.mxu0 %v4104
        %5624 = vmatprep.subr.bf16.mxu0 %v4137
        %5625 = vmatpush1.bf16.msra.mxu0 %v4136
        %5626 = vmatprep.subr.bf16.mxu0 %v4169
        %5627 = vmatpush1.bf16.msra.mxu0 %v4168
        %5628 = vmatprep.subr.bf16.mxu0 %v4201
        %5629 = vmatpush1.bf16.msra.mxu0 %v4200
        %5630 = vmatprep.subr.bf16.mxu0 %v4233
        %5631 = vmatpush1.bf16.msra.mxu0 %v4232
        %5632 = vmatprep.subr.bf16.mxu0 %v4265
        %5633 = vmatpush1.bf16.msra.mxu0 %v4264
        %5634 = vmatprep.subr.bf16.mxu0 %v4297
        %5635 = vmatpush1.bf16.msra.mxu0 %v4296
        %5636 = vmatprep.subr.bf16.mxu0 %v4329
        %5637 = vmatpush1.bf16.msra.mxu0 %v4328
        %5638 = vmatprep.subr.bf16.mxu0 %v4361
        %5639 = vmatpush1.bf16.msra.mxu0 %v4360
        %5640 = vmatprep.subr.bf16.mxu0 %v4393
        %5641 = vmatpush1.bf16.msra.mxu0 %v4392
        %5642 = vmatprep.subr.bf16.mxu0 %v4425
        %5643 = vmatpush1.bf16.msra.mxu0 %v4424
        %5644 = vmatprep.subr.bf16.mxu0 %v4457
        %5645 = vmatpush1.bf16.msra.mxu0 %v4456
        %5646 = vmatprep.subr.bf16.mxu0 %v4489
        %5647 = vmatpush1.bf16.msra.mxu0 %v4488
        %5648 = vmatprep.subr.bf16.mxu0 %v4521
        %5649 = vmatpush1.bf16.msra.mxu0 %v4520
        %5650 = vmatprep.mubr.bf16.mxu0 %v1967
        %5651 = vmatmul.mubr.bf16.gmra.mrb[0].mxu0 %v1966
        %v5652 = vpop.f32.mrb[0].mxu0
        %v5653 = vadd.f32 %v5131, %v5652
        %v5654 = vpop.f32.mrb[0].mxu0
        %v5655 = vadd.f32 %v5135, %v5654
        %v5656 = vpop.f32.mrb[0].mxu0
        %v5657 = vpop.f32.mrb[0].mxu0
        %5658 = vdwg.mxu0
        %5659 = vmatprep.subr.bf16.mxu0 %v4043
        %5660 = vmatpush1.bf16.msra.mxu0 %v4042
        %5661 = vmatprep.subr.bf16.mxu0 %v4075
        %5662 = vmatpush1.bf16.msra.mxu0 %v4074
        %5663 = vmatprep.subr.bf16.mxu0 %v4107
        %5664 = vmatpush1.bf16.msra.mxu0 %v4106
        %5665 = vmatprep.subr.bf16.mxu0 %v4139
        %5666 = vmatpush1.bf16.msra.mxu0 %v4138
        %5667 = vmatprep.subr.bf16.mxu0 %v4171
        %5668 = vmatpush1.bf16.msra.mxu0 %v4170
        %5669 = vmatprep.subr.bf16.mxu0 %v4203
        %5670 = vmatpush1.bf16.msra.mxu0 %v4202
        %5671 = vmatprep.subr.bf16.mxu0 %v4235
        %5672 = vmatpush1.bf16.msra.mxu0 %v4234
        %5673 = vmatprep.subr.bf16.mxu0 %v4267
        %5674 = vmatpush1.bf16.msra.mxu0 %v4266
        %5675 = vmatprep.subr.bf16.mxu0 %v4299
        %5676 = vmatpush1.bf16.msra.mxu0 %v4298
        %5677 = vmatprep.subr.bf16.mxu0 %v4331
        %5678 = vmatpush1.bf16.msra.mxu0 %v4330
        %5679 = vmatprep.subr.bf16.mxu0 %v4363
        %5680 = vmatpush1.bf16.msra.mxu0 %v4362
        %5681 = vmatprep.subr.bf16.mxu0 %v4395
        %5682 = vmatpush1.bf16.msra.mxu0 %v4394
        %5683 = vmatprep.subr.bf16.mxu0 %v4427
        %5684 = vmatpush1.bf16.msra.mxu0 %v4426
        %5685 = vmatprep.subr.bf16.mxu0 %v4459
        %5686 = vmatpush1.bf16.msra.mxu0 %v4458
        %5687 = vmatprep.subr.bf16.mxu0 %v4491
        %5688 = vmatpush1.bf16.msra.mxu0 %v4490
        %5689 = vmatprep.subr.bf16.mxu0 %v4523
        %5690 = vmatpush1.bf16.msra.mxu0 %v4522
        %5691 = vmatprep.mubr.bf16.mxu0 %v1967
        %5692 = vmatmul.mubr.bf16.gmra.mrb[0].mxu0 %v1966
        %v5693 = vpop.f32.mrb[0].mxu0
        %v5694 = vadd.f32 %v5139, %v5693
        %v5695 = vpop.f32.mrb[0].mxu0
        %v5696 = vadd.f32 %v5143, %v5695
        %v5697 = vpop.f32.mrb[0].mxu0
        %v5698 = vpop.f32.mrb[0].mxu0
        %5699 = vdwg.mxu0
        %5700 = vmatprep.subr.bf16.mxu0 %v4045
        %5701 = vmatpush1.bf16.msra.mxu0 %v4044
        %5702 = vmatprep.subr.bf16.mxu0 %v4077
        %5703 = vmatpush1.bf16.msra.mxu0 %v4076
        %5704 = vmatprep.subr.bf16.mxu0 %v4109
        %5705 = vmatpush1.bf16.msra.mxu0 %v4108
        %5706 = vmatprep.subr.bf16.mxu0 %v4141
        %5707 = vmatpush1.bf16.msra.mxu0 %v4140
        %5708 = vmatprep.subr.bf16.mxu0 %v4173
        %5709 = vmatpush1.bf16.msra.mxu0 %v4172
        %5710 = vmatprep.subr.bf16.mxu0 %v4205
        %5711 = vmatpush1.bf16.msra.mxu0 %v4204
        %5712 = vmatprep.subr.bf16.mxu0 %v4237
        %5713 = vmatpush1.bf16.msra.mxu0 %v4236
        %5714 = vmatprep.subr.bf16.mxu0 %v4269
        %5715 = vmatpush1.bf16.msra.mxu0 %v4268
        %5716 = vmatprep.subr.bf16.mxu0 %v4301
        %5717 = vmatpush1.bf16.msra.mxu0 %v4300
        %5718 = vmatprep.subr.bf16.mxu0 %v4333
        %5719 = vmatpush1.bf16.msra.mxu0 %v4332
        %5720 = vmatprep.subr.bf16.mxu0 %v4365
        %5721 = vmatpush1.bf16.msra.mxu0 %v4364
        %5722 = vmatprep.subr.bf16.mxu0 %v4397
        %5723 = vmatpush1.bf16.msra.mxu0 %v4396
        %5724 = vmatprep.subr.bf16.mxu0 %v4429
        %5725 = vmatpush1.bf16.msra.mxu0 %v4428
        %5726 = vmatprep.subr.bf16.mxu0 %v4461
        %5727 = vmatpush1.bf16.msra.mxu0 %v4460
        %5728 = vmatprep.subr.bf16.mxu0 %v4493
        %5729 = vmatpush1.bf16.msra.mxu0 %v4492
        %5730 = vmatprep.subr.bf16.mxu0 %v4525
        %5731 = vmatpush1.bf16.msra.mxu0 %v4524
        %5732 = vmatprep.mubr.bf16.mxu0 %v1967
        %5733 = vmatmul.mubr.bf16.gmra.mrb[0].mxu0 %v1966
        %v5734 = vpop.f32.mrb[0].mxu0
        %v5735 = vadd.f32 %v5147, %v5734
        %v5736 = vpop.f32.mrb[0].mxu0
        %v5737 = vadd.f32 %v5151, %v5736
        %v5738 = vpop.f32.mrb[0].mxu0
        %v5739 = vpop.f32.mrb[0].mxu0
        %5740 = vdwg.mxu0
        %5741 = vmatprep.subr.bf16.mxu0 %v4047
        %5742 = vmatpush1.bf16.msra.mxu0 %v4046
        %5743 = vmatprep.subr.bf16.mxu0 %v4079
        %5744 = vmatpush1.bf16.msra.mxu0 %v4078
        %5745 = vmatprep.subr.bf16.mxu0 %v4111
        %5746 = vmatpush1.bf16.msra.mxu0 %v4110
        %5747 = vmatprep.subr.bf16.mxu0 %v4143
        %5748 = vmatpush1.bf16.msra.mxu0 %v4142
        %5749 = vmatprep.subr.bf16.mxu0 %v4175
        %5750 = vmatpush1.bf16.msra.mxu0 %v4174
        %5751 = vmatprep.subr.bf16.mxu0 %v4207
        %5752 = vmatpush1.bf16.msra.mxu0 %v4206
        %5753 = vmatprep.subr.bf16.mxu0 %v4239
        %5754 = vmatpush1.bf16.msra.mxu0 %v4238
        %5755 = vmatprep.subr.bf16.mxu0 %v4271
        %5756 = vmatpush1.bf16.msra.mxu0 %v4270
        %5757 = vmatprep.subr.bf16.mxu0 %v4303
        %5758 = vmatpush1.bf16.msra.mxu0 %v4302
        %5759 = vmatprep.subr.bf16.mxu0 %v4335
        %5760 = vmatpush1.bf16.msra.mxu0 %v4334
        %5761 = vmatprep.subr.bf16.mxu0 %v4367
        %5762 = vmatpush1.bf16.msra.mxu0 %v4366
        %5763 = vmatprep.subr.bf16.mxu0 %v4399
        %5764 = vmatpush1.bf16.msra.mxu0 %v4398
        %5765 = vmatprep.subr.bf16.mxu0 %v4431
        %5766 = vmatpush1.bf16.msra.mxu0 %v4430
        %5767 = vmatprep.subr.bf16.mxu0 %v4463
        %5768 = vmatpush1.bf16.msra.mxu0 %v4462
        %5769 = vmatprep.subr.bf16.mxu0 %v4495
        %5770 = vmatpush1.bf16.msra.mxu0 %v4494
        %5771 = vmatprep.subr.bf16.mxu0 %v4527
        %5772 = vmatpush1.bf16.msra.mxu0 %v4526
        %5773 = vmatprep.mubr.bf16.mxu0 %v1967
        %5774 = vmatmul.mubr.bf16.gmra.mrb[0].mxu0 %v1966
        %v5775 = vpop.f32.mrb[0].mxu0
        %v5776 = vadd.f32 %v5155, %v5775
        %v5777 = vpop.f32.mrb[0].mxu0
        %v5778 = vadd.f32 %v5159, %v5777
        %v5779 = vpop.f32.mrb[0].mxu0
        %v5780 = vpop.f32.mrb[0].mxu0
        %5781 = vdwg.mxu0
        %5782 = vmatprep.subr.bf16.mxu0 %v4049
        %5783 = vmatpush1.bf16.msra.mxu0 %v4048
        %5784 = vmatprep.subr.bf16.mxu0 %v4081
        %5785 = vmatpush1.bf16.msra.mxu0 %v4080
        %5786 = vmatprep.subr.bf16.mxu0 %v4113
        %5787 = vmatpush1.bf16.msra.mxu0 %v4112
        %5788 = vmatprep.subr.bf16.mxu0 %v4145
        %5789 = vmatpush1.bf16.msra.mxu0 %v4144
        %5790 = vmatprep.subr.bf16.mxu0 %v4177
        %5791 = vmatpush1.bf16.msra.mxu0 %v4176
        %5792 = vmatprep.subr.bf16.mxu0 %v4209
        %5793 = vmatpush1.bf16.msra.mxu0 %v4208
        %5794 = vmatprep.subr.bf16.mxu0 %v4241
        %5795 = vmatpush1.bf16.msra.mxu0 %v4240
        %5796 = vmatprep.subr.bf16.mxu0 %v4273
        %5797 = vmatpush1.bf16.msra.mxu0 %v4272
        %5798 = vmatprep.subr.bf16.mxu0 %v4305
        %5799 = vmatpush1.bf16.msra.mxu0 %v4304
        %5800 = vmatprep.subr.bf16.mxu0 %v4337
        %5801 = vmatpush1.bf16.msra.mxu0 %v4336
        %5802 = vmatprep.subr.bf16.mxu0 %v4369
        %5803 = vmatpush1.bf16.msra.mxu0 %v4368
        %5804 = vmatprep.subr.bf16.mxu0 %v4401
        %5805 = vmatpush1.bf16.msra.mxu0 %v4400
        %5806 = vmatprep.subr.bf16.mxu0 %v4433
        %5807 = vmatpush1.bf16.msra.mxu0 %v4432
        %5808 = vmatprep.subr.bf16.mxu0 %v4465
        %5809 = vmatpush1.bf16.msra.mxu0 %v4464
        %5810 = vmatprep.subr.bf16.mxu0 %v4497
        %5811 = vmatpush1.bf16.msra.mxu0 %v4496
        %5812 = vmatprep.subr.bf16.mxu0 %v4529
        %5813 = vmatpush1.bf16.msra.mxu0 %v4528
        %5814 = vmatprep.mubr.bf16.mxu0 %v1967
        %5815 = vmatmul.mubr.bf16.gmra.mrb[0].mxu0 %v1966
        %v5816 = vpop.f32.mrb[0].mxu0
        %v5817 = vadd.f32 %v5163, %v5816
        %v5818 = vpop.f32.mrb[0].mxu0
        %v5819 = vadd.f32 %v5167, %v5818
        %v5820 = vpop.f32.mrb[0].mxu0
        %v5821 = vpop.f32.mrb[0].mxu0
        %5822 = vdwg.mxu0
        %5823 = vmatprep.subr.bf16.mxu0 %v4051
        %5824 = vmatpush1.bf16.msra.mxu0 %v4050
        %5825 = vmatprep.subr.bf16.mxu0 %v4083
        %5826 = vmatpush1.bf16.msra.mxu0 %v4082
        %5827 = vmatprep.subr.bf16.mxu0 %v4115
        %5828 = vmatpush1.bf16.msra.mxu0 %v4114
        %5829 = vmatprep.subr.bf16.mxu0 %v4147
        %5830 = vmatpush1.bf16.msra.mxu0 %v4146
        %5831 = vmatprep.subr.bf16.mxu0 %v4179
        %5832 = vmatpush1.bf16.msra.mxu0 %v4178
        %5833 = vmatprep.subr.bf16.mxu0 %v4211
        %5834 = vmatpush1.bf16.msra.mxu0 %v4210
        %5835 = vmatprep.subr.bf16.mxu0 %v4243
        %5836 = vmatpush1.bf16.msra.mxu0 %v4242
        %5837 = vmatprep.subr.bf16.mxu0 %v4275
        %5838 = vmatpush1.bf16.msra.mxu0 %v4274
        %5839 = vmatprep.subr.bf16.mxu0 %v4307
        %5840 = vmatpush1.bf16.msra.mxu0 %v4306
        %5841 = vmatprep.subr.bf16.mxu0 %v4339
        %5842 = vmatpush1.bf16.msra.mxu0 %v4338
        %5843 = vmatprep.subr.bf16.mxu0 %v4371
        %5844 = vmatpush1.bf16.msra.mxu0 %v4370
        %5845 = vmatprep.subr.bf16.mxu0 %v4403
        %5846 = vmatpush1.bf16.msra.mxu0 %v4402
        %5847 = vmatprep.subr.bf16.mxu0 %v4435
        %5848 = vmatpush1.bf16.msra.mxu0 %v4434
        %5849 = vmatprep.subr.bf16.mxu0 %v4467
        %5850 = vmatpush1.bf16.msra.mxu0 %v4466
        %5851 = vmatprep.subr.bf16.mxu0 %v4499
        %5852 = vmatpush1.bf16.msra.mxu0 %v4498
        %5853 = vmatprep.subr.bf16.mxu0 %v4531
        %5854 = vmatpush1.bf16.msra.mxu0 %v4530
        %5855 = vmatprep.mubr.bf16.mxu0 %v1967
        %5856 = vmatmul.mubr.bf16.gmra.mrb[0].mxu0 %v1966
        %v5857 = vpop.f32.mrb[0].mxu0
        %v5858 = vadd.f32 %v5171, %v5857
        %v5859 = vpop.f32.mrb[0].mxu0
        %v5860 = vadd.f32 %v5175, %v5859
        %v5861 = vpop.f32.mrb[0].mxu0
        %v5862 = vpop.f32.mrb[0].mxu0
        %5863 = vdwg.mxu0
        %v5896 = vcombine.low %v5243, %v5245
        %v5897 = vcombine.low %v5284, %v5286
        %v5898 = vcombine.low %v5325, %v5327
        %v5899 = vcombine.low %v5366, %v5368
        %v5901 = vunpack.c.l.s4 1966171168
        %v5902 = vunpack.c.0.s8 %v5901
        %v5903 = vlaneseq
        %v5904 = vshrl.u32 %v5903, 7
        %v5905 = vsub.s32 %v5902, %v5904
        %v5906 = vrot.slane %v5896, %v5905
        %v5908 = vunpack.c.l.s4 1966171168
        %v5909 = vunpack.c.0.s8 %v5908
        %v5910 = vlaneseq
        %v5911 = vshrl.u32 %v5910, 7
        %v5912 = vsub.s32 %v5909, %v5911
        %v5913 = vrot.slane %v5897, %v5912
        %v5915 = vunpack.c.l.s4 1966171168
        %v5916 = vunpack.c.0.s8 %v5915
        %v5917 = vlaneseq
        %v5918 = vshrl.u32 %v5917, 7
        %v5919 = vsub.s32 %v5916, %v5918
        %v5920 = vrot.slane %v5898, %v5919
        %v5922 = vunpack.c.l.s4 1966171168
        %v5923 = vunpack.c.0.s8 %v5922
        %v5924 = vlaneseq
        %v5925 = vshrl.u32 %v5924, 7
        %v5926 = vsub.s32 %v5923, %v5925
        %v5927 = vrot.slane %v5899, %v5926
        %v5928 = vcombine.low %v5906, %v5913
        %v5929 = vcombine.low %v5920, %v5927
        %v5931 = vunpack.c.l.s4 1966171168
        %v5932 = vunpack.c.0.s8 %v5931
        %v5933 = vlaneseq
        %v5934 = vshrl.u32 %v5933, 7
        %v5935 = vsub.s32 %v5932, %v5934
        %v5936 = vrot.slane %v5928, %v5935
        %v5938 = vunpack.c.l.s4 1966171168
        %v5939 = vunpack.c.0.s8 %v5938
        %v5940 = vlaneseq
        %v5941 = vshrl.u32 %v5940, 7
        %v5942 = vsub.s32 %v5939, %v5941
        %v5943 = vrot.slane %v5929, %v5942
        %v5944 = vcombine.low %v5936, %v5943
        %v5945 = vcombine.low %v5407, %v5409
        %v5946 = vcombine.low %v5448, %v5450
        %v5947 = vcombine.low %v5489, %v5491
        %v5948 = vcombine.low %v5530, %v5532
        %v5950 = vunpack.c.l.s4 1966171168
        %v5951 = vunpack.c.0.s8 %v5950
        %v5952 = vlaneseq
        %v5953 = vshrl.u32 %v5952, 7
        %v5954 = vsub.s32 %v5951, %v5953
        %v5955 = vrot.slane %v5945, %v5954
        %v5957 = vunpack.c.l.s4 1966171168
        %v5958 = vunpack.c.0.s8 %v5957
        %v5959 = vlaneseq
        %v5960 = vshrl.u32 %v5959, 7
        %v5961 = vsub.s32 %v5958, %v5960
        %v5962 = vrot.slane %v5946, %v5961
        %v5964 = vunpack.c.l.s4 1966171168
        %v5965 = vunpack.c.0.s8 %v5964
        %v5966 = vlaneseq
        %v5967 = vshrl.u32 %v5966, 7
        %v5968 = vsub.s32 %v5965, %v5967
        %v5969 = vrot.slane %v5947, %v5968
        %v5971 = vunpack.c.l.s4 1966171168
        %v5972 = vunpack.c.0.s8 %v5971
        %v5973 = vlaneseq
        %v5974 = vshrl.u32 %v5973, 7
        %v5975 = vsub.s32 %v5972, %v5974
        %v5976 = vrot.slane %v5948, %v5975
        %v5977 = vcombine.low %v5955, %v5962
        %v5978 = vcombine.low %v5969, %v5976
        %v5980 = vunpack.c.l.s4 1966171168
        %v5981 = vunpack.c.0.s8 %v5980
        %v5982 = vlaneseq
        %v5983 = vshrl.u32 %v5982, 7
        %v5984 = vsub.s32 %v5981, %v5983
        %v5985 = vrot.slane %v5977, %v5984
        %v5987 = vunpack.c.l.s4 1966171168
        %v5988 = vunpack.c.0.s8 %v5987
        %v5989 = vlaneseq
        %v5990 = vshrl.u32 %v5989, 7
        %v5991 = vsub.s32 %v5988, %v5990
        %v5992 = vrot.slane %v5978, %v5991
        %v5993 = vcombine.low %v5985, %v5992
        %v5994 = vcombine.low %v5571, %v5573
        %v5995 = vcombine.low %v5612, %v5614
        %v5996 = vcombine.low %v5653, %v5655
        %v5997 = vcombine.low %v5694, %v5696
        %v5999 = vunpack.c.l.s4 1966171168
        %v6000 = vunpack.c.0.s8 %v5999
        %v6001 = vlaneseq
        %v6002 = vshrl.u32 %v6001, 7
        %v6003 = vsub.s32 %v6000, %v6002
        %v6004 = vrot.slane %v5994, %v6003
        %v6006 = vunpack.c.l.s4 1966171168
        %v6007 = vunpack.c.0.s8 %v6006
        %v6008 = vlaneseq
        %v6009 = vshrl.u32 %v6008, 7
        %v6010 = vsub.s32 %v6007, %v6009
        %v6011 = vrot.slane %v5995, %v6010
        %v6013 = vunpack.c.l.s4 1966171168
        %v6014 = vunpack.c.0.s8 %v6013
        %v6015 = vlaneseq
        %v6016 = vshrl.u32 %v6015, 7
        %v6017 = vsub.s32 %v6014, %v6016
        %v6018 = vrot.slane %v5996, %v6017
        %v6020 = vunpack.c.l.s4 1966171168
        %v6021 = vunpack.c.0.s8 %v6020
        %v6022 = vlaneseq
        %v6023 = vshrl.u32 %v6022, 7
        %v6024 = vsub.s32 %v6021, %v6023
        %v6025 = vrot.slane %v5997, %v6024
        %v6026 = vcombine.low %v6004, %v6011
        %v6027 = vcombine.low %v6018, %v6025
        %v6029 = vunpack.c.l.s4 1966171168
        %v6030 = vunpack.c.0.s8 %v6029
        %v6031 = vlaneseq
        %v6032 = vshrl.u32 %v6031, 7
        %v6033 = vsub.s32 %v6030, %v6032
        %v6034 = vrot.slane %v6026, %v6033
        %v6036 = vunpack.c.l.s4 1966171168
        %v6037 = vunpack.c.0.s8 %v6036
        %v6038 = vlaneseq
        %v6039 = vshrl.u32 %v6038, 7
        %v6040 = vsub.s32 %v6037, %v6039
        %v6041 = vrot.slane %v6027, %v6040
        %v6042 = vcombine.low %v6034, %v6041
        %v6043 = vcombine.low %v5735, %v5737
        %v6044 = vcombine.low %v5776, %v5778
        %v6045 = vcombine.low %v5817, %v5819
        %v6046 = vcombine.low %v5858, %v5860
        %v6048 = vunpack.c.l.s4 1966171168
        %v6049 = vunpack.c.0.s8 %v6048
        %v6050 = vlaneseq
        %v6051 = vshrl.u32 %v6050, 7
        %v6052 = vsub.s32 %v6049, %v6051
        %v6053 = vrot.slane %v6043, %v6052
        %v6055 = vunpack.c.l.s4 1966171168
        %v6056 = vunpack.c.0.s8 %v6055
        %v6057 = vlaneseq
        %v6058 = vshrl.u32 %v6057, 7
        %v6059 = vsub.s32 %v6056, %v6058
        %v6060 = vrot.slane %v6044, %v6059
        %v6062 = vunpack.c.l.s4 1966171168
        %v6063 = vunpack.c.0.s8 %v6062
        %v6064 = vlaneseq
        %v6065 = vshrl.u32 %v6064, 7
        %v6066 = vsub.s32 %v6063, %v6065
        %v6067 = vrot.slane %v6045, %v6066
        %v6069 = vunpack.c.l.s4 1966171168
        %v6070 = vunpack.c.0.s8 %v6069
        %v6071 = vlaneseq
        %v6072 = vshrl.u32 %v6071, 7
        %v6073 = vsub.s32 %v6070, %v6072
        %v6074 = vrot.slane %v6046, %v6073
        %v6075 = vcombine.low %v6053, %v6060
        %v6076 = vcombine.low %v6067, %v6074
        %v6078 = vunpack.c.l.s4 1966171168
        %v6079 = vunpack.c.0.s8 %v6078
        %v6080 = vlaneseq
        %v6081 = vshrl.u32 %v6080, 7
        %v6082 = vsub.s32 %v6079, %v6081
        %v6083 = vrot.slane %v6075, %v6082
        %v6085 = vunpack.c.l.s4 1966171168
        %v6086 = vunpack.c.0.s8 %v6085
        %v6087 = vlaneseq
        %v6088 = vshrl.u32 %v6087, 7
        %v6089 = vsub.s32 %v6086, %v6088
        %v6090 = vrot.slane %v6076, %v6089
        %v6091 = vcombine.low %v6083, %v6090
        %6096 = vst [vmem:[%s828] sm:$0xff] %v5944
        %6097 = vst [vmem:[%s828 + $0x8] sm:$0xff] %v5993
        %6098 = vst [vmem:[%s828 + $0x10] sm:$0xff] %v6042
        %6099 = vst [vmem:[%s828 + $0x18] sm:$0xff] %v6091
        %s6100 = sand.u32 %s437, 1
        %s6101 = scalar_lea.sflag [#allocation4], %s6100
        %s6102 = sand.u32 %s437, 1
        %s6103 = scalar_lea.vmem [#allocation29], %s6102
        %s6104 = sand.u32 %s463, 1
        %s6105 = scalar_lea.sflag [#allocation31], %s6104
        %s6106 = sand.u32 %s463, 1
        %s6107 = smul.addr %s6106, 32
        %s6108 = scalar_lea.vmem [#allocation30], %s6107
        // Predicated region
        $region161: #{tpu_custom_call.1} parent=91 // pred_check
          %p6109 = pneg %p447
        $region162: #{tpu_custom_call.1} parent=91 // pred_check_branch
          %6111 = sbr.rel (%p6109) target = $region164
        $region163: #{tpu_custom_call.1} parent=91 // pred_region
          %s6113 = ssub.s32 16, 16
          %6114 = vsyncadd %s6101, %s6113
          %s6115 = smul.addr %s46, 16
          %s6116 = scalar_lea.hbm %s18, %s6115
          %s6118 = sshll.u32 %s6103, 4
          %s6119 = int_to_ptr.vmem [resolvable:$true] %s6118
          %6121 = dma.vmem_to_hbm [thread:$0]  %s6119, 16, %s6116, %s6101
        $region164: #{tpu_custom_call.1} parent=91 // pred_fallthru
          _
        // Predicated region
        $region165: #{tpu_custom_call.1} parent=91 // pred_check
          %p6122 = pneg %p473
        $region166: #{tpu_custom_call.1} parent=91 // pred_check_branch
          %6124 = sbr.rel (%p6122) target = $region168
        $region167: #{tpu_custom_call.1} parent=91 // pred_region
          %s6126 = ssub.s32 512, 512
          %6127 = vsyncadd %s6105, %s6126
          %s6128 = smul.addr %s46, 32
          %s6129 = smul.addr %s6128, 16
          %s6130 = scalar_lea.hbm %s19, %s6129
          %s6132 = sshll.u32 %s6108, 4
          %s6133 = int_to_ptr.vmem [resolvable:$true] %s6132
          %6135 = dma.vmem_to_hbm [thread:$0]  %s6133, 512, %s6130, %s6105
        $region168: #{tpu_custom_call.1} parent=91 // pred_fallthru
          _
      $region92: #{tpu_custom_call.1} parent=5 // pred_fallthru
        _
      %p6136 = scmp.le.s32.totalorder 2, %s41
      // Predicated region
      $region169: #{tpu_custom_call.1} parent=5 // pred_check
        %p6137 = pneg %p6136
      $region170: #{tpu_custom_call.1} parent=5 // pred_check_branch
        %6139 = sbr.rel (%p6137) target = $region172
      $region171: #{tpu_custom_call.1} parent=5 // pred_region
        %s6140 = ssub.s32 %s41, 2
        // Predicated region
        $region173: #{tpu_custom_call.1} parent=171 // pred_check
          %p6141 = pneg %p453
        $region174: #{tpu_custom_call.1} parent=171 // pred_check_branch
          %6143 = sbr.rel (%p6141) target = $region176
        $region175: #{tpu_custom_call.1} parent=171 // pred_region
          %s6144 = sand.u32 %s438, 1
          %s6145 = scalar_lea.sflag [#allocation4], %s6144
          %s6146 = sand.u32 %s438, 1
          %s6147 = scalar_lea.vmem [#allocation29], %s6146
          %6148 = dma.done %s6145, 16
        $region176: #{tpu_custom_call.1} parent=171 // pred_fallthru
          _
        // Predicated region
        $region177: #{tpu_custom_call.1} parent=171 // pred_check
          %p6149 = pneg %p479
        $region178: #{tpu_custom_call.1} parent=171 // pred_check_branch
          %6151 = sbr.rel (%p6149) target = $region180
        $region179: #{tpu_custom_call.1} parent=171 // pred_region
          %s6152 = sand.u32 %s464, 1
          %s6153 = scalar_lea.sflag [#allocation31], %s6152
          %s6154 = sand.u32 %s464, 1
          %s6155 = smul.addr %s6154, 32
          %s6156 = scalar_lea.vmem [#allocation30], %s6155
          %6157 = dma.done %s6153, 512
        $region180: #{tpu_custom_call.1} parent=171 // pred_fallthru
          _
      $region172: #{tpu_custom_call.1} parent=5 // pred_fallthru
        _
    $region6: #{tpu_custom_call.1} parent=1 // loop_footer
      %s45 = sadd.s32 1, %s41
    $region7: #{tpu_custom_call.1} parent=1 // loop_footer_branch
      %40 = sbr.rel target = $region3
    $region8: #{tpu_custom_call.1} parent=1 // loop_exit
      _
    %6158 = vsyncpa [#allocation3], 1
    %s6159 = scalar_lea.sflag [#allocation3], 1
    %6160 = vsyncpa %s6159, 1
    %6161 = vsyncpa [#allocation6], 1
    %6162 = vsyncpa [#allocation9], 1
    %6163 = vsyncpa [#allocation12], 1
    %6164 = vsyncpa [#allocation15], 1
    %6165 = vsyncpa [#allocation18], 1
    %6166 = vsyncpa [#allocation21], 1
    %6167 = vsyncpa [#allocation24], 1
    %6168 = vsyncpa [#allocation27], 1
    %6169 = vsyncpa [#allocation4], 1
    %s6170 = scalar_lea.sflag [#allocation4], 1
    %6171 = vsyncpa %s6170, 1
    %6172 = vsyncpa [#allocation31], 1
    %s6173 = scalar_lea.sflag [#allocation31], 1
    %6174 = vsyncpa %s6173, 1

</llo_original>
